<compile_context>
chip_gen: v6e
topology: v6e:2x2x1
jax: 0.10.0
libtpu: 0.0.40
codegen_flags: <defaults>
</compile_context>

<pallas_src>
import math

import jax
import jax.numpy as jnp
import numpy as np
from jax.experimental import pallas as pl
from jax.experimental.pallas import tpu as pltpu


# ----------------------------- small helpers ------------------------------
def _layernorm(x, gamma, beta, eps=1e-5):
    mu = jnp.mean(x, axis=-1, keepdims=True)
    xc = x - mu
    var = jnp.mean(xc * xc, axis=-1, keepdims=True)
    return xc * jax.lax.rsqrt(var + eps) * gamma + beta


def _vmem_capacity_bytes():
    """Physical VMEM per TensorCore; conservative 64 MiB (v7x) if unknown."""
    try:
        return int(pltpu.get_tpu_info().vmem_capacity_bytes)
    except Exception:
        return 64 << 20


def _const_spec(a, single_buffer):
    """Full-array block with a constant index map (weights / LN params / pos)."""
    nd = a.ndim
    index_map = lambda i, _nd=nd: (0,) * _nd
    if single_buffer and hasattr(pl, "Buffered"):
        # Constant block index -> a second pipeline buffer is pure VMEM waste.
        return pl.BlockSpec(a.shape, index_map, pipeline_mode=pl.Buffered(1))
    return pl.BlockSpec(a.shape, index_map)


def _layer_vmem_estimate(BB, S, E, H, K, V, Fh, weight_bytes, add_pos,
                         single_buffer_weights=True):
    """Rough per-grid-step VMEM footprint (bytes) for a (BB*S, E) token tile."""
    TM = BB * S
    f32, bf16 = 4, 2
    blocks = 2 * (TM * E * f32                 # x input block (double buffered)
                  + TM * E * f32               # y output block
                  + BB * H * S * S * bf16)     # attention-map output block
    if add_pos:
        blocks += 2 * S * E * f32
    wmult = 1 if single_buffer_weights else 2
    act = (TM * E * (2 * f32 + bf16)           # x/h, h_bf
           + TM * (2 * H * K + H * V) * bf16   # q3, k3, v3
           + BB * S * S * (2 * f32 + bf16)     # per-head scores / probs / attn
           + BB * S * V * f32                  # per-head context
           + 3 * TM * E * f32                  # attn_out, out2, y
           + TM * Fh * (f32 + bf16))           # GELU hidden (f32 + bf16 copy)
    return wmult * weight_bytes + blocks + act


def _choose_bb(B, S, E, H, K, V, Fh, weight_bytes, add_pos, vmem_cap):
    """Largest per-step batch count BB whose real footprint fits the budget."""
    budget = int(0.75 * vmem_cap)
    divisors = [d for d in range(1, B + 1) if B % d == 0]
    # block rows must be 8-aligned unless the block spans the whole token dim
    valid = [d for d in divisors if d == B or (d * S) % 8 == 0]
    # Prefer >= 2 grid steps: feeds both TensorCores on dual-TC chips (v7x) and
    # gives the software pipeline something to overlap.
    multi = [d for d in valid if d < B] or valid
    max_rows = max(1024, S)                    # MXU M saturates ~512-1024 rows
    sized = [d for d in multi if d * S <= max_rows] or [min(multi)]
    fitting = [d for d in sized
               if 1.25 * _layer_vmem_estimate(d, S, E, H, K, V, Fh,
                                              weight_bytes, add_pos) <= budget]
    return max(fitting) if fitting else min(sized)


# ------------------------------ fused kernel ------------------------------
def _make_layer_kernel(S, BB, H, K, V, add_pos, fuse_final_ln):
    """Fused pre-norm encoder-layer kernel for a (BB*S, E) token tile."""
    TM = BB * S
    HK, HV = H * K, H * V
    inv_sqrt_dk = 1.0 / math.sqrt(K)
    bf16, f32 = jnp.bfloat16, jnp.float32

    def kernel(*refs):
        n = 0
        x_ref = refs[n]; n += 1
        pos_ref = None
        if add_pos:
            pos_ref = refs[n]; n += 1
        (wq_ref, bq_ref, wk_ref, bk_ref, wv_ref, bv_ref,
         wo_ref, bo_ref, g1_ref, be1_ref, g2_ref, be2_ref,
         w1_ref, w2_ref) = refs[n:n + 14]
        n += 14
        if fuse_final_ln:
            lng_ref, lnb_ref = refs[n:n + 2]
            n += 2
        y_ref, attn_ref = refs[n:n + 2]

        x = x_ref[...]                                       # (TM, E) f32 tokens
        if add_pos:                                          # fused PositionalParameter
            E = x.shape[-1]
            x = (x.reshape(BB, S, E) + pos_ref[...]).reshape(TM, E)

        h = _layernorm(x, g1_ref[...], be1_ref[...])         # ln_1 (pre-norm), f32
        h_bf = h.astype(bf16)

        # QKV projections (MXU, bf16 in / f32 accumulate); bias-add + bf16 cast
        # fused so no f32 copies stay live alongside the bf16 ones.
        q3 = (jnp.dot(h_bf, wq_ref[...], preferred_element_type=f32)
              + bq_ref[...]).astype(bf16).reshape(BB, S, HK)
        k3 = (jnp.dot(h_bf, wk_ref[...], preferred_element_type=f32)
              + bk_ref[...]).astype(bf16).reshape(BB, S, HK)
        v3 = (jnp.dot(h_bf, wv_ref[...], preferred_element_type=f32)
              + bv_ref[...]).astype(bf16).reshape(BB, S, HV)

        # Output projection accumulated per head (no (TM, HV) context scratch):
        # fc(ctx) = sum_h ctx_h @ Wo[h*V:(h+1)*V, :].  Residual is the ln_1
        # output, exactly as in the PyTorch MultiHeadSelfAttention.
        attn_out = h + bo_ref[...]
        for hd in range(H):
            qh = q3[:, :, hd * K:(hd + 1) * K]               # (BB, S, K)
            kh = k3[:, :, hd * K:(hd + 1) * K]
            vh = v3[:, :, hd * V:(hd + 1) * V]
            s = jnp.einsum('bqk,bsk->bqs', qh, kh,
                           preferred_element_type=f32) * inv_sqrt_dk
            # all-zero attention mask -> masked_fill_ is a no-op
            s = s - jnp.max(s, axis=-1, keepdims=True)
            p = jnp.exp(s)
            inv_l = pl.reciprocal(jnp.sum(p, axis=-1, keepdims=True), approx=True)
            attn_bf = (p * inv_l).astype(bf16)               # exported == used
            attn_ref[:, hd, :, :] = attn_bf                  # bf16 writeback
            ctx_h = jnp.einsum('bqs,bsv->bqv', attn_bf, vh,
                               preferred_element_type=f32).reshape(TM, V)
            attn_out = attn_out + jnp.dot(
                ctx_h.astype(bf16), wo_ref[hd * V:(hd + 1) * V, :],
                preferred_element_type=f32)

        # ln_2 then position-wise FFN (linear mode, no bias) with residual.
        out2 = _layernorm(attn_out, g2_ref[...], be2_ref[...])
        hid = jnp.dot(out2.astype(bf16), w1_ref[...], preferred_element_type=f32)
        # tanh-approx GELU routes through the EUP instead of a long erf VALU
        # polynomial over the largest elementwise tensor; within test tolerance.
        hid = jax.nn.gelu(hid, approximate=True)
        ffn = jnp.dot(hid.astype(bf16), w2_ref[...], preferred_element_type=f32)
        y = out2 + ffn

        if fuse_final_ln:                                    # fused encoder-level LN
            y = _layernorm(y, lng_ref[...], lnb_ref[...])
        y_ref[...] = y

    return kernel


# ------------------------------ layer wrapper -----------------------------
def encoder_layer_pallas(tokens, lp, *, batch, seq, pos=None, final_ln=None):
    """One fused pre-norm encoder layer over a (B*S, E) token matrix."""
    N, E = tokens.shape
    B, S = batch, seq
    H, K, V = lp["num_heads"], lp["k_dim"], lp["v_dim"]
    Fh = lp["w1"].shape[1]
    add_pos = pos is not None
    fuse_final_ln = final_ln is not None
    bf16 = jnp.bfloat16

    def as_bf16(a):                     # no-op if prepare_encoder_params ran
        return a if a.dtype == bf16 else a.astype(bf16)

    weight_args = [as_bf16(lp["wq"]), lp["bq"], as_bf16(lp["wk"]), lp["bk"],
                   as_bf16(lp["wv"]), lp["bv"], as_bf16(lp["wo"]), lp["bo"],
                   lp["g1"], lp["be1"], lp["g2"], lp["be2"],
                   as_bf16(lp["w1"]), as_bf16(lp["w2"])]
    weight_bytes = sum(int(w.size) * w.dtype.itemsize for w in weight_args)
    if fuse_final_ln:
        weight_bytes += sum(int(w.size) * w.dtype.itemsize for w in final_ln)

    cap = _vmem_capacity_bytes()
    BB = _choose_bb(B, S, E, H, K, V, Fh, weight_bytes, add_pos, cap)
    TM = BB * S
    est = _layer_vmem_estimate(BB, S, E, H, K, V, Fh, weight_bytes, add_pos)
    # Declared limit stays above the footprint even if single-buffered weights
    # fall back to double buffering; always leaves >=15% physical headroom.
    vmem_limit = int(min(0.85 * cap, max(32 << 20, 1.5 * est + weight_bytes)))

    args = [tokens]
    if add_pos:
        args.append(pos.reshape(S, E))
    args += weight_args
    if fuse_final_ln:
        args += list(final_ln)

    kernel = _make_layer_kernel(S, BB, H, K, V, add_pos, fuse_final_ln)
    out_shape = (jax.ShapeDtypeStruct((N, E), jnp.float32),
                 jax.ShapeDtypeStruct((B, H, S, S), jnp.bfloat16))
    out_specs = (pl.BlockSpec((TM, E), lambda i: (i, 0)),
                 pl.BlockSpec((BB, H, S, S), lambda i: (i, 0, 0, 0)))

    def run(single_buffer):
        in_specs = [pl.BlockSpec((TM, E), lambda i: (i, 0))]
        in_specs += [_const_spec(a, single_buffer) for a in args[1:]]
        return pl.pallas_call(
            kernel,
            out_shape=out_shape,
            grid=(N // TM,),
            in_specs=in_specs,
            out_specs=out_specs,
            compiler_params=pltpu.CompilerParams(
                dimension_semantics=("parallel",),
                vmem_limit_bytes=vmem_limit),
        )(*args)

    try:
        y, attn = run(True)       # weights/LN/pos single-buffered (constant index)
    except Exception:
        # pipeline_mode=pl.Buffered(1) unsupported on this build -> default buffering.
        y, attn = run(False)
    return y, attn


# ------------------------------ params & forward --------------------------
_MATRIX_KEYS = ("wq", "wk", "wv", "wo", "w1", "w2")


def prepare_encoder_params(params):
    """One-time bf16 cast of matmul weights (avoids a per-forward cast pass)."""
    out = dict(params)
    out["layers"] = []
    for lp in params["layers"]:
        lp2 = dict(lp)
        for k in _MATRIX_KEYS:
            lp2[k] = lp[k].astype(jnp.bfloat16)
        out["layers"].append(lp2)
    return out


def init_encoder_params(key, *, embedding_dim, num_heads, seq_len, num_layers,
                        k_dim=0, v_dim=0, ffn_hidden_size=0):
    E = embedding_dim
    K = k_dim or E
    V = v_dim or E
    Fh = ffn_hidden_size or E
    H = num_heads
    keys = iter(jax.random.split(key, 1 + num_layers * 10))

    def nrm(shape, scale=0.02):
        return (scale * jax.random.normal(next(keys), shape)).astype(jnp.float32)

    params = {
        "pos": nrm((1, seq_len, E)),                       # PositionalParameter
        "ln_g": jnp.ones((1, E), jnp.float32),             # final LayerNorm
        "ln_b": jnp.zeros((1, E), jnp.float32),
        "layers": [],
    }
    for _ in range(num_layers):
        params["layers"].append({
            "num_heads": H, "k_dim": K, "v_dim": V,
            "wq": nrm((E, H * K)), "bq": nrm((1, H * K)),
            "wk": nrm((E, H * K)), "bk": nrm((1, H * K)),
            "wv": nrm((E, H * V)), "bv": nrm((1, H * V)),
            "wo": nrm((H * V, E)), "bo": nrm((1, E)),
            "g1": jnp.ones((1, E), jnp.float32), "be1": jnp.zeros((1, E), jnp.float32),
            "g2": jnp.ones((1, E), jnp.float32), "be2": jnp.zeros((1, E), jnp.float32),
            "w1": nrm((E, Fh)), "w2": nrm((Fh, E)),
        })
    return params


def encoder_forward(params, x):
    B, S, E = x.shape
    tokens = x.reshape(B * S, E)        # free, batch-major token layout
    attns = []
    n_layers = len(params["layers"])
    for li, lp in enumerate(params["layers"]):
        tokens, attn = encoder_layer_pallas(
            tokens, lp, batch=B, seq=S,
            pos=params["pos"] if li == 0 else None,           # fused into layer 0
            final_ln=((params["ln_g"], params["ln_b"])        # fused into last layer
                      if li == n_layers - 1 else None))
        attns.append(attn)
    return tokens.reshape(B, S, E), attns


# ---------- pure-JAX (f32) reference for correctness check ----------
def _ref_layernorm(x, g, b, eps=1e-5):
    mu = x.mean(-1, keepdims=True)
    var = ((x - mu) ** 2).mean(-1, keepdims=True)
    return (x - mu) / jnp.sqrt(var + eps) * g + b


def encoder_forward_ref(params, x):
    out = x + params["pos"]
    attns = []
    for lp in params["layers"]:
        H, K, V = lp["num_heads"], lp["k_dim"], lp["v_dim"]
        B, S, E = out.shape
        h = _ref_layernorm(out, lp["g1"], lp["be1"])
        q = (h @ lp["wq"] + lp["bq"]).reshape(B, S, H, K).transpose(0, 2, 1, 3)
        k = (h @ lp["wk"] + lp["bk"]).reshape(B, S, H, K).transpose(0, 2, 1, 3)
        v = (h @ lp["wv"] + lp["bv"]).reshape(B, S, H, V).transpose(0, 2, 1, 3)
        scores = jnp.einsum("bhqd,bhkd->bhqk", q, k) / np.sqrt(K)
        attn = jax.nn.softmax(scores, axis=-1)
        ctx = jnp.einsum("bhqk,bhkd->bhqd", attn, v)
        ctx = ctx.transpose(0, 2, 1, 3).reshape(B, S, H * V)
        ao = ctx @ lp["wo"] + lp["bo"] + h
        o2 = _ref_layernorm(ao, lp["g2"], lp["be2"])
        ffn = jax.nn.gelu(o2 @ lp["w1"], approximate=False) @ lp["w2"]
        out = o2 + ffn
        attns.append(attn)
    return _ref_layernorm(out, params["ln_g"], params["ln_b"]), attns


if __name__ == "__main__":
    B, S, E, H, L = 2, 8, 32, 4, 2          # batch, seq, embed, heads, layers
    key = jax.random.PRNGKey(0)
    kx, kp = jax.random.split(key)
    x = jax.random.normal(kx, (B, S, E), dtype=jnp.float32)
    params = init_encoder_params(kp, embedding_dim=E, num_heads=H,
                                 seq_len=S, num_layers=L)
    run_params = prepare_encoder_params(params)   # one-time bf16 weight cast

    out, attns = encoder_forward(run_params, x)
    out = jax.block_until_ready(out)
    attns = [jax.block_until_ready(a) for a in attns]

    out_ref, attns_ref = encoder_forward_ref(params, x)
    # Tolerance relaxed vs the f32 reference: bf16 matmul operands (f32 accum),
    # bf16 attention maps, tanh-approx GELU, approx EUP reciprocal in softmax.
    np.testing.assert_allclose(np.asarray(out), np.asarray(out_ref),
                               atol=3e-2, rtol=3e-2)
    for a, ar in zip(attns, attns_ref):
        np.testing.assert_allclose(np.asarray(a.astype(jnp.float32)),
                                   np.asarray(ar), atol=3e-2, rtol=3e-2)
    print("KERNEL_OK")
</pallas_src>

<mosaic_0001>
module attributes {stable_mosaic.version = 11 : i64} {
  func.func @kernel(%arg0: i32, %arg1: memref<8x32xf32, #tpu.memory_space<vmem>>, %arg2: memref<8x32xf32, #tpu.memory_space<vmem>>, %arg3: memref<32x128xbf16, #tpu.memory_space<vmem>>, %arg4: memref<1x128xf32, #tpu.memory_space<vmem>>, %arg5: memref<32x128xbf16, #tpu.memory_space<vmem>>, %arg6: memref<1x128xf32, #tpu.memory_space<vmem>>, %arg7: memref<32x128xbf16, #tpu.memory_space<vmem>>, %arg8: memref<1x128xf32, #tpu.memory_space<vmem>>, %arg9: memref<128x32xbf16, #tpu.memory_space<vmem>>, %arg10: memref<1x32xf32, #tpu.memory_space<vmem>>, %arg11: memref<1x32xf32, #tpu.memory_space<vmem>>, %arg12: memref<1x32xf32, #tpu.memory_space<vmem>>, %arg13: memref<1x32xf32, #tpu.memory_space<vmem>>, %arg14: memref<1x32xf32, #tpu.memory_space<vmem>>, %arg15: memref<32x32xbf16, #tpu.memory_space<vmem>>, %arg16: memref<32x32xbf16, #tpu.memory_space<vmem>>, %arg17: memref<8x32xf32, #tpu.memory_space<vmem>>, %arg18: memref<1x4x8x8xbf16, #tpu.memory_space<vmem>>) attributes {dimension_semantics = [#tpu.dimension_semantics<parallel>], iteration_bounds = array<i64: 2>, scalar_prefetch = 0 : i64, scratch_operands = 0 : i64, tpu.core_type = #tpu.core_type<tc>, window_params = [{transform_indices = @transform_0, window_bounds = array<i64: 8, 32>}, {pipeline_mode = #tpu.pipeline_mode<synchronous>, transform_indices = @transform_1, window_bounds = array<i64: 8, 32>}, {pipeline_mode = #tpu.pipeline_mode<synchronous>, transform_indices = @transform_2, window_bounds = array<i64: 32, 128>}, {pipeline_mode = #tpu.pipeline_mode<synchronous>, transform_indices = @transform_3, window_bounds = array<i64: 1, 128>}, {pipeline_mode = #tpu.pipeline_mode<synchronous>, transform_indices = @transform_4, window_bounds = array<i64: 32, 128>}, {pipeline_mode = #tpu.pipeline_mode<synchronous>, transform_indices = @transform_5, window_bounds = array<i64: 1, 128>}, {pipeline_mode = #tpu.pipeline_mode<synchronous>, transform_indices = @transform_6, window_bounds = array<i64: 32, 128>}, {pipeline_mode = #tpu.pipeline_mode<synchronous>, transform_indices = @transform_7, window_bounds = array<i64: 1, 128>}, {pipeline_mode = #tpu.pipeline_mode<synchronous>, transform_indices = @transform_8, window_bounds = array<i64: 128, 32>}, {pipeline_mode = #tpu.pipeline_mode<synchronous>, transform_indices = @transform_9, window_bounds = array<i64: 1, 32>}, {pipeline_mode = #tpu.pipeline_mode<synchronous>, transform_indices = @transform_10, window_bounds = array<i64: 1, 32>}, {pipeline_mode = #tpu.pipeline_mode<synchronous>, transform_indices = @transform_11, window_bounds = array<i64: 1, 32>}, {pipeline_mode = #tpu.pipeline_mode<synchronous>, transform_indices = @transform_12, window_bounds = array<i64: 1, 32>}, {pipeline_mode = #tpu.pipeline_mode<synchronous>, transform_indices = @transform_13, window_bounds = array<i64: 1, 32>}, {pipeline_mode = #tpu.pipeline_mode<synchronous>, transform_indices = @transform_14, window_bounds = array<i64: 32, 32>}, {pipeline_mode = #tpu.pipeline_mode<synchronous>, transform_indices = @transform_15, window_bounds = array<i64: 32, 32>}, {transform_indices = @transform_16, window_bounds = array<i64: 8, 32>}, {transform_indices = @transform_17, window_bounds = array<i64: 1, 4, 8, 8>}]} {
    %c0 = arith.constant 0 : index
    %c0_0 = arith.constant 0 : index
    %0 = vector.load %arg1[%c0, %c0_0] : memref<8x32xf32, #tpu.memory_space<vmem>>, vector<8x32xf32>
    %1 = vector.shape_cast %0 : vector<8x32xf32> to vector<1x8x32xf32>
    %c0_1 = arith.constant 0 : index
    %c0_2 = arith.constant 0 : index
    %2 = vector.load %arg2[%c0_1, %c0_2] : memref<8x32xf32, #tpu.memory_space<vmem>>, vector<8x32xf32>
    %3 = vector.shape_cast %2 : vector<8x32xf32> to vector<1x8x32xf32>
    %4 = arith.addf %1, %3 : vector<1x8x32xf32>
    %5 = vector.shape_cast %4 : vector<1x8x32xf32> to vector<8x32xf32>
    %c0_3 = arith.constant 0 : index
    %c0_4 = arith.constant 0 : index
    %6 = vector.load %arg11[%c0_3, %c0_4] : memref<1x32xf32, #tpu.memory_space<vmem>>, vector<1x32xf32>
    %c0_5 = arith.constant 0 : index
    %c0_6 = arith.constant 0 : index
    %7 = vector.load %arg12[%c0_5, %c0_6] : memref<1x32xf32, #tpu.memory_space<vmem>>, vector<1x32xf32>
    %cst = arith.constant dense<0.000000e+00> : vector<8xf32>
    %8 = vector.multi_reduction <add>, %5, %cst [1] : vector<8x32xf32> to vector<8xf32>
    %9 = vector.shape_cast %8 : vector<8xf32> to vector<8x1xf32>
    %cst_7 = arith.constant 3.200000e+01 : f32
    %10 = vector.broadcast %cst_7 : f32 to vector<8x1xf32>
    %11 = arith.divf %9, %10 : vector<8x1xf32>
    %12 = vector.broadcast %11 : vector<8x1xf32> to vector<8x32xf32>
    %13 = arith.subf %5, %12 : vector<8x32xf32>
    %14 = arith.mulf %13, %13 : vector<8x32xf32>
    %cst_8 = arith.constant dense<0.000000e+00> : vector<8xf32>
    %15 = vector.multi_reduction <add>, %14, %cst_8 [1] : vector<8x32xf32> to vector<8xf32>
    %16 = vector.shape_cast %15 : vector<8xf32> to vector<8x1xf32>
    %cst_9 = arith.constant 3.200000e+01 : f32
    %17 = vector.broadcast %cst_9 : f32 to vector<8x1xf32>
    %18 = arith.divf %16, %17 : vector<8x1xf32>
    %cst_10 = arith.constant 9.99999974E-6 : f32
    %19 = vector.broadcast %cst_10 : f32 to vector<8x1xf32>
    %20 = arith.addf %18, %19 : vector<8x1xf32>
    %21 = math.rsqrt %20 : vector<8x1xf32>
    %22 = vector.broadcast %21 : vector<8x1xf32> to vector<8x32xf32>
    %23 = arith.mulf %13, %22 : vector<8x32xf32>
    %24 = vector.broadcast %6 : vector<1x32xf32> to vector<8x32xf32>
    %25 = arith.mulf %23, %24 : vector<8x32xf32>
    %26 = vector.broadcast %7 : vector<1x32xf32> to vector<8x32xf32>
    %27 = arith.addf %25, %26 : vector<8x32xf32>
    %28 = arith.truncf %27 : vector<8x32xf32> to vector<8x32xbf16>
    %c0_11 = arith.constant 0 : index
    %c0_12 = arith.constant 0 : index
    %29 = vector.load %arg3[%c0_11, %c0_12] : memref<32x128xbf16, #tpu.memory_space<vmem>>, vector<32x128xbf16>
    %cst_13 = arith.constant dense<0.000000e+00> : vector<8x128xf32>
    %30 = tpu.matmul %28, %29, %cst_13 {dimension_numbers = #tpu.dot_dimension_numbers<[1], [0], [0], [1], [0, 0, 1, 1], [], []>} : vector<8x32xbf16>, vector<32x128xbf16>, vector<8x128xf32> -> vector<8x128xf32>
    %c0_14 = arith.constant 0 : index
    %c0_15 = arith.constant 0 : index
    %31 = vector.load %arg4[%c0_14, %c0_15] : memref<1x128xf32, #tpu.memory_space<vmem>>, vector<1x128xf32>
    %32 = vector.broadcast %31 : vector<1x128xf32> to vector<8x128xf32>
    %33 = arith.addf %30, %32 : vector<8x128xf32>
    %34 = arith.truncf %33 : vector<8x128xf32> to vector<8x128xbf16>
    %35 = vector.shape_cast %34 : vector<8x128xbf16> to vector<1x8x128xbf16>
    %c0_16 = arith.constant 0 : index
    %c0_17 = arith.constant 0 : index
    %36 = vector.load %arg5[%c0_16, %c0_17] : memref<32x128xbf16, #tpu.memory_space<vmem>>, vector<32x128xbf16>
    %cst_18 = arith.constant dense<0.000000e+00> : vector<8x128xf32>
    %37 = tpu.matmul %28, %36, %cst_18 {dimension_numbers = #tpu.dot_dimension_numbers<[1], [0], [0], [1], [0, 0, 1, 1], [], []>} : vector<8x32xbf16>, vector<32x128xbf16>, vector<8x128xf32> -> vector<8x128xf32>
    %c0_19 = arith.constant 0 : index
    %c0_20 = arith.constant 0 : index
    %38 = vector.load %arg6[%c0_19, %c0_20] : memref<1x128xf32, #tpu.memory_space<vmem>>, vector<1x128xf32>
    %39 = vector.broadcast %38 : vector<1x128xf32> to vector<8x128xf32>
    %40 = arith.addf %37, %39 : vector<8x128xf32>
    %41 = arith.truncf %40 : vector<8x128xf32> to vector<8x128xbf16>
    %42 = vector.shape_cast %41 : vector<8x128xbf16> to vector<1x8x128xbf16>
    %c0_21 = arith.constant 0 : index
    %c0_22 = arith.constant 0 : index
    %43 = vector.load %arg7[%c0_21, %c0_22] : memref<32x128xbf16, #tpu.memory_space<vmem>>, vector<32x128xbf16>
    %cst_23 = arith.constant dense<0.000000e+00> : vector<8x128xf32>
    %44 = tpu.matmul %28, %43, %cst_23 {dimension_numbers = #tpu.dot_dimension_numbers<[1], [0], [0], [1], [0, 0, 1, 1], [], []>} : vector<8x32xbf16>, vector<32x128xbf16>, vector<8x128xf32> -> vector<8x128xf32>
    %c0_24 = arith.constant 0 : index
    %c0_25 = arith.constant 0 : index
    %45 = vector.load %arg8[%c0_24, %c0_25] : memref<1x128xf32, #tpu.memory_space<vmem>>, vector<1x128xf32>
    %46 = vector.broadcast %45 : vector<1x128xf32> to vector<8x128xf32>
    %47 = arith.addf %44, %46 : vector<8x128xf32>
    %48 = arith.truncf %47 : vector<8x128xf32> to vector<8x128xbf16>
    %49 = vector.shape_cast %48 : vector<8x128xbf16> to vector<1x8x128xbf16>
    %c0_26 = arith.constant 0 : index
    %c0_27 = arith.constant 0 : index
    %50 = vector.load %arg10[%c0_26, %c0_27] : memref<1x32xf32, #tpu.memory_space<vmem>>, vector<1x32xf32>
    %51 = vector.broadcast %50 : vector<1x32xf32> to vector<8x32xf32>
    %52 = arith.addf %27, %51 : vector<8x32xf32>
    %53 = vector.extract_strided_slice %35 {offsets = [0, 0, 0], sizes = [1, 8, 32], strides = [1, 1, 1]} : vector<1x8x128xbf16> to vector<1x8x32xbf16>
    %54 = vector.extract_strided_slice %42 {offsets = [0, 0, 0], sizes = [1, 8, 32], strides = [1, 1, 1]} : vector<1x8x128xbf16> to vector<1x8x32xbf16>
    %55 = vector.extract_strided_slice %49 {offsets = [0, 0, 0], sizes = [1, 8, 32], strides = [1, 1, 1]} : vector<1x8x128xbf16> to vector<1x8x32xbf16>
    "tpu.trace_start"() <{level = 10 : i32, message = "bqk,bsk->bqs"}> : () -> ()
    %cst_28 = arith.constant dense<0.000000e+00> : vector<1x8x8xf32>
    %56 = tpu.matmul %53, %54, %cst_28 {dimension_numbers = #tpu.dot_dimension_numbers<[2], [2], [1], [1], [0, 0, 0, 1, 1, 1], [0], [0]>} : vector<1x8x32xbf16>, vector<1x8x32xbf16>, vector<1x8x8xf32> -> vector<1x8x8xf32>
    "tpu.trace_stop"() : () -> ()
    %cst_29 = arith.constant 0.176776692 : f32
    %57 = vector.broadcast %cst_29 : f32 to vector<1x8x8xf32>
    %58 = arith.mulf %56, %57 : vector<1x8x8xf32>
    %cst_30 = arith.constant dense<0xFF800000> : vector<1x8xf32>
    %59 = vector.multi_reduction <maximumf>, %58, %cst_30 [2] : vector<1x8x8xf32> to vector<1x8xf32>
    %60 = vector.shape_cast %59 : vector<1x8xf32> to vector<1x8x1xf32>
    %61 = vector.broadcast %60 : vector<1x8x1xf32> to vector<1x8x8xf32>
    %62 = arith.subf %58, %61 : vector<1x8x8xf32>
    %63 = math.exp %62 : vector<1x8x8xf32>
    %cst_31 = arith.constant dense<0.000000e+00> : vector<1x8xf32>
    %64 = vector.multi_reduction <add>, %63, %cst_31 [2] : vector<1x8x8xf32> to vector<1x8xf32>
    %65 = vector.shape_cast %64 : vector<1x8xf32> to vector<1x8x1xf32>
    %66 = tpu.reciprocal %65 {approx = true} : vector<1x8x1xf32> -> vector<1x8x1xf32>
    %67 = vector.broadcast %66 : vector<1x8x1xf32> to vector<1x8x8xf32>
    %68 = arith.mulf %63, %67 : vector<1x8x8xf32>
    %69 = arith.truncf %68 : vector<1x8x8xf32> to vector<1x8x8xbf16>
    %c0_32 = arith.constant 0 : index
    %c0_33 = arith.constant 0 : index
    %c0_34 = arith.constant 0 : index
    %c0_35 = arith.constant 0 : index
    %70 = vector.load %arg18[%c0_32, %c0_33, %c0_34, %c0_35] : memref<1x4x8x8xbf16, #tpu.memory_space<vmem>>, vector<1x1x8x8xbf16>
    %71 = vector.shape_cast %70 : vector<1x1x8x8xbf16> to vector<1x8x8xbf16>
    %72 = vector.shape_cast %69 : vector<1x8x8xbf16> to vector<1x1x8x8xbf16>
    tpu.vector_store %arg18[%c0_32, %c0_33, %c0_34, %c0_35], %72 {strides = array<i32>} : memref<1x4x8x8xbf16, #tpu.memory_space<vmem>>, vector<1x1x8x8xbf16>,
    "tpu.trace_start"() <{level = 10 : i32, message = "bqs,bsv->bqv"}> : () -> ()
    %cst_36 = arith.constant dense<0.000000e+00> : vector<1x8x32xf32>
    %73 = tpu.matmul %69, %55, %cst_36 {dimension_numbers = #tpu.dot_dimension_numbers<[2], [1], [1], [2], [0, 0, 0, 1, 1, 2], [0], [0]>} : vector<1x8x8xbf16>, vector<1x8x32xbf16>, vector<1x8x32xf32> -> vector<1x8x32xf32>
    "tpu.trace_stop"() : () -> ()
    %74 = vector.shape_cast %73 : vector<1x8x32xf32> to vector<8x32xf32>
    %75 = arith.truncf %74 : vector<8x32xf32> to vector<8x32xbf16>
    %c0_37 = arith.constant 0 : index
    %c0_38 = arith.constant 0 : index
    %76 = vector.load %arg9[%c0_37, %c0_38] : memref<128x32xbf16, #tpu.memory_space<vmem>>, vector<32x32xbf16>
    %cst_39 = arith.constant dense<0.000000e+00> : vector<8x32xf32>
    %77 = tpu.matmul %75, %76, %cst_39 {dimension_numbers = #tpu.dot_dimension_numbers<[1], [0], [0], [1], [0, 0, 1, 1], [], []>} : vector<8x32xbf16>, vector<32x32xbf16>, vector<8x32xf32> -> vector<8x32xf32>
    %78 = arith.addf %52, %77 : vector<8x32xf32>
    %79 = vector.extract_strided_slice %35 {offsets = [0, 0, 32], sizes = [1, 8, 32], strides = [1, 1, 1]} : vector<1x8x128xbf16> to vector<1x8x32xbf16>
    %80 = vector.extract_strided_slice %42 {offsets = [0, 0, 32], sizes = [1, 8, 32], strides = [1, 1, 1]} : vector<1x8x128xbf16> to vector<1x8x32xbf16>
    %81 = vector.extract_strided_slice %49 {offsets = [0, 0, 32], sizes = [1, 8, 32], strides = [1, 1, 1]} : vector<1x8x128xbf16> to vector<1x8x32xbf16>
    "tpu.trace_start"() <{level = 10 : i32, message = "bqk,bsk->bqs"}> : () -> ()
    %cst_40 = arith.constant dense<0.000000e+00> : vector<1x8x8xf32>
    %82 = tpu.matmul %79, %80, %cst_40 {dimension_numbers = #tpu.dot_dimension_numbers<[2], [2], [1], [1], [0, 0, 0, 1, 1, 1], [0], [0]>} : vector<1x8x32xbf16>, vector<1x8x32xbf16>, vector<1x8x8xf32> -> vector<1x8x8xf32>
    "tpu.trace_stop"() : () -> ()
    %cst_41 = arith.constant 0.176776692 : f32
    %83 = vector.broadcast %cst_41 : f32 to vector<1x8x8xf32>
    %84 = arith.mulf %82, %83 : vector<1x8x8xf32>
    %cst_42 = arith.constant dense<0xFF800000> : vector<1x8xf32>
    %85 = vector.multi_reduction <maximumf>, %84, %cst_42 [2] : vector<1x8x8xf32> to vector<1x8xf32>
    %86 = vector.shape_cast %85 : vector<1x8xf32> to vector<1x8x1xf32>
    %87 = vector.broadcast %86 : vector<1x8x1xf32> to vector<1x8x8xf32>
    %88 = arith.subf %84, %87 : vector<1x8x8xf32>
    %89 = math.exp %88 : vector<1x8x8xf32>
    %cst_43 = arith.constant dense<0.000000e+00> : vector<1x8xf32>
    %90 = vector.multi_reduction <add>, %89, %cst_43 [2] : vector<1x8x8xf32> to vector<1x8xf32>
    %91 = vector.shape_cast %90 : vector<1x8xf32> to vector<1x8x1xf32>
    %92 = tpu.reciprocal %91 {approx = true} : vector<1x8x1xf32> -> vector<1x8x1xf32>
    %93 = vector.broadcast %92 : vector<1x8x1xf32> to vector<1x8x8xf32>
    %94 = arith.mulf %89, %93 : vector<1x8x8xf32>
    %95 = arith.truncf %94 : vector<1x8x8xf32> to vector<1x8x8xbf16>
    %c0_44 = arith.constant 0 : index
    %c1 = arith.constant 1 : index
    %c0_45 = arith.constant 0 : index
    %c0_46 = arith.constant 0 : index
    %96 = vector.load %arg18[%c0_44, %c1, %c0_45, %c0_46] : memref<1x4x8x8xbf16, #tpu.memory_space<vmem>>, vector<1x1x8x8xbf16>
    %97 = vector.shape_cast %96 : vector<1x1x8x8xbf16> to vector<1x8x8xbf16>
    %98 = vector.shape_cast %95 : vector<1x8x8xbf16> to vector<1x1x8x8xbf16>
    tpu.vector_store %arg18[%c0_44, %c1, %c0_45, %c0_46], %98 {strides = array<i32>} : memref<1x4x8x8xbf16, #tpu.memory_space<vmem>>, vector<1x1x8x8xbf16>,
    "tpu.trace_start"() <{level = 10 : i32, message = "bqs,bsv->bqv"}> : () -> ()
    %cst_47 = arith.constant dense<0.000000e+00> : vector<1x8x32xf32>
    %99 = tpu.matmul %95, %81, %cst_47 {dimension_numbers = #tpu.dot_dimension_numbers<[2], [1], [1], [2], [0, 0, 0, 1, 1, 2], [0], [0]>} : vector<1x8x8xbf16>, vector<1x8x32xbf16>, vector<1x8x32xf32> -> vector<1x8x32xf32>
    "tpu.trace_stop"() : () -> ()
    %100 = vector.shape_cast %99 : vector<1x8x32xf32> to vector<8x32xf32>
    %101 = arith.truncf %100 : vector<8x32xf32> to vector<8x32xbf16>
    %c32 = arith.constant 32 : index
    %c0_48 = arith.constant 0 : index
    %102 = vector.load %arg9[%c32, %c0_48] : memref<128x32xbf16, #tpu.memory_space<vmem>>, vector<32x32xbf16>
    %cst_49 = arith.constant dense<0.000000e+00> : vector<8x32xf32>
    %103 = tpu.matmul %101, %102, %cst_49 {dimension_numbers = #tpu.dot_dimension_numbers<[1], [0], [0], [1], [0, 0, 1, 1], [], []>} : vector<8x32xbf16>, vector<32x32xbf16>, vector<8x32xf32> -> vector<8x32xf32>
    %104 = arith.addf %78, %103 : vector<8x32xf32>
    %105 = vector.extract_strided_slice %35 {offsets = [0, 0, 64], sizes = [1, 8, 32], strides = [1, 1, 1]} : vector<1x8x128xbf16> to vector<1x8x32xbf16>
    %106 = vector.extract_strided_slice %42 {offsets = [0, 0, 64], sizes = [1, 8, 32], strides = [1, 1, 1]} : vector<1x8x128xbf16> to vector<1x8x32xbf16>
    %107 = vector.extract_strided_slice %49 {offsets = [0, 0, 64], sizes = [1, 8, 32], strides = [1, 1, 1]} : vector<1x8x128xbf16> to vector<1x8x32xbf16>
    "tpu.trace_start"() <{level = 10 : i32, message = "bqk,bsk->bqs"}> : () -> ()
    %cst_50 = arith.constant dense<0.000000e+00> : vector<1x8x8xf32>
    %108 = tpu.matmul %105, %106, %cst_50 {dimension_numbers = #tpu.dot_dimension_numbers<[2], [2], [1], [1], [0, 0, 0, 1, 1, 1], [0], [0]>} : vector<1x8x32xbf16>, vector<1x8x32xbf16>, vector<1x8x8xf32> -> vector<1x8x8xf32>
    "tpu.trace_stop"() : () -> ()
    %cst_51 = arith.constant 0.176776692 : f32
    %109 = vector.broadcast %cst_51 : f32 to vector<1x8x8xf32>
    %110 = arith.mulf %108, %109 : vector<1x8x8xf32>
    %cst_52 = arith.constant dense<0xFF800000> : vector<1x8xf32>
    %111 = vector.multi_reduction <maximumf>, %110, %cst_52 [2] : vector<1x8x8xf32> to vector<1x8xf32>
    %112 = vector.shape_cast %111 : vector<1x8xf32> to vector<1x8x1xf32>
    %113 = vector.broadcast %112 : vector<1x8x1xf32> to vector<1x8x8xf32>
    %114 = arith.subf %110, %113 : vector<1x8x8xf32>
    %115 = math.exp %114 : vector<1x8x8xf32>
    %cst_53 = arith.constant dense<0.000000e+00> : vector<1x8xf32>
    %116 = vector.multi_reduction <add>, %115, %cst_53 [2] : vector<1x8x8xf32> to vector<1x8xf32>
    %117 = vector.shape_cast %116 : vector<1x8xf32> to vector<1x8x1xf32>
    %118 = tpu.reciprocal %117 {approx = true} : vector<1x8x1xf32> -> vector<1x8x1xf32>
    %119 = vector.broadcast %118 : vector<1x8x1xf32> to vector<1x8x8xf32>
    %120 = arith.mulf %115, %119 : vector<1x8x8xf32>
    %121 = arith.truncf %120 : vector<1x8x8xf32> to vector<1x8x8xbf16>
    %c0_54 = arith.constant 0 : index
    %c2 = arith.constant 2 : index
    %c0_55 = arith.constant 0 : index
    %c0_56 = arith.constant 0 : index
    %122 = vector.load %arg18[%c0_54, %c2, %c0_55, %c0_56] : memref<1x4x8x8xbf16, #tpu.memory_space<vmem>>, vector<1x1x8x8xbf16>
    %123 = vector.shape_cast %122 : vector<1x1x8x8xbf16> to vector<1x8x8xbf16>
    %124 = vector.shape_cast %121 : vector<1x8x8xbf16> to vector<1x1x8x8xbf16>
    tpu.vector_store %arg18[%c0_54, %c2, %c0_55, %c0_56], %124 {strides = array<i32>} : memref<1x4x8x8xbf16, #tpu.memory_space<vmem>>, vector<1x1x8x8xbf16>,
    "tpu.trace_start"() <{level = 10 : i32, message = "bqs,bsv->bqv"}> : () -> ()
    %cst_57 = arith.constant dense<0.000000e+00> : vector<1x8x32xf32>
    %125 = tpu.matmul %121, %107, %cst_57 {dimension_numbers = #tpu.dot_dimension_numbers<[2], [1], [1], [2], [0, 0, 0, 1, 1, 2], [0], [0]>} : vector<1x8x8xbf16>, vector<1x8x32xbf16>, vector<1x8x32xf32> -> vector<1x8x32xf32>
    "tpu.trace_stop"() : () -> ()
    %126 = vector.shape_cast %125 : vector<1x8x32xf32> to vector<8x32xf32>
    %127 = arith.truncf %126 : vector<8x32xf32> to vector<8x32xbf16>
    %c64 = arith.constant 64 : index
    %c0_58 = arith.constant 0 : index
    %128 = vector.load %arg9[%c64, %c0_58] : memref<128x32xbf16, #tpu.memory_space<vmem>>, vector<32x32xbf16>
    %cst_59 = arith.constant dense<0.000000e+00> : vector<8x32xf32>
    %129 = tpu.matmul %127, %128, %cst_59 {dimension_numbers = #tpu.dot_dimension_numbers<[1], [0], [0], [1], [0, 0, 1, 1], [], []>} : vector<8x32xbf16>, vector<32x32xbf16>, vector<8x32xf32> -> vector<8x32xf32>
    %130 = arith.addf %104, %129 : vector<8x32xf32>
    %131 = vector.extract_strided_slice %35 {offsets = [0, 0, 96], sizes = [1, 8, 32], strides = [1, 1, 1]} : vector<1x8x128xbf16> to vector<1x8x32xbf16>
    %132 = vector.extract_strided_slice %42 {offsets = [0, 0, 96], sizes = [1, 8, 32], strides = [1, 1, 1]} : vector<1x8x128xbf16> to vector<1x8x32xbf16>
    %133 = vector.extract_strided_slice %49 {offsets = [0, 0, 96], sizes = [1, 8, 32], strides = [1, 1, 1]} : vector<1x8x128xbf16> to vector<1x8x32xbf16>
    "tpu.trace_start"() <{level = 10 : i32, message = "bqk,bsk->bqs"}> : () -> ()
    %cst_60 = arith.constant dense<0.000000e+00> : vector<1x8x8xf32>
    %134 = tpu.matmul %131, %132, %cst_60 {dimension_numbers = #tpu.dot_dimension_numbers<[2], [2], [1], [1], [0, 0, 0, 1, 1, 1], [0], [0]>} : vector<1x8x32xbf16>, vector<1x8x32xbf16>, vector<1x8x8xf32> -> vector<1x8x8xf32>
    "tpu.trace_stop"() : () -> ()
    %cst_61 = arith.constant 0.176776692 : f32
    %135 = vector.broadcast %cst_61 : f32 to vector<1x8x8xf32>
    %136 = arith.mulf %134, %135 : vector<1x8x8xf32>
    %cst_62 = arith.constant dense<0xFF800000> : vector<1x8xf32>
    %137 = vector.multi_reduction <maximumf>, %136, %cst_62 [2] : vector<1x8x8xf32> to vector<1x8xf32>
    %138 = vector.shape_cast %137 : vector<1x8xf32> to vector<1x8x1xf32>
    %139 = vector.broadcast %138 : vector<1x8x1xf32> to vector<1x8x8xf32>
    %140 = arith.subf %136, %139 : vector<1x8x8xf32>
    %141 = math.exp %140 : vector<1x8x8xf32>
    %cst_63 = arith.constant dense<0.000000e+00> : vector<1x8xf32>
    %142 = vector.multi_reduction <add>, %141, %cst_63 [2] : vector<1x8x8xf32> to vector<1x8xf32>
    %143 = vector.shape_cast %142 : vector<1x8xf32> to vector<1x8x1xf32>
    %144 = tpu.reciprocal %143 {approx = true} : vector<1x8x1xf32> -> vector<1x8x1xf32>
    %145 = vector.broadcast %144 : vector<1x8x1xf32> to vector<1x8x8xf32>
    %146 = arith.mulf %141, %145 : vector<1x8x8xf32>
    %147 = arith.truncf %146 : vector<1x8x8xf32> to vector<1x8x8xbf16>
    %c0_64 = arith.constant 0 : index
    %c3 = arith.constant 3 : index
    %c0_65 = arith.constant 0 : index
    %c0_66 = arith.constant 0 : index
    %148 = vector.load %arg18[%c0_64, %c3, %c0_65, %c0_66] : memref<1x4x8x8xbf16, #tpu.memory_space<vmem>>, vector<1x1x8x8xbf16>
    %149 = vector.shape_cast %148 : vector<1x1x8x8xbf16> to vector<1x8x8xbf16>
    %150 = vector.shape_cast %147 : vector<1x8x8xbf16> to vector<1x1x8x8xbf16>
    tpu.vector_store %arg18[%c0_64, %c3, %c0_65, %c0_66], %150 {strides = array<i32>} : memref<1x4x8x8xbf16, #tpu.memory_space<vmem>>, vector<1x1x8x8xbf16>,
    "tpu.trace_start"() <{level = 10 : i32, message = "bqs,bsv->bqv"}> : () -> ()
    %cst_67 = arith.constant dense<0.000000e+00> : vector<1x8x32xf32>
    %151 = tpu.matmul %147, %133, %cst_67 {dimension_numbers = #tpu.dot_dimension_numbers<[2], [1], [1], [2], [0, 0, 0, 1, 1, 2], [0], [0]>} : vector<1x8x8xbf16>, vector<1x8x32xbf16>, vector<1x8x32xf32> -> vector<1x8x32xf32>
    "tpu.trace_stop"() : () -> ()
    %152 = vector.shape_cast %151 : vector<1x8x32xf32> to vector<8x32xf32>
    %153 = arith.truncf %152 : vector<8x32xf32> to vector<8x32xbf16>
    %c96 = arith.constant 96 : index
    %c0_68 = arith.constant 0 : index
    %154 = vector.load %arg9[%c96, %c0_68] : memref<128x32xbf16, #tpu.memory_space<vmem>>, vector<32x32xbf16>
    %cst_69 = arith.constant dense<0.000000e+00> : vector<8x32xf32>
    %155 = tpu.matmul %153, %154, %cst_69 {dimension_numbers = #tpu.dot_dimension_numbers<[1], [0], [0], [1], [0, 0, 1, 1], [], []>} : vector<8x32xbf16>, vector<32x32xbf16>, vector<8x32xf32> -> vector<8x32xf32>
    %156 = arith.addf %130, %155 : vector<8x32xf32>
    %c0_70 = arith.constant 0 : index
    %c0_71 = arith.constant 0 : index
    %157 = vector.load %arg13[%c0_70, %c0_71] : memref<1x32xf32, #tpu.memory_space<vmem>>, vector<1x32xf32>
    %c0_72 = arith.constant 0 : index
    %c0_73 = arith.constant 0 : index
    %158 = vector.load %arg14[%c0_72, %c0_73] : memref<1x32xf32, #tpu.memory_space<vmem>>, vector<1x32xf32>
    %cst_74 = arith.constant dense<0.000000e+00> : vector<8xf32>
    %159 = vector.multi_reduction <add>, %156, %cst_74 [1] : vector<8x32xf32> to vector<8xf32>
    %160 = vector.shape_cast %159 : vector<8xf32> to vector<8x1xf32>
    %cst_75 = arith.constant 3.200000e+01 : f32
    %161 = vector.broadcast %cst_75 : f32 to vector<8x1xf32>
    %162 = arith.divf %160, %161 : vector<8x1xf32>
    %163 = vector.broadcast %162 : vector<8x1xf32> to vector<8x32xf32>
    %164 = arith.subf %156, %163 : vector<8x32xf32>
    %165 = arith.mulf %164, %164 : vector<8x32xf32>
    %cst_76 = arith.constant dense<0.000000e+00> : vector<8xf32>
    %166 = vector.multi_reduction <add>, %165, %cst_76 [1] : vector<8x32xf32> to vector<8xf32>
    %167 = vector.shape_cast %166 : vector<8xf32> to vector<8x1xf32>
    %cst_77 = arith.constant 3.200000e+01 : f32
    %168 = vector.broadcast %cst_77 : f32 to vector<8x1xf32>
    %169 = arith.divf %167, %168 : vector<8x1xf32>
    %cst_78 = arith.constant 9.99999974E-6 : f32
    %170 = vector.broadcast %cst_78 : f32 to vector<8x1xf32>
    %171 = arith.addf %169, %170 : vector<8x1xf32>
    %172 = math.rsqrt %171 : vector<8x1xf32>
    %173 = vector.broadcast %172 : vector<8x1xf32> to vector<8x32xf32>
    %174 = arith.mulf %164, %173 : vector<8x32xf32>
    %175 = vector.broadcast %157 : vector<1x32xf32> to vector<8x32xf32>
    %176 = arith.mulf %174, %175 : vector<8x32xf32>
    %177 = vector.broadcast %158 : vector<1x32xf32> to vector<8x32xf32>
    %178 = arith.addf %176, %177 : vector<8x32xf32>
    %179 = arith.truncf %178 : vector<8x32xf32> to vector<8x32xbf16>
    %c0_79 = arith.constant 0 : index
    %c0_80 = arith.constant 0 : index
    %180 = vector.load %arg15[%c0_79, %c0_80] : memref<32x32xbf16, #tpu.memory_space<vmem>>, vector<32x32xbf16>
    %cst_81 = arith.constant dense<0.000000e+00> : vector<8x32xf32>
    %181 = tpu.matmul %179, %180, %cst_81 {dimension_numbers = #tpu.dot_dimension_numbers<[1], [0], [0], [1], [0, 0, 1, 1], [], []>} : vector<8x32xbf16>, vector<32x32xbf16>, vector<8x32xf32> -> vector<8x32xf32>
    %182 = arith.mulf %181, %181 : vector<8x32xf32>
    %183 = arith.mulf %181, %182 : vector<8x32xf32>
    %cst_82 = arith.constant 4.471500e-02 : f32
    %184 = vector.broadcast %cst_82 : f32 to vector<8x32xf32>
    %185 = arith.mulf %184, %183 : vector<8x32xf32>
    %186 = arith.addf %181, %185 : vector<8x32xf32>
    %cst_83 = arith.constant 0.797884583 : f32
    %187 = vector.broadcast %cst_83 : f32 to vector<8x32xf32>
    %188 = arith.mulf %187, %186 : vector<8x32xf32>
    %189 = math.tanh %188 : vector<8x32xf32>
    %cst_84 = arith.constant 1.000000e+00 : f32
    %190 = vector.broadcast %cst_84 : f32 to vector<8x32xf32>
    %191 = arith.addf %190, %189 : vector<8x32xf32>
    %cst_85 = arith.constant 5.000000e-01 : f32
    %192 = vector.broadcast %cst_85 : f32 to vector<8x32xf32>
    %193 = arith.mulf %192, %191 : vector<8x32xf32>
    %194 = arith.mulf %181, %193 : vector<8x32xf32>
    %195 = arith.truncf %194 : vector<8x32xf32> to vector<8x32xbf16>
    %c0_86 = arith.constant 0 : index
    %c0_87 = arith.constant 0 : index
    %196 = vector.load %arg16[%c0_86, %c0_87] : memref<32x32xbf16, #tpu.memory_space<vmem>>, vector<32x32xbf16>
    %cst_88 = arith.constant dense<0.000000e+00> : vector<8x32xf32>
    %197 = tpu.matmul %195, %196, %cst_88 {dimension_numbers = #tpu.dot_dimension_numbers<[1], [0], [0], [1], [0, 0, 1, 1], [], []>} : vector<8x32xbf16>, vector<32x32xbf16>, vector<8x32xf32> -> vector<8x32xf32>
    %198 = arith.addf %178, %197 : vector<8x32xf32>
    %c0_89 = arith.constant 0 : index
    %c0_90 = arith.constant 0 : index
    %199 = vector.load %arg17[%c0_89, %c0_90] : memref<8x32xf32, #tpu.memory_space<vmem>>, vector<8x32xf32>
    tpu.vector_store %arg17[%c0_89, %c0_90], %198 {strides = array<i32>} : memref<8x32xf32, #tpu.memory_space<vmem>>, vector<8x32xf32>,
    return
  }
  func.func @transform_0(%arg0: i32) -> (i32, i32) {
    %c0_i32 = arith.constant 0 : i32
    %c0_i32_0 = arith.constant 0 : i32
    return %arg0, %c0_i32 : i32, i32
  }
  func.func @transform_1(%arg0: i32) -> (i32, i32) {
    %c0_i32 = arith.constant 0 : i32
    %c0_i32_0 = arith.constant 0 : i32
    %c0_i32_1 = arith.constant 0 : i32
    return %c0_i32, %c0_i32_0 : i32, i32
  }
  func.func @transform_2(%arg0: i32) -> (i32, i32) {
    %c0_i32 = arith.constant 0 : i32
    %c0_i32_0 = arith.constant 0 : i32
    %c0_i32_1 = arith.constant 0 : i32
    return %c0_i32, %c0_i32_0 : i32, i32
  }
  func.func @transform_3(%arg0: i32) -> (i32, i32) {
    %c0_i32 = arith.constant 0 : i32
    %c0_i32_0 = arith.constant 0 : i32
    %c0_i32_1 = arith.constant 0 : i32
    return %c0_i32, %c0_i32_0 : i32, i32
  }
  func.func @transform_4(%arg0: i32) -> (i32, i32) {
    %c0_i32 = arith.constant 0 : i32
    %c0_i32_0 = arith.constant 0 : i32
    %c0_i32_1 = arith.constant 0 : i32
    return %c0_i32, %c0_i32_0 : i32, i32
  }
  func.func @transform_5(%arg0: i32) -> (i32, i32) {
    %c0_i32 = arith.constant 0 : i32
    %c0_i32_0 = arith.constant 0 : i32
    %c0_i32_1 = arith.constant 0 : i32
    return %c0_i32, %c0_i32_0 : i32, i32
  }
  func.func @transform_6(%arg0: i32) -> (i32, i32) {
    %c0_i32 = arith.constant 0 : i32
    %c0_i32_0 = arith.constant 0 : i32
    %c0_i32_1 = arith.constant 0 : i32
    return %c0_i32, %c0_i32_0 : i32, i32
  }
  func.func @transform_7(%arg0: i32) -> (i32, i32) {
    %c0_i32 = arith.constant 0 : i32
    %c0_i32_0 = arith.constant 0 : i32
    %c0_i32_1 = arith.constant 0 : i32
    return %c0_i32, %c0_i32_0 : i32, i32
  }
  func.func @transform_8(%arg0: i32) -> (i32, i32) {
    %c0_i32 = arith.constant 0 : i32
    %c0_i32_0 = arith.constant 0 : i32
    %c0_i32_1 = arith.constant 0 : i32
    return %c0_i32, %c0_i32_0 : i32, i32
  }
  func.func @transform_9(%arg0: i32) -> (i32, i32) {
    %c0_i32 = arith.constant 0 : i32
    %c0_i32_0 = arith.constant 0 : i32
    %c0_i32_1 = arith.constant 0 : i32
    return %c0_i32, %c0_i32_0 : i32, i32
  }
  func.func @transform_10(%arg0: i32) -> (i32, i32) {
    %c0_i32 = arith.constant 0 : i32
    %c0_i32_0 = arith.constant 0 : i32
    %c0_i32_1 = arith.constant 0 : i32
    return %c0_i32, %c0_i32_0 : i32, i32
  }
  func.func @transform_11(%arg0: i32) -> (i32, i32) {
    %c0_i32 = arith.constant 0 : i32
    %c0_i32_0 = arith.constant 0 : i32
    %c0_i32_1 = arith.constant 0 : i32
    return %c0_i32, %c0_i32_0 : i32, i32
  }
  func.func @transform_12(%arg0: i32) -> (i32, i32) {
    %c0_i32 = arith.constant 0 : i32
    %c0_i32_0 = arith.constant 0 : i32
    %c0_i32_1 = arith.constant 0 : i32
    return %c0_i32, %c0_i32_0 : i32, i32
  }
  func.func @transform_13(%arg0: i32) -> (i32, i32) {
    %c0_i32 = arith.constant 0 : i32
    %c0_i32_0 = arith.constant 0 : i32
    %c0_i32_1 = arith.constant 0 : i32
    return %c0_i32, %c0_i32_0 : i32, i32
  }
  func.func @transform_14(%arg0: i32) -> (i32, i32) {
    %c0_i32 = arith.constant 0 : i32
    %c0_i32_0 = arith.constant 0 : i32
    %c0_i32_1 = arith.constant 0 : i32
    return %c0_i32, %c0_i32_0 : i32, i32
  }
  func.func @transform_15(%arg0: i32) -> (i32, i32) {
    %c0_i32 = arith.constant 0 : i32
    %c0_i32_0 = arith.constant 0 : i32
    %c0_i32_1 = arith.constant 0 : i32
    return %c0_i32, %c0_i32_0 : i32, i32
  }
  func.func @transform_16(%arg0: i32) -> (i32, i32) {
    %c0_i32 = arith.constant 0 : i32
    %c0_i32_0 = arith.constant 0 : i32
    return %arg0, %c0_i32 : i32, i32
  }
  func.func @transform_17(%arg0: i32) -> (i32, i32, i32, i32) {
    %c0_i32 = arith.constant 0 : i32
    %c0_i32_0 = arith.constant 0 : i32
    %c0_i32_1 = arith.constant 0 : i32
    %c0_i32_2 = arith.constant 0 : i32
    return %arg0, %c0_i32, %c0_i32_0, %c0_i32_1 : i32, i32, i32, i32
  }
}

module attributes {stable_mosaic.version = 11 : i64} {
  func.func @kernel(%arg0: i32, %arg1: memref<8x32xf32, #tpu.memory_space<vmem>>, %arg2: memref<8x32xf32, #tpu.memory_space<vmem>>, %arg3: memref<32x128xbf16, #tpu.memory_space<vmem>>, %arg4: memref<1x128xf32, #tpu.memory_space<vmem>>, %arg5: memref<32x128xbf16, #tpu.memory_space<vmem>>, %arg6: memref<1x128xf32, #tpu.memory_space<vmem>>, %arg7: memref<32x128xbf16, #tpu.memory_space<vmem>>, %arg8: memref<1x128xf32, #tpu.memory_space<vmem>>, %arg9: memref<128x32xbf16, #tpu.memory_space<vmem>>, %arg10: memref<1x32xf32, #tpu.memory_space<vmem>>, %arg11: memref<1x32xf32, #tpu.memory_space<vmem>>, %arg12: memref<1x32xf32, #tpu.memory_space<vmem>>, %arg13: memref<1x32xf32, #tpu.memory_space<vmem>>, %arg14: memref<1x32xf32, #tpu.memory_space<vmem>>, %arg15: memref<32x32xbf16, #tpu.memory_space<vmem>>, %arg16: memref<32x32xbf16, #tpu.memory_space<vmem>>, %arg17: memref<8x32xf32, #tpu.memory_space<vmem>>, %arg18: memref<1x4x8x8xbf16, #tpu.memory_space<vmem>>) attributes {dimension_semantics = [#tpu.dimension_semantics<parallel>], iteration_bounds = array<i64: 2>, scalar_prefetch = 0 : i64, scratch_operands = 0 : i64, tpu.core_type = #tpu.core_type<tc>, window_params = [{transform_indices = @transform_0, window_bounds = array<i64: 8, 32>}, {pipeline_mode = #tpu.pipeline_mode<synchronous>, transform_indices = @transform_1, window_bounds = array<i64: 8, 32>}, {pipeline_mode = #tpu.pipeline_mode<synchronous>, transform_indices = @transform_2, window_bounds = array<i64: 32, 128>}, {pipeline_mode = #tpu.pipeline_mode<synchronous>, transform_indices = @transform_3, window_bounds = array<i64: 1, 128>}, {pipeline_mode = #tpu.pipeline_mode<synchronous>, transform_indices = @transform_4, window_bounds = array<i64: 32, 128>}, {pipeline_mode = #tpu.pipeline_mode<synchronous>, transform_indices = @transform_5, window_bounds = array<i64: 1, 128>}, {pipeline_mode = #tpu.pipeline_mode<synchronous>, transform_indices = @transform_6, window_bounds = array<i64: 32, 128>}, {pipeline_mode = #tpu.pipeline_mode<synchronous>, transform_indices = @transform_7, window_bounds = array<i64: 1, 128>}, {pipeline_mode = #tpu.pipeline_mode<synchronous>, transform_indices = @transform_8, window_bounds = array<i64: 128, 32>}, {pipeline_mode = #tpu.pipeline_mode<synchronous>, transform_indices = @transform_9, window_bounds = array<i64: 1, 32>}, {pipeline_mode = #tpu.pipeline_mode<synchronous>, transform_indices = @transform_10, window_bounds = array<i64: 1, 32>}, {pipeline_mode = #tpu.pipeline_mode<synchronous>, transform_indices = @transform_11, window_bounds = array<i64: 1, 32>}, {pipeline_mode = #tpu.pipeline_mode<synchronous>, transform_indices = @transform_12, window_bounds = array<i64: 1, 32>}, {pipeline_mode = #tpu.pipeline_mode<synchronous>, transform_indices = @transform_13, window_bounds = array<i64: 1, 32>}, {pipeline_mode = #tpu.pipeline_mode<synchronous>, transform_indices = @transform_14, window_bounds = array<i64: 32, 32>}, {pipeline_mode = #tpu.pipeline_mode<synchronous>, transform_indices = @transform_15, window_bounds = array<i64: 32, 32>}, {transform_indices = @transform_16, window_bounds = array<i64: 8, 32>}, {transform_indices = @transform_17, window_bounds = array<i64: 1, 4, 8, 8>}]} {
    %c0 = arith.constant 0 : index
    %c0_0 = arith.constant 0 : index
    %0 = vector.load %arg1[%c0, %c0_0] : memref<8x32xf32, #tpu.memory_space<vmem>>, vector<8x32xf32>
    %1 = vector.shape_cast %0 : vector<8x32xf32> to vector<1x8x32xf32>
    %c0_1 = arith.constant 0 : index
    %c0_2 = arith.constant 0 : index
    %2 = vector.load %arg2[%c0_1, %c0_2] : memref<8x32xf32, #tpu.memory_space<vmem>>, vector<8x32xf32>
    %3 = vector.shape_cast %2 : vector<8x32xf32> to vector<1x8x32xf32>
    %4 = arith.addf %1, %3 : vector<1x8x32xf32>
    %5 = vector.shape_cast %4 : vector<1x8x32xf32> to vector<8x32xf32>
    %c0_3 = arith.constant 0 : index
    %c0_4 = arith.constant 0 : index
    %6 = vector.load %arg11[%c0_3, %c0_4] : memref<1x32xf32, #tpu.memory_space<vmem>>, vector<1x32xf32>
    %c0_5 = arith.constant 0 : index
    %c0_6 = arith.constant 0 : index
    %7 = vector.load %arg12[%c0_5, %c0_6] : memref<1x32xf32, #tpu.memory_space<vmem>>, vector<1x32xf32>
    %cst = arith.constant dense<0.000000e+00> : vector<8xf32>
    %8 = vector.multi_reduction <add>, %5, %cst [1] : vector<8x32xf32> to vector<8xf32>
    %9 = vector.shape_cast %8 : vector<8xf32> to vector<8x1xf32>
    %cst_7 = arith.constant 3.200000e+01 : f32
    %10 = vector.broadcast %cst_7 : f32 to vector<8x1xf32>
    %11 = arith.divf %9, %10 : vector<8x1xf32>
    %12 = vector.broadcast %11 : vector<8x1xf32> to vector<8x32xf32>
    %13 = arith.subf %5, %12 : vector<8x32xf32>
    %14 = arith.mulf %13, %13 : vector<8x32xf32>
    %cst_8 = arith.constant dense<0.000000e+00> : vector<8xf32>
    %15 = vector.multi_reduction <add>, %14, %cst_8 [1] : vector<8x32xf32> to vector<8xf32>
    %16 = vector.shape_cast %15 : vector<8xf32> to vector<8x1xf32>
    %cst_9 = arith.constant 3.200000e+01 : f32
    %17 = vector.broadcast %cst_9 : f32 to vector<8x1xf32>
    %18 = arith.divf %16, %17 : vector<8x1xf32>
    %cst_10 = arith.constant 9.99999974E-6 : f32
    %19 = vector.broadcast %cst_10 : f32 to vector<8x1xf32>
    %20 = arith.addf %18, %19 : vector<8x1xf32>
    %21 = math.rsqrt %20 : vector<8x1xf32>
    %22 = vector.broadcast %21 : vector<8x1xf32> to vector<8x32xf32>
    %23 = arith.mulf %13, %22 : vector<8x32xf32>
    %24 = vector.broadcast %6 : vector<1x32xf32> to vector<8x32xf32>
    %25 = arith.mulf %23, %24 : vector<8x32xf32>
    %26 = vector.broadcast %7 : vector<1x32xf32> to vector<8x32xf32>
    %27 = arith.addf %25, %26 : vector<8x32xf32>
    %28 = arith.truncf %27 : vector<8x32xf32> to vector<8x32xbf16>
    %c0_11 = arith.constant 0 : index
    %c0_12 = arith.constant 0 : index
    %29 = vector.load %arg3[%c0_11, %c0_12] : memref<32x128xbf16, #tpu.memory_space<vmem>>, vector<32x128xbf16>
    %cst_13 = arith.constant dense<0.000000e+00> : vector<8x128xf32>
    %30 = tpu.matmul %28, %29, %cst_13 {dimension_numbers = #tpu.dot_dimension_numbers<[1], [0], [0], [1], [0, 0, 1, 1], [], []>} : vector<8x32xbf16>, vector<32x128xbf16>, vector<8x128xf32> -> vector<8x128xf32>
    %c0_14 = arith.constant 0 : index
    %c0_15 = arith.constant 0 : index
    %31 = vector.load %arg4[%c0_14, %c0_15] : memref<1x128xf32, #tpu.memory_space<vmem>>, vector<1x128xf32>
    %32 = vector.broadcast %31 : vector<1x128xf32> to vector<8x128xf32>
    %33 = arith.addf %30, %32 : vector<8x128xf32>
    %34 = arith.truncf %33 : vector<8x128xf32> to vector<8x128xbf16>
    %35 = vector.shape_cast %34 : vector<8x128xbf16> to vector<1x8x128xbf16>
    %c0_16 = arith.constant 0 : index
    %c0_17 = arith.constant 0 : index
    %36 = vector.load %arg5[%c0_16, %c0_17] : memref<32x128xbf16, #tpu.memory_space<vmem>>, vector<32x128xbf16>
    %cst_18 = arith.constant dense<0.000000e+00> : vector<8x128xf32>
    %37 = tpu.matmul %28, %36, %cst_18 {dimension_numbers = #tpu.dot_dimension_numbers<[1], [0], [0], [1], [0, 0, 1, 1], [], []>} : vector<8x32xbf16>, vector<32x128xbf16>, vector<8x128xf32> -> vector<8x128xf32>
    %c0_19 = arith.constant 0 : index
    %c0_20 = arith.constant 0 : index
    %38 = vector.load %arg6[%c0_19, %c0_20] : memref<1x128xf32, #tpu.memory_space<vmem>>, vector<1x128xf32>
    %39 = vector.broadcast %38 : vector<1x128xf32> to vector<8x128xf32>
    %40 = arith.addf %37, %39 : vector<8x128xf32>
    %41 = arith.truncf %40 : vector<8x128xf32> to vector<8x128xbf16>
    %42 = vector.shape_cast %41 : vector<8x128xbf16> to vector<1x8x128xbf16>
    %c0_21 = arith.constant 0 : index
    %c0_22 = arith.constant 0 : index
    %43 = vector.load %arg7[%c0_21, %c0_22] : memref<32x128xbf16, #tpu.memory_space<vmem>>, vector<32x128xbf16>
    %cst_23 = arith.constant dense<0.000000e+00> : vector<8x128xf32>
    %44 = tpu.matmul %28, %43, %cst_23 {dimension_numbers = #tpu.dot_dimension_numbers<[1], [0], [0], [1], [0, 0, 1, 1], [], []>} : vector<8x32xbf16>, vector<32x128xbf16>, vector<8x128xf32> -> vector<8x128xf32>
    %c0_24 = arith.constant 0 : index
    %c0_25 = arith.constant 0 : index
    %45 = vector.load %arg8[%c0_24, %c0_25] : memref<1x128xf32, #tpu.memory_space<vmem>>, vector<1x128xf32>
    %46 = vector.broadcast %45 : vector<1x128xf32> to vector<8x128xf32>
    %47 = arith.addf %44, %46 : vector<8x128xf32>
    %48 = arith.truncf %47 : vector<8x128xf32> to vector<8x128xbf16>
    %49 = vector.shape_cast %48 : vector<8x128xbf16> to vector<1x8x128xbf16>
    %c0_26 = arith.constant 0 : index
    %c0_27 = arith.constant 0 : index
    %50 = vector.load %arg10[%c0_26, %c0_27] : memref<1x32xf32, #tpu.memory_space<vmem>>, vector<1x32xf32>
    %51 = vector.broadcast %50 : vector<1x32xf32> to vector<8x32xf32>
    %52 = arith.addf %27, %51 : vector<8x32xf32>
    %53 = vector.extract_strided_slice %35 {offsets = [0, 0, 0], sizes = [1, 8, 32], strides = [1, 1, 1]} : vector<1x8x128xbf16> to vector<1x8x32xbf16>
    %54 = vector.extract_strided_slice %42 {offsets = [0, 0, 0], sizes = [1, 8, 32], strides = [1, 1, 1]} : vector<1x8x128xbf16> to vector<1x8x32xbf16>
    %55 = vector.extract_strided_slice %49 {offsets = [0, 0, 0], sizes = [1, 8, 32], strides = [1, 1, 1]} : vector<1x8x128xbf16> to vector<1x8x32xbf16>
    "tpu.trace_start"() <{level = 10 : i32, message = "bqk,bsk->bqs"}> : () -> ()
    %cst_28 = arith.constant dense<0.000000e+00> : vector<1x8x8xf32>
    %56 = tpu.matmul %53, %54, %cst_28 {dimension_numbers = #tpu.dot_dimension_numbers<[2], [2], [1], [1], [0, 0, 0, 1, 1, 1], [0], [0]>} : vector<1x8x32xbf16>, vector<1x8x32xbf16>, vector<1x8x8xf32> -> vector<1x8x8xf32>
    "tpu.trace_stop"() : () -> ()
    %cst_29 = arith.constant 0.176776692 : f32
    %57 = vector.broadcast %cst_29 : f32 to vector<1x8x8xf32>
    %58 = arith.mulf %56, %57 : vector<1x8x8xf32>
    %cst_30 = arith.constant dense<0xFF800000> : vector<1x8xf32>
    %59 = vector.multi_reduction <maximumf>, %58, %cst_30 [2] : vector<1x8x8xf32> to vector<1x8xf32>
    %60 = vector.shape_cast %59 : vector<1x8xf32> to vector<1x8x1xf32>
    %61 = vector.broadcast %60 : vector<1x8x1xf32> to vector<1x8x8xf32>
    %62 = arith.subf %58, %61 : vector<1x8x8xf32>
    %63 = math.exp %62 : vector<1x8x8xf32>
    %cst_31 = arith.constant dense<0.000000e+00> : vector<1x8xf32>
    %64 = vector.multi_reduction <add>, %63, %cst_31 [2] : vector<1x8x8xf32> to vector<1x8xf32>
    %65 = vector.shape_cast %64 : vector<1x8xf32> to vector<1x8x1xf32>
    %66 = tpu.reciprocal %65 {approx = true} : vector<1x8x1xf32> -> vector<1x8x1xf32>
    %67 = vector.broadcast %66 : vector<1x8x1xf32> to vector<1x8x8xf32>
    %68 = arith.mulf %63, %67 : vector<1x8x8xf32>
    %69 = arith.truncf %68 : vector<1x8x8xf32> to vector<1x8x8xbf16>
    %c0_32 = arith.constant 0 : index
    %c0_33 = arith.constant 0 : index
    %c0_34 = arith.constant 0 : index
    %c0_35 = arith.constant 0 : index
    %70 = vector.load %arg18[%c0_32, %c0_33, %c0_34, %c0_35] : memref<1x4x8x8xbf16, #tpu.memory_space<vmem>>, vector<1x1x8x8xbf16>
    %71 = vector.shape_cast %70 : vector<1x1x8x8xbf16> to vector<1x8x8xbf16>
    %72 = vector.shape_cast %69 : vector<1x8x8xbf16> to vector<1x1x8x8xbf16>
    tpu.vector_store %arg18[%c0_32, %c0_33, %c0_34, %c0_35], %72 {strides = array<i32>} : memref<1x4x8x8xbf16, #tpu.memory_space<vmem>>, vector<1x1x8x8xbf16>,
    "tpu.trace_start"() <{level = 10 : i32, message = "bqs,bsv->bqv"}> : () -> ()
    %cst_36 = arith.constant dense<0.000000e+00> : vector<1x8x32xf32>
    %73 = tpu.matmul %69, %55, %cst_36 {dimension_numbers = #tpu.dot_dimension_numbers<[2], [1], [1], [2], [0, 0, 0, 1, 1, 2], [0], [0]>} : vector<1x8x8xbf16>, vector<1x8x32xbf16>, vector<1x8x32xf32> -> vector<1x8x32xf32>
    "tpu.trace_stop"() : () -> ()
    %74 = vector.shape_cast %73 : vector<1x8x32xf32> to vector<8x32xf32>
    %75 = arith.truncf %74 : vector<8x32xf32> to vector<8x32xbf16>
    %c0_37 = arith.constant 0 : index
    %c0_38 = arith.constant 0 : index
    %76 = vector.load %arg9[%c0_37, %c0_38] : memref<128x32xbf16, #tpu.memory_space<vmem>>, vector<32x32xbf16>
    %cst_39 = arith.constant dense<0.000000e+00> : vector<8x32xf32>
    %77 = tpu.matmul %75, %76, %cst_39 {dimension_numbers = #tpu.dot_dimension_numbers<[1], [0], [0], [1], [0, 0, 1, 1], [], []>} : vector<8x32xbf16>, vector<32x32xbf16>, vector<8x32xf32> -> vector<8x32xf32>
    %78 = arith.addf %52, %77 : vector<8x32xf32>
    %79 = vector.extract_strided_slice %35 {offsets = [0, 0, 32], sizes = [1, 8, 32], strides = [1, 1, 1]} : vector<1x8x128xbf16> to vector<1x8x32xbf16>
    %80 = vector.extract_strided_slice %42 {offsets = [0, 0, 32], sizes = [1, 8, 32], strides = [1, 1, 1]} : vector<1x8x128xbf16> to vector<1x8x32xbf16>
    %81 = vector.extract_strided_slice %49 {offsets = [0, 0, 32], sizes = [1, 8, 32], strides = [1, 1, 1]} : vector<1x8x128xbf16> to vector<1x8x32xbf16>
    "tpu.trace_start"() <{level = 10 : i32, message = "bqk,bsk->bqs"}> : () -> ()
    %cst_40 = arith.constant dense<0.000000e+00> : vector<1x8x8xf32>
    %82 = tpu.matmul %79, %80, %cst_40 {dimension_numbers = #tpu.dot_dimension_numbers<[2], [2], [1], [1], [0, 0, 0, 1, 1, 1], [0], [0]>} : vector<1x8x32xbf16>, vector<1x8x32xbf16>, vector<1x8x8xf32> -> vector<1x8x8xf32>
    "tpu.trace_stop"() : () -> ()
    %cst_41 = arith.constant 0.176776692 : f32
    %83 = vector.broadcast %cst_41 : f32 to vector<1x8x8xf32>
    %84 = arith.mulf %82, %83 : vector<1x8x8xf32>
    %cst_42 = arith.constant dense<0xFF800000> : vector<1x8xf32>
    %85 = vector.multi_reduction <maximumf>, %84, %cst_42 [2] : vector<1x8x8xf32> to vector<1x8xf32>
    %86 = vector.shape_cast %85 : vector<1x8xf32> to vector<1x8x1xf32>
    %87 = vector.broadcast %86 : vector<1x8x1xf32> to vector<1x8x8xf32>
    %88 = arith.subf %84, %87 : vector<1x8x8xf32>
    %89 = math.exp %88 : vector<1x8x8xf32>
    %cst_43 = arith.constant dense<0.000000e+00> : vector<1x8xf32>
    %90 = vector.multi_reduction <add>, %89, %cst_43 [2] : vector<1x8x8xf32> to vector<1x8xf32>
    %91 = vector.shape_cast %90 : vector<1x8xf32> to vector<1x8x1xf32>
    %92 = tpu.reciprocal %91 {approx = true} : vector<1x8x1xf32> -> vector<1x8x1xf32>
    %93 = vector.broadcast %92 : vector<1x8x1xf32> to vector<1x8x8xf32>
    %94 = arith.mulf %89, %93 : vector<1x8x8xf32>
    %95 = arith.truncf %94 : vector<1x8x8xf32> to vector<1x8x8xbf16>
    %c0_44 = arith.constant 0 : index
    %c1 = arith.constant 1 : index
    %c0_45 = arith.constant 0 : index
    %c0_46 = arith.constant 0 : index
    %96 = vector.load %arg18[%c0_44, %c1, %c0_45, %c0_46] : memref<1x4x8x8xbf16, #tpu.memory_space<vmem>>, vector<1x1x8x8xbf16>
    %97 = vector.shape_cast %96 : vector<1x1x8x8xbf16> to vector<1x8x8xbf16>
    %98 = vector.shape_cast %95 : vector<1x8x8xbf16> to vector<1x1x8x8xbf16>
    tpu.vector_store %arg18[%c0_44, %c1, %c0_45, %c0_46], %98 {strides = array<i32>} : memref<1x4x8x8xbf16, #tpu.memory_space<vmem>>, vector<1x1x8x8xbf16>,
    "tpu.trace_start"() <{level = 10 : i32, message = "bqs,bsv->bqv"}> : () -> ()
    %cst_47 = arith.constant dense<0.000000e+00> : vector<1x8x32xf32>
    %99 = tpu.matmul %95, %81, %cst_47 {dimension_numbers = #tpu.dot_dimension_numbers<[2], [1], [1], [2], [0, 0, 0, 1, 1, 2], [0], [0]>} : vector<1x8x8xbf16>, vector<1x8x32xbf16>, vector<1x8x32xf32> -> vector<1x8x32xf32>
    "tpu.trace_stop"() : () -> ()
    %100 = vector.shape_cast %99 : vector<1x8x32xf32> to vector<8x32xf32>
    %101 = arith.truncf %100 : vector<8x32xf32> to vector<8x32xbf16>
    %c32 = arith.constant 32 : index
    %c0_48 = arith.constant 0 : index
    %102 = vector.load %arg9[%c32, %c0_48] : memref<128x32xbf16, #tpu.memory_space<vmem>>, vector<32x32xbf16>
    %cst_49 = arith.constant dense<0.000000e+00> : vector<8x32xf32>
    %103 = tpu.matmul %101, %102, %cst_49 {dimension_numbers = #tpu.dot_dimension_numbers<[1], [0], [0], [1], [0, 0, 1, 1], [], []>} : vector<8x32xbf16>, vector<32x32xbf16>, vector<8x32xf32> -> vector<8x32xf32>
    %104 = arith.addf %78, %103 : vector<8x32xf32>
    %105 = vector.extract_strided_slice %35 {offsets = [0, 0, 64], sizes = [1, 8, 32], strides = [1, 1, 1]} : vector<1x8x128xbf16> to vector<1x8x32xbf16>
    %106 = vector.extract_strided_slice %42 {offsets = [0, 0, 64], sizes = [1, 8, 32], strides = [1, 1, 1]} : vector<1x8x128xbf16> to vector<1x8x32xbf16>
    %107 = vector.extract_strided_slice %49 {offsets = [0, 0, 64], sizes = [1, 8, 32], strides = [1, 1, 1]} : vector<1x8x128xbf16> to vector<1x8x32xbf16>
    "tpu.trace_start"() <{level = 10 : i32, message = "bqk,bsk->bqs"}> : () -> ()
    %cst_50 = arith.constant dense<0.000000e+00> : vector<1x8x8xf32>
    %108 = tpu.matmul %105, %106, %cst_50 {dimension_numbers = #tpu.dot_dimension_numbers<[2], [2], [1], [1], [0, 0, 0, 1, 1, 1], [0], [0]>} : vector<1x8x32xbf16>, vector<1x8x32xbf16>, vector<1x8x8xf32> -> vector<1x8x8xf32>
    "tpu.trace_stop"() : () -> ()
    %cst_51 = arith.constant 0.176776692 : f32
    %109 = vector.broadcast %cst_51 : f32 to vector<1x8x8xf32>
    %110 = arith.mulf %108, %109 : vector<1x8x8xf32>
    %cst_52 = arith.constant dense<0xFF800000> : vector<1x8xf32>
    %111 = vector.multi_reduction <maximumf>, %110, %cst_52 [2] : vector<1x8x8xf32> to vector<1x8xf32>
    %112 = vector.shape_cast %111 : vector<1x8xf32> to vector<1x8x1xf32>
    %113 = vector.broadcast %112 : vector<1x8x1xf32> to vector<1x8x8xf32>
    %114 = arith.subf %110, %113 : vector<1x8x8xf32>
    %115 = math.exp %114 : vector<1x8x8xf32>
    %cst_53 = arith.constant dense<0.000000e+00> : vector<1x8xf32>
    %116 = vector.multi_reduction <add>, %115, %cst_53 [2] : vector<1x8x8xf32> to vector<1x8xf32>
    %117 = vector.shape_cast %116 : vector<1x8xf32> to vector<1x8x1xf32>
    %118 = tpu.reciprocal %117 {approx = true} : vector<1x8x1xf32> -> vector<1x8x1xf32>
    %119 = vector.broadcast %118 : vector<1x8x1xf32> to vector<1x8x8xf32>
    %120 = arith.mulf %115, %119 : vector<1x8x8xf32>
    %121 = arith.truncf %120 : vector<1x8x8xf32> to vector<1x8x8xbf16>
    %c0_54 = arith.constant 0 : index
    %c2 = arith.constant 2 : index
    %c0_55 = arith.constant 0 : index
    %c0_56 = arith.constant 0 : index
    %122 = vector.load %arg18[%c0_54, %c2, %c0_55, %c0_56] : memref<1x4x8x8xbf16, #tpu.memory_space<vmem>>, vector<1x1x8x8xbf16>
    %123 = vector.shape_cast %122 : vector<1x1x8x8xbf16> to vector<1x8x8xbf16>
    %124 = vector.shape_cast %121 : vector<1x8x8xbf16> to vector<1x1x8x8xbf16>
    tpu.vector_store %arg18[%c0_54, %c2, %c0_55, %c0_56], %124 {strides = array<i32>} : memref<1x4x8x8xbf16, #tpu.memory_space<vmem>>, vector<1x1x8x8xbf16>,
    "tpu.trace_start"() <{level = 10 : i32, message = "bqs,bsv->bqv"}> : () -> ()
    %cst_57 = arith.constant dense<0.000000e+00> : vector<1x8x32xf32>
    %125 = tpu.matmul %121, %107, %cst_57 {dimension_numbers = #tpu.dot_dimension_numbers<[2], [1], [1], [2], [0, 0, 0, 1, 1, 2], [0], [0]>} : vector<1x8x8xbf16>, vector<1x8x32xbf16>, vector<1x8x32xf32> -> vector<1x8x32xf32>
    "tpu.trace_stop"() : () -> ()
    %126 = vector.shape_cast %125 : vector<1x8x32xf32> to vector<8x32xf32>
    %127 = arith.truncf %126 : vector<8x32xf32> to vector<8x32xbf16>
    %c64 = arith.constant 64 : index
    %c0_58 = arith.constant 0 : index
    %128 = vector.load %arg9[%c64, %c0_58] : memref<128x32xbf16, #tpu.memory_space<vmem>>, vector<32x32xbf16>
    %cst_59 = arith.constant dense<0.000000e+00> : vector<8x32xf32>
    %129 = tpu.matmul %127, %128, %cst_59 {dimension_numbers = #tpu.dot_dimension_numbers<[1], [0], [0], [1], [0, 0, 1, 1], [], []>} : vector<8x32xbf16>, vector<32x32xbf16>, vector<8x32xf32> -> vector<8x32xf32>
    %130 = arith.addf %104, %129 : vector<8x32xf32>
    %131 = vector.extract_strided_slice %35 {offsets = [0, 0, 96], sizes = [1, 8, 32], strides = [1, 1, 1]} : vector<1x8x128xbf16> to vector<1x8x32xbf16>
    %132 = vector.extract_strided_slice %42 {offsets = [0, 0, 96], sizes = [1, 8, 32], strides = [1, 1, 1]} : vector<1x8x128xbf16> to vector<1x8x32xbf16>
    %133 = vector.extract_strided_slice %49 {offsets = [0, 0, 96], sizes = [1, 8, 32], strides = [1, 1, 1]} : vector<1x8x128xbf16> to vector<1x8x32xbf16>
    "tpu.trace_start"() <{level = 10 : i32, message = "bqk,bsk->bqs"}> : () -> ()
    %cst_60 = arith.constant dense<0.000000e+00> : vector<1x8x8xf32>
    %134 = tpu.matmul %131, %132, %cst_60 {dimension_numbers = #tpu.dot_dimension_numbers<[2], [2], [1], [1], [0, 0, 0, 1, 1, 1], [0], [0]>} : vector<1x8x32xbf16>, vector<1x8x32xbf16>, vector<1x8x8xf32> -> vector<1x8x8xf32>
    "tpu.trace_stop"() : () -> ()
    %cst_61 = arith.constant 0.176776692 : f32
    %135 = vector.broadcast %cst_61 : f32 to vector<1x8x8xf32>
    %136 = arith.mulf %134, %135 : vector<1x8x8xf32>
    %cst_62 = arith.constant dense<0xFF800000> : vector<1x8xf32>
    %137 = vector.multi_reduction <maximumf>, %136, %cst_62 [2] : vector<1x8x8xf32> to vector<1x8xf32>
    %138 = vector.shape_cast %137 : vector<1x8xf32> to vector<1x8x1xf32>
    %139 = vector.broadcast %138 : vector<1x8x1xf32> to vector<1x8x8xf32>
    %140 = arith.subf %136, %139 : vector<1x8x8xf32>
    %141 = math.exp %140 : vector<1x8x8xf32>
    %cst_63 = arith.constant dense<0.000000e+00> : vector<1x8xf32>
    %142 = vector.multi_reduction <add>, %141, %cst_63 [2] : vector<1x8x8xf32> to vector<1x8xf32>
    %143 = vector.shape_cast %142 : vector<1x8xf32> to vector<1x8x1xf32>
    %144 = tpu.reciprocal %143 {approx = true} : vector<1x8x1xf32> -> vector<1x8x1xf32>
    %145 = vector.broadcast %144 : vector<1x8x1xf32> to vector<1x8x8xf32>
    %146 = arith.mulf %141, %145 : vector<1x8x8xf32>
    %147 = arith.truncf %146 : vector<1x8x8xf32> to vector<1x8x8xbf16>
    %c0_64 = arith.constant 0 : index
    %c3 = arith.constant 3 : index
    %c0_65 = arith.constant 0 : index
    %c0_66 = arith.constant 0 : index
    %148 = vector.load %arg18[%c0_64, %c3, %c0_65, %c0_66] : memref<1x4x8x8xbf16, #tpu.memory_space<vmem>>, vector<1x1x8x8xbf16>
    %149 = vector.shape_cast %148 : vector<1x1x8x8xbf16> to vector<1x8x8xbf16>
    %150 = vector.shape_cast %147 : vector<1x8x8xbf16> to vector<1x1x8x8xbf16>
    tpu.vector_store %arg18[%c0_64, %c3, %c0_65, %c0_66], %150 {strides = array<i32>} : memref<1x4x8x8xbf16, #tpu.memory_space<vmem>>, vector<1x1x8x8xbf16>,
    "tpu.trace_start"() <{level = 10 : i32, message = "bqs,bsv->bqv"}> : () -> ()
    %cst_67 = arith.constant dense<0.000000e+00> : vector<1x8x32xf32>
    %151 = tpu.matmul %147, %133, %cst_67 {dimension_numbers = #tpu.dot_dimension_numbers<[2], [1], [1], [2], [0, 0, 0, 1, 1, 2], [0], [0]>} : vector<1x8x8xbf16>, vector<1x8x32xbf16>, vector<1x8x32xf32> -> vector<1x8x32xf32>
    "tpu.trace_stop"() : () -> ()
    %152 = vector.shape_cast %151 : vector<1x8x32xf32> to vector<8x32xf32>
    %153 = arith.truncf %152 : vector<8x32xf32> to vector<8x32xbf16>
    %c96 = arith.constant 96 : index
    %c0_68 = arith.constant 0 : index
    %154 = vector.load %arg9[%c96, %c0_68] : memref<128x32xbf16, #tpu.memory_space<vmem>>, vector<32x32xbf16>
    %cst_69 = arith.constant dense<0.000000e+00> : vector<8x32xf32>
    %155 = tpu.matmul %153, %154, %cst_69 {dimension_numbers = #tpu.dot_dimension_numbers<[1], [0], [0], [1], [0, 0, 1, 1], [], []>} : vector<8x32xbf16>, vector<32x32xbf16>, vector<8x32xf32> -> vector<8x32xf32>
    %156 = arith.addf %130, %155 : vector<8x32xf32>
    %c0_70 = arith.constant 0 : index
    %c0_71 = arith.constant 0 : index
    %157 = vector.load %arg13[%c0_70, %c0_71] : memref<1x32xf32, #tpu.memory_space<vmem>>, vector<1x32xf32>
    %c0_72 = arith.constant 0 : index
    %c0_73 = arith.constant 0 : index
    %158 = vector.load %arg14[%c0_72, %c0_73] : memref<1x32xf32, #tpu.memory_space<vmem>>, vector<1x32xf32>
    %cst_74 = arith.constant dense<0.000000e+00> : vector<8xf32>
    %159 = vector.multi_reduction <add>, %156, %cst_74 [1] : vector<8x32xf32> to vector<8xf32>
    %160 = vector.shape_cast %159 : vector<8xf32> to vector<8x1xf32>
    %cst_75 = arith.constant 3.200000e+01 : f32
    %161 = vector.broadcast %cst_75 : f32 to vector<8x1xf32>
    %162 = arith.divf %160, %161 : vector<8x1xf32>
    %163 = vector.broadcast %162 : vector<8x1xf32> to vector<8x32xf32>
    %164 = arith.subf %156, %163 : vector<8x32xf32>
    %165 = arith.mulf %164, %164 : vector<8x32xf32>
    %cst_76 = arith.constant dense<0.000000e+00> : vector<8xf32>
    %166 = vector.multi_reduction <add>, %165, %cst_76 [1] : vector<8x32xf32> to vector<8xf32>
    %167 = vector.shape_cast %166 : vector<8xf32> to vector<8x1xf32>
    %cst_77 = arith.constant 3.200000e+01 : f32
    %168 = vector.broadcast %cst_77 : f32 to vector<8x1xf32>
    %169 = arith.divf %167, %168 : vector<8x1xf32>
    %cst_78 = arith.constant 9.99999974E-6 : f32
    %170 = vector.broadcast %cst_78 : f32 to vector<8x1xf32>
    %171 = arith.addf %169, %170 : vector<8x1xf32>
    %172 = math.rsqrt %171 : vector<8x1xf32>
    %173 = vector.broadcast %172 : vector<8x1xf32> to vector<8x32xf32>
    %174 = arith.mulf %164, %173 : vector<8x32xf32>
    %175 = vector.broadcast %157 : vector<1x32xf32> to vector<8x32xf32>
    %176 = arith.mulf %174, %175 : vector<8x32xf32>
    %177 = vector.broadcast %158 : vector<1x32xf32> to vector<8x32xf32>
    %178 = arith.addf %176, %177 : vector<8x32xf32>
    %179 = arith.truncf %178 : vector<8x32xf32> to vector<8x32xbf16>
    %c0_79 = arith.constant 0 : index
    %c0_80 = arith.constant 0 : index
    %180 = vector.load %arg15[%c0_79, %c0_80] : memref<32x32xbf16, #tpu.memory_space<vmem>>, vector<32x32xbf16>
    %cst_81 = arith.constant dense<0.000000e+00> : vector<8x32xf32>
    %181 = tpu.matmul %179, %180, %cst_81 {dimension_numbers = #tpu.dot_dimension_numbers<[1], [0], [0], [1], [0, 0, 1, 1], [], []>} : vector<8x32xbf16>, vector<32x32xbf16>, vector<8x32xf32> -> vector<8x32xf32>
    %182 = arith.mulf %181, %181 : vector<8x32xf32>
    %183 = arith.mulf %181, %182 : vector<8x32xf32>
    %cst_82 = arith.constant 4.471500e-02 : f32
    %184 = vector.broadcast %cst_82 : f32 to vector<8x32xf32>
    %185 = arith.mulf %184, %183 : vector<8x32xf32>
    %186 = arith.addf %181, %185 : vector<8x32xf32>
    %cst_83 = arith.constant 0.797884583 : f32
    %187 = vector.broadcast %cst_83 : f32 to vector<8x32xf32>
    %188 = arith.mulf %187, %186 : vector<8x32xf32>
    %189 = math.tanh %188 : vector<8x32xf32>
    %cst_84 = arith.constant 1.000000e+00 : f32
    %190 = vector.broadcast %cst_84 : f32 to vector<8x32xf32>
    %191 = arith.addf %190, %189 : vector<8x32xf32>
    %cst_85 = arith.constant 5.000000e-01 : f32
    %192 = vector.broadcast %cst_85 : f32 to vector<8x32xf32>
    %193 = arith.mulf %192, %191 : vector<8x32xf32>
    %194 = arith.mulf %181, %193 : vector<8x32xf32>
    %195 = arith.truncf %194 : vector<8x32xf32> to vector<8x32xbf16>
    %c0_86 = arith.constant 0 : index
    %c0_87 = arith.constant 0 : index
    %196 = vector.load %arg16[%c0_86, %c0_87] : memref<32x32xbf16, #tpu.memory_space<vmem>>, vector<32x32xbf16>
    %cst_88 = arith.constant dense<0.000000e+00> : vector<8x32xf32>
    %197 = tpu.matmul %195, %196, %cst_88 {dimension_numbers = #tpu.dot_dimension_numbers<[1], [0], [0], [1], [0, 0, 1, 1], [], []>} : vector<8x32xbf16>, vector<32x32xbf16>, vector<8x32xf32> -> vector<8x32xf32>
    %198 = arith.addf %178, %197 : vector<8x32xf32>
    %c0_89 = arith.constant 0 : index
    %c0_90 = arith.constant 0 : index
    %199 = vector.load %arg17[%c0_89, %c0_90] : memref<8x32xf32, #tpu.memory_space<vmem>>, vector<8x32xf32>
    tpu.vector_store %arg17[%c0_89, %c0_90], %198 {strides = array<i32>} : memref<8x32xf32, #tpu.memory_space<vmem>>, vector<8x32xf32>,
    return
  }
  func.func @transform_0(%arg0: i32) -> (i32, i32) {
    %c0_i32 = arith.constant 0 : i32
    %c0_i32_0 = arith.constant 0 : i32
    return %arg0, %c0_i32 : i32, i32
  }
  func.func @transform_1(%arg0: i32) -> (i32, i32) {
    %c0_i32 = arith.constant 0 : i32
    %c0_i32_0 = arith.constant 0 : i32
    %c0_i32_1 = arith.constant 0 : i32
    return %c0_i32, %c0_i32_0 : i32, i32
  }
  func.func @transform_2(%arg0: i32) -> (i32, i32) {
    %c0_i32 = arith.constant 0 : i32
    %c0_i32_0 = arith.constant 0 : i32
    %c0_i32_1 = arith.constant 0 : i32
    return %c0_i32, %c0_i32_0 : i32, i32
  }
  func.func @transform_3(%arg0: i32) -> (i32, i32) {
    %c0_i32 = arith.constant 0 : i32
    %c0_i32_0 = arith.constant 0 : i32
    %c0_i32_1 = arith.constant 0 : i32
    return %c0_i32, %c0_i32_0 : i32, i32
  }
  func.func @transform_4(%arg0: i32) -> (i32, i32) {
    %c0_i32 = arith.constant 0 : i32
    %c0_i32_0 = arith.constant 0 : i32
    %c0_i32_1 = arith.constant 0 : i32
    return %c0_i32, %c0_i32_0 : i32, i32
  }
  func.func @transform_5(%arg0: i32) -> (i32, i32) {
    %c0_i32 = arith.constant 0 : i32
    %c0_i32_0 = arith.constant 0 : i32
    %c0_i32_1 = arith.constant 0 : i32
    return %c0_i32, %c0_i32_0 : i32, i32
  }
  func.func @transform_6(%arg0: i32) -> (i32, i32) {
    %c0_i32 = arith.constant 0 : i32
    %c0_i32_0 = arith.constant 0 : i32
    %c0_i32_1 = arith.constant 0 : i32
    return %c0_i32, %c0_i32_0 : i32, i32
  }
  func.func @transform_7(%arg0: i32) -> (i32, i32) {
    %c0_i32 = arith.constant 0 : i32
    %c0_i32_0 = arith.constant 0 : i32
    %c0_i32_1 = arith.constant 0 : i32
    return %c0_i32, %c0_i32_0 : i32, i32
  }
  func.func @transform_8(%arg0: i32) -> (i32, i32) {
    %c0_i32 = arith.constant 0 : i32
    %c0_i32_0 = arith.constant 0 : i32
    %c0_i32_1 = arith.constant 0 : i32
    return %c0_i32, %c0_i32_0 : i32, i32
  }
  func.func @transform_9(%arg0: i32) -> (i32, i32) {
    %c0_i32 = arith.constant 0 : i32
    %c0_i32_0 = arith.constant 0 : i32
    %c0_i32_1 = arith.constant 0 : i32
    return %c0_i32, %c0_i32_0 : i32, i32
  }
  func.func @transform_10(%arg0: i32) -> (i32, i32) {
    %c0_i32 = arith.constant 0 : i32
    %c0_i32_0 = arith.constant 0 : i32
    %c0_i32_1 = arith.constant 0 : i32
    return %c0_i32, %c0_i32_0 : i32, i32
  }
  func.func @transform_11(%arg0: i32) -> (i32, i32) {
    %c0_i32 = arith.constant 0 : i32
    %c0_i32_0 = arith.constant 0 : i32
    %c0_i32_1 = arith.constant 0 : i32
    return %c0_i32, %c0_i32_0 : i32, i32
  }
  func.func @transform_12(%arg0: i32) -> (i32, i32) {
    %c0_i32 = arith.constant 0 : i32
    %c0_i32_0 = arith.constant 0 : i32
    %c0_i32_1 = arith.constant 0 : i32
    return %c0_i32, %c0_i32_0 : i32, i32
  }
  func.func @transform_13(%arg0: i32) -> (i32, i32) {
    %c0_i32 = arith.constant 0 : i32
    %c0_i32_0 = arith.constant 0 : i32
    %c0_i32_1 = arith.constant 0 : i32
    return %c0_i32, %c0_i32_0 : i32, i32
  }
  func.func @transform_14(%arg0: i32) -> (i32, i32) {
    %c0_i32 = arith.constant 0 : i32
    %c0_i32_0 = arith.constant 0 : i32
    %c0_i32_1 = arith.constant 0 : i32
    return %c0_i32, %c0_i32_0 : i32, i32
  }
  func.func @transform_15(%arg0: i32) -> (i32, i32) {
    %c0_i32 = arith.constant 0 : i32
    %c0_i32_0 = arith.constant 0 : i32
    %c0_i32_1 = arith.constant 0 : i32
    return %c0_i32, %c0_i32_0 : i32, i32
  }
  func.func @transform_16(%arg0: i32) -> (i32, i32) {
    %c0_i32 = arith.constant 0 : i32
    %c0_i32_0 = arith.constant 0 : i32
    return %arg0, %c0_i32 : i32, i32
  }
  func.func @transform_17(%arg0: i32) -> (i32, i32, i32, i32) {
    %c0_i32 = arith.constant 0 : i32
    %c0_i32_0 = arith.constant 0 : i32
    %c0_i32_1 = arith.constant 0 : i32
    %c0_i32_2 = arith.constant 0 : i32
    return %arg0, %c0_i32, %c0_i32_0, %c0_i32_1 : i32, i32, i32, i32
  }
}

</mosaic_0001>

<llo_original>
// kernel: tpu_custom_call.1
$region0: #{tpu_custom_call.1}
  #allocation0 [shape = 'u32[]', space=smem, size = 0x4, offset = 0x4, fixed_abs, tag = 'smem constant byte address 0x4 - core index']
  #allocation1 [shape = 'u32[144,128]{1,0:T(1,128)}', space=vmem, size = 0x12000, scoped, tag = 'internal scratch']
  %s0 = inlined_call_operand.vmem [shape: f32[16,32], index: 0, kind: input, shape index: {}]
  %s1 = inlined_call_operand.hbm [shape: f32[8,32], index: 1, kind: input, shape index: {}]
  %s2 = inlined_call_operand.vmem [shape: bf16[32,128], index: 2, kind: input, shape index: {}]
  %s3 = inlined_call_operand.hbm [shape: f32[1,128], index: 3, kind: input, shape index: {}]
  %s4 = inlined_call_operand.vmem [shape: bf16[32,128], index: 4, kind: input, shape index: {}]
  %s5 = inlined_call_operand.hbm [shape: f32[1,128], index: 5, kind: input, shape index: {}]
  %s6 = inlined_call_operand.vmem [shape: bf16[32,128], index: 6, kind: input, shape index: {}]
  %s7 = inlined_call_operand.hbm [shape: f32[1,128], index: 7, kind: input, shape index: {}]
  %s8 = inlined_call_operand.vmem [shape: bf16[128,32], index: 8, kind: input, shape index: {}]
  %s9 = inlined_call_operand.hbm [shape: f32[1,32], index: 9, kind: input, shape index: {}]
  %s10 = inlined_call_operand.vmem [shape: f32[1,32], index: 10, kind: input, shape index: {}]
  %s11 = inlined_call_operand.vmem [shape: f32[1,32], index: 11, kind: input, shape index: {}]
  %s12 = inlined_call_operand.vmem [shape: f32[1,32], index: 12, kind: input, shape index: {}]
  %s13 = inlined_call_operand.vmem [shape: f32[1,32], index: 13, kind: input, shape index: {}]
  %s14 = inlined_call_operand.vmem [shape: bf16[32,32], index: 14, kind: input, shape index: {}]
  %s15 = inlined_call_operand.vmem [shape: bf16[32,32], index: 15, kind: input, shape index: {}]
  %s16 = inlined_call_operand.hbm [shape: f32[16,32], index: 16, kind: output, shape index: {0}]
  %s17 = inlined_call_operand.hbm [shape: bf16[2,4,8,8], index: 17, kind: output, shape index: {1}]
  %18 = xla_tuple %s16, %s17
  %s19 = sld [smem:[#allocation0]]
  $region125: #{tpu_custom_call.1} parent=0
    _
  %s21 = ssub.s32 1, %s19
  %s22 = scalar_select 0, %s21, %s19
  $region1: #{tpu_custom_call.1} parent=0
    #allocation2 [shape = 'u8[4096]{0}', space=vmem, size = 0x1000, scoped, tag = 'input window, operand 1, single buffered']
    #allocation3 [shape = 's32[2]{0}', space=sflag, size = 0x8, scoped, tag = 'scoped memory for tpu_custom_call.1']
    #allocation4 [shape = 's32[2]{0}', space=sflag, size = 0x8, scoped, tag = 'scoped memory for tpu_custom_call.1']
    #allocation5 [shape = 'u8[512]{0}', space=vmem, size = 0x400, scoped, tag = 'input window, operand 3, single buffered']
    #allocation6 [shape = 's32[1]{0}', space=sflag, size = 0x4, scoped, tag = 'scoped memory for tpu_custom_call.1']
    #allocation7 [shape = 'u8[512]{0}', space=vmem, size = 0x400, scoped, tag = 'input window, operand 5, single buffered']
    #allocation8 [shape = 'u8[512]{0}', space=vmem, size = 0x400, scoped, tag = 'input window, operand 7, single buffered']
    #allocation9 [shape = 's32[1]{0}', space=sflag, size = 0x4, scoped, tag = 'scoped memory for tpu_custom_call.1']
    #allocation10 [shape = 'u8[512]{0}', space=vmem, size = 0x400, scoped, tag = 'input window, operand 9, single buffered']
    #allocation11 [shape = 'u8[8192]{0}', space=vmem, size = 0x2000, scoped, tag = 'output window, operand 0']
    #allocation12 [shape = 'u8[16384]{0}', space=vmem, size = 0x4000, scoped, tag = 'output window, operand 1']
    #allocation13 [shape = 's32[2]{0}', space=sflag, size = 0x8, scoped, tag = 'scoped memory for tpu_custom_call.1']
    %23 = vsyncpa [#allocation3], 0
    %24 = vsyncpa [#allocation6], 0
    %25 = vsyncpa [#allocation9], 0
    %26 = vsyncpa [#allocation4], 0
    %s27 = scalar_lea.sflag [#allocation4], 1
    %28 = vsyncpa %s27, 0
    %29 = vsyncpa [#allocation13], 0
    %s30 = scalar_lea.sflag [#allocation13], 1
    %31 = vsyncpa %s30, 0
    loop: start=0, step=1, limit=4
    $region2: #{tpu_custom_call.1} parent=1 // loop_pre_header
      _
    $region3: #{tpu_custom_call.1} parent=1 // loop_header
      %s33 = sphi 0, %s37
      %p34 = scmp.ge.s32.totalorder %s33, 4
      %s43 = sphi 0, %s45
      %s46 = sphi 0, %s43
      %s47 = sphi 0, %s46
      %s63 = sphi 0, %s47
      %s67 = sphi 0, %s67
      %s69 = sphi 0, %s67
      %s70 = sphi 0, %s69
      %s84 = sphi 0, %s70
      %s88 = sphi 0, %s88
      %s90 = sphi 0, %s88
      %s91 = sphi 0, %s90
      %s105 = sphi 0, %s91
      %s109 = sphi 0, %s109
      %s111 = sphi 0, %s109
      %s112 = sphi 0, %s111
      %s126 = sphi 0, %s112
      %s130 = sphi 0, %s130
      %s132 = sphi 0, %s130
      %s133 = sphi 0, %s132
      %s147 = sphi 0, %s133
      %s151 = sphi 0, %s151
      %s153 = sphi 0, %s151
      %s154 = sphi 0, %s153
      %s168 = sphi 0, %s154
      %s172 = sphi 0, %s172
      %s174 = sphi 0, %s172
      %s175 = sphi 0, %s174
      %s189 = sphi 0, %s175
      %s193 = sphi 0, %s193
      %s195 = sphi 0, %s193
      %s196 = sphi 0, %s195
      %s210 = sphi 0, %s196
      %s214 = sphi 0, %s214
      %s216 = sphi 0, %s214
      %s217 = sphi 0, %s216
      %s231 = sphi 0, %s217
      %s235 = sphi 0, %s235
      %s237 = sphi 0, %s235
      %s238 = sphi 0, %s237
      %s252 = sphi 0, %s238
      %s256 = sphi 0, %s256
      %s258 = sphi 0, %s256
      %s259 = sphi 0, %s258
      %s273 = sphi 0, %s259
      %s277 = sphi 0, %s277
      %s279 = sphi 0, %s277
      %s280 = sphi 0, %s279
      %s294 = sphi 0, %s280
      %s298 = sphi 0, %s298
      %s300 = sphi 0, %s298
      %s301 = sphi 0, %s300
      %s315 = sphi 0, %s301
      %s319 = sphi 0, %s319
      %s321 = sphi 0, %s319
      %s322 = sphi 0, %s321
      %s336 = sphi 0, %s322
      %s340 = sphi 0, %s340
      %s342 = sphi 0, %s340
      %s343 = sphi 0, %s342
      %s357 = sphi 0, %s343
      %s361 = sphi 0, %s361
      %s363 = sphi 0, %s361
      %s364 = sphi 0, %s363
      %s378 = sphi 0, %s364
      %s384 = sphi 0, %s386
      %s387 = sphi 0, %s384
      %s388 = sphi 0, %s387
      %s404 = sphi 0, %s388
      %s410 = sphi 0, %s412
      %s413 = sphi 0, %s410
      %s414 = sphi 0, %s413
      %s430 = sphi 0, %s414
    $region4: #{tpu_custom_call.1} parent=1 // loop_header_branch
      %36 = sbr.rel (%p34) target = $region8
    $region5: #{tpu_custom_call.1} parent=1 // loop_body
      %s38 = ssub.s32 %s33, 1
      %s39 = ssub.s32 %s33, 2
      %s40 = sadd.s32 %s33, 1
      %s41 = ssub.s32 %s33, %s40
      %p42 = scmp.eq.s32.totalorder %s41, 0
      %s44 = sadd.s32 %s43, 1
      %s45 = scalar_select %p42, %s43, %s44
      %p48 = pneg %p42
      %p49 = scmp.eq.s32.totalorder %s33, 1
      %p50 = por %p48, %p49
      %p51 = scmp.ne.s32.totalorder %s43, %s46
      %p52 = scmp.eq.s32.totalorder %s33, 0
      %p53 = por %p51, %p52
      %p54 = scmp.ne.s32.totalorder %s43, %s46
      %p55 = scmp.eq.s32.totalorder %s38, 1
      %p56 = por %p54, %p55
      %p57 = scmp.ne.s32.totalorder %s46, %s47
      %p58 = scmp.eq.s32.totalorder %s38, 0
      %p59 = por %p57, %p58
      %p60 = scmp.ne.s32.totalorder %s46, %s47
      %p61 = scmp.eq.s32.totalorder %s39, 1
      %p62 = por %p60, %p61
      %p64 = scmp.ne.s32.totalorder %s47, %s63
      %p65 = scmp.eq.s32.totalorder %s39, 0
      %p66 = por %p64, %p65
      %s68 = sadd.s32 %s67, 1
      %p71 = scmp.eq.s32.totalorder %s33, 1
      %p72 = scmp.ne.s32.totalorder %s67, %s69
      %p73 = scmp.eq.s32.totalorder %s33, 0
      %p74 = por %p72, %p73
      %p75 = scmp.ne.s32.totalorder %s67, %s69
      %p76 = scmp.eq.s32.totalorder %s38, 1
      %p77 = por %p75, %p76
      %p78 = scmp.ne.s32.totalorder %s69, %s70
      %p79 = scmp.eq.s32.totalorder %s38, 0
      %p80 = por %p78, %p79
      %p81 = scmp.ne.s32.totalorder %s69, %s70
      %p82 = scmp.eq.s32.totalorder %s39, 1
      %p83 = por %p81, %p82
      %p85 = scmp.ne.s32.totalorder %s70, %s84
      %p86 = scmp.eq.s32.totalorder %s39, 0
      %p87 = por %p85, %p86
      %s89 = sadd.s32 %s88, 1
      %p92 = scmp.eq.s32.totalorder %s33, 1
      %p93 = scmp.ne.s32.totalorder %s88, %s90
      %p94 = scmp.eq.s32.totalorder %s33, 0
      %p95 = por %p93, %p94
      %p96 = scmp.ne.s32.totalorder %s88, %s90
      %p97 = scmp.eq.s32.totalorder %s38, 1
      %p98 = por %p96, %p97
      %p99 = scmp.ne.s32.totalorder %s90, %s91
      %p100 = scmp.eq.s32.totalorder %s38, 0
      %p101 = por %p99, %p100
      %p102 = scmp.ne.s32.totalorder %s90, %s91
      %p103 = scmp.eq.s32.totalorder %s39, 1
      %p104 = por %p102, %p103
      %p106 = scmp.ne.s32.totalorder %s91, %s105
      %p107 = scmp.eq.s32.totalorder %s39, 0
      %p108 = por %p106, %p107
      %s110 = sadd.s32 %s109, 1
      %p113 = scmp.eq.s32.totalorder %s33, 1
      %p114 = scmp.ne.s32.totalorder %s109, %s111
      %p115 = scmp.eq.s32.totalorder %s33, 0
      %p116 = por %p114, %p115
      %p117 = scmp.ne.s32.totalorder %s109, %s111
      %p118 = scmp.eq.s32.totalorder %s38, 1
      %p119 = por %p117, %p118
      %p120 = scmp.ne.s32.totalorder %s111, %s112
      %p121 = scmp.eq.s32.totalorder %s38, 0
      %p122 = por %p120, %p121
      %p123 = scmp.ne.s32.totalorder %s111, %s112
      %p124 = scmp.eq.s32.totalorder %s39, 1
      %p125 = por %p123, %p124
      %p127 = scmp.ne.s32.totalorder %s112, %s126
      %p128 = scmp.eq.s32.totalorder %s39, 0
      %p129 = por %p127, %p128
      %s131 = sadd.s32 %s130, 1
      %p134 = scmp.eq.s32.totalorder %s33, 1
      %p135 = scmp.ne.s32.totalorder %s130, %s132
      %p136 = scmp.eq.s32.totalorder %s33, 0
      %p137 = por %p135, %p136
      %p138 = scmp.ne.s32.totalorder %s130, %s132
      %p139 = scmp.eq.s32.totalorder %s38, 1
      %p140 = por %p138, %p139
      %p141 = scmp.ne.s32.totalorder %s132, %s133
      %p142 = scmp.eq.s32.totalorder %s38, 0
      %p143 = por %p141, %p142
      %p144 = scmp.ne.s32.totalorder %s132, %s133
      %p145 = scmp.eq.s32.totalorder %s39, 1
      %p146 = por %p144, %p145
      %p148 = scmp.ne.s32.totalorder %s133, %s147
      %p149 = scmp.eq.s32.totalorder %s39, 0
      %p150 = por %p148, %p149
      %s152 = sadd.s32 %s151, 1
      %p155 = scmp.eq.s32.totalorder %s33, 1
      %p156 = scmp.ne.s32.totalorder %s151, %s153
      %p157 = scmp.eq.s32.totalorder %s33, 0
      %p158 = por %p156, %p157
      %p159 = scmp.ne.s32.totalorder %s151, %s153
      %p160 = scmp.eq.s32.totalorder %s38, 1
      %p161 = por %p159, %p160
      %p162 = scmp.ne.s32.totalorder %s153, %s154
      %p163 = scmp.eq.s32.totalorder %s38, 0
      %p164 = por %p162, %p163
      %p165 = scmp.ne.s32.totalorder %s153, %s154
      %p166 = scmp.eq.s32.totalorder %s39, 1
      %p167 = por %p165, %p166
      %p169 = scmp.ne.s32.totalorder %s154, %s168
      %p170 = scmp.eq.s32.totalorder %s39, 0
      %p171 = por %p169, %p170
      %s173 = sadd.s32 %s172, 1
      %p176 = scmp.eq.s32.totalorder %s33, 1
      %p177 = scmp.ne.s32.totalorder %s172, %s174
      %p178 = scmp.eq.s32.totalorder %s33, 0
      %p179 = por %p177, %p178
      %p180 = scmp.ne.s32.totalorder %s172, %s174
      %p181 = scmp.eq.s32.totalorder %s38, 1
      %p182 = por %p180, %p181
      %p183 = scmp.ne.s32.totalorder %s174, %s175
      %p184 = scmp.eq.s32.totalorder %s38, 0
      %p185 = por %p183, %p184
      %p186 = scmp.ne.s32.totalorder %s174, %s175
      %p187 = scmp.eq.s32.totalorder %s39, 1
      %p188 = por %p186, %p187
      %p190 = scmp.ne.s32.totalorder %s175, %s189
      %p191 = scmp.eq.s32.totalorder %s39, 0
      %p192 = por %p190, %p191
      %s194 = sadd.s32 %s193, 1
      %p197 = scmp.eq.s32.totalorder %s33, 1
      %p198 = scmp.ne.s32.totalorder %s193, %s195
      %p199 = scmp.eq.s32.totalorder %s33, 0
      %p200 = por %p198, %p199
      %p201 = scmp.ne.s32.totalorder %s193, %s195
      %p202 = scmp.eq.s32.totalorder %s38, 1
      %p203 = por %p201, %p202
      %p204 = scmp.ne.s32.totalorder %s195, %s196
      %p205 = scmp.eq.s32.totalorder %s38, 0
      %p206 = por %p204, %p205
      %p207 = scmp.ne.s32.totalorder %s195, %s196
      %p208 = scmp.eq.s32.totalorder %s39, 1
      %p209 = por %p207, %p208
      %p211 = scmp.ne.s32.totalorder %s196, %s210
      %p212 = scmp.eq.s32.totalorder %s39, 0
      %p213 = por %p211, %p212
      %s215 = sadd.s32 %s214, 1
      %p218 = scmp.eq.s32.totalorder %s33, 1
      %p219 = scmp.ne.s32.totalorder %s214, %s216
      %p220 = scmp.eq.s32.totalorder %s33, 0
      %p221 = por %p219, %p220
      %p222 = scmp.ne.s32.totalorder %s214, %s216
      %p223 = scmp.eq.s32.totalorder %s38, 1
      %p224 = por %p222, %p223
      %p225 = scmp.ne.s32.totalorder %s216, %s217
      %p226 = scmp.eq.s32.totalorder %s38, 0
      %p227 = por %p225, %p226
      %p228 = scmp.ne.s32.totalorder %s216, %s217
      %p229 = scmp.eq.s32.totalorder %s39, 1
      %p230 = por %p228, %p229
      %p232 = scmp.ne.s32.totalorder %s217, %s231
      %p233 = scmp.eq.s32.totalorder %s39, 0
      %p234 = por %p232, %p233
      %s236 = sadd.s32 %s235, 1
      %p239 = scmp.eq.s32.totalorder %s33, 1
      %p240 = scmp.ne.s32.totalorder %s235, %s237
      %p241 = scmp.eq.s32.totalorder %s33, 0
      %p242 = por %p240, %p241
      %p243 = scmp.ne.s32.totalorder %s235, %s237
      %p244 = scmp.eq.s32.totalorder %s38, 1
      %p245 = por %p243, %p244
      %p246 = scmp.ne.s32.totalorder %s237, %s238
      %p247 = scmp.eq.s32.totalorder %s38, 0
      %p248 = por %p246, %p247
      %p249 = scmp.ne.s32.totalorder %s237, %s238
      %p250 = scmp.eq.s32.totalorder %s39, 1
      %p251 = por %p249, %p250
      %p253 = scmp.ne.s32.totalorder %s238, %s252
      %p254 = scmp.eq.s32.totalorder %s39, 0
      %p255 = por %p253, %p254
      %s257 = sadd.s32 %s256, 1
      %p260 = scmp.eq.s32.totalorder %s33, 1
      %p261 = scmp.ne.s32.totalorder %s256, %s258
      %p262 = scmp.eq.s32.totalorder %s33, 0
      %p263 = por %p261, %p262
      %p264 = scmp.ne.s32.totalorder %s256, %s258
      %p265 = scmp.eq.s32.totalorder %s38, 1
      %p266 = por %p264, %p265
      %p267 = scmp.ne.s32.totalorder %s258, %s259
      %p268 = scmp.eq.s32.totalorder %s38, 0
      %p269 = por %p267, %p268
      %p270 = scmp.ne.s32.totalorder %s258, %s259
      %p271 = scmp.eq.s32.totalorder %s39, 1
      %p272 = por %p270, %p271
      %p274 = scmp.ne.s32.totalorder %s259, %s273
      %p275 = scmp.eq.s32.totalorder %s39, 0
      %p276 = por %p274, %p275
      %s278 = sadd.s32 %s277, 1
      %p281 = scmp.eq.s32.totalorder %s33, 1
      %p282 = scmp.ne.s32.totalorder %s277, %s279
      %p283 = scmp.eq.s32.totalorder %s33, 0
      %p284 = por %p282, %p283
      %p285 = scmp.ne.s32.totalorder %s277, %s279
      %p286 = scmp.eq.s32.totalorder %s38, 1
      %p287 = por %p285, %p286
      %p288 = scmp.ne.s32.totalorder %s279, %s280
      %p289 = scmp.eq.s32.totalorder %s38, 0
      %p290 = por %p288, %p289
      %p291 = scmp.ne.s32.totalorder %s279, %s280
      %p292 = scmp.eq.s32.totalorder %s39, 1
      %p293 = por %p291, %p292
      %p295 = scmp.ne.s32.totalorder %s280, %s294
      %p296 = scmp.eq.s32.totalorder %s39, 0
      %p297 = por %p295, %p296
      %s299 = sadd.s32 %s298, 1
      %p302 = scmp.eq.s32.totalorder %s33, 1
      %p303 = scmp.ne.s32.totalorder %s298, %s300
      %p304 = scmp.eq.s32.totalorder %s33, 0
      %p305 = por %p303, %p304
      %p306 = scmp.ne.s32.totalorder %s298, %s300
      %p307 = scmp.eq.s32.totalorder %s38, 1
      %p308 = por %p306, %p307
      %p309 = scmp.ne.s32.totalorder %s300, %s301
      %p310 = scmp.eq.s32.totalorder %s38, 0
      %p311 = por %p309, %p310
      %p312 = scmp.ne.s32.totalorder %s300, %s301
      %p313 = scmp.eq.s32.totalorder %s39, 1
      %p314 = por %p312, %p313
      %p316 = scmp.ne.s32.totalorder %s301, %s315
      %p317 = scmp.eq.s32.totalorder %s39, 0
      %p318 = por %p316, %p317
      %s320 = sadd.s32 %s319, 1
      %p323 = scmp.eq.s32.totalorder %s33, 1
      %p324 = scmp.ne.s32.totalorder %s319, %s321
      %p325 = scmp.eq.s32.totalorder %s33, 0
      %p326 = por %p324, %p325
      %p327 = scmp.ne.s32.totalorder %s319, %s321
      %p328 = scmp.eq.s32.totalorder %s38, 1
      %p329 = por %p327, %p328
      %p330 = scmp.ne.s32.totalorder %s321, %s322
      %p331 = scmp.eq.s32.totalorder %s38, 0
      %p332 = por %p330, %p331
      %p333 = scmp.ne.s32.totalorder %s321, %s322
      %p334 = scmp.eq.s32.totalorder %s39, 1
      %p335 = por %p333, %p334
      %p337 = scmp.ne.s32.totalorder %s322, %s336
      %p338 = scmp.eq.s32.totalorder %s39, 0
      %p339 = por %p337, %p338
      %s341 = sadd.s32 %s340, 1
      %p344 = scmp.eq.s32.totalorder %s33, 1
      %p345 = scmp.ne.s32.totalorder %s340, %s342
      %p346 = scmp.eq.s32.totalorder %s33, 0
      %p347 = por %p345, %p346
      %p348 = scmp.ne.s32.totalorder %s340, %s342
      %p349 = scmp.eq.s32.totalorder %s38, 1
      %p350 = por %p348, %p349
      %p351 = scmp.ne.s32.totalorder %s342, %s343
      %p352 = scmp.eq.s32.totalorder %s38, 0
      %p353 = por %p351, %p352
      %p354 = scmp.ne.s32.totalorder %s342, %s343
      %p355 = scmp.eq.s32.totalorder %s39, 1
      %p356 = por %p354, %p355
      %p358 = scmp.ne.s32.totalorder %s343, %s357
      %p359 = scmp.eq.s32.totalorder %s39, 0
      %p360 = por %p358, %p359
      %s362 = sadd.s32 %s361, 1
      %p365 = scmp.eq.s32.totalorder %s33, 1
      %p366 = scmp.ne.s32.totalorder %s361, %s363
      %p367 = scmp.eq.s32.totalorder %s33, 0
      %p368 = por %p366, %p367
      %p369 = scmp.ne.s32.totalorder %s361, %s363
      %p370 = scmp.eq.s32.totalorder %s38, 1
      %p371 = por %p369, %p370
      %p372 = scmp.ne.s32.totalorder %s363, %s364
      %p373 = scmp.eq.s32.totalorder %s38, 0
      %p374 = por %p372, %p373
      %p375 = scmp.ne.s32.totalorder %s363, %s364
      %p376 = scmp.eq.s32.totalorder %s39, 1
      %p377 = por %p375, %p376
      %p379 = scmp.ne.s32.totalorder %s364, %s378
      %p380 = scmp.eq.s32.totalorder %s39, 0
      %p381 = por %p379, %p380
      %s382 = ssub.s32 %s33, %s40
      %p383 = scmp.eq.s32.totalorder %s382, 0
      %s385 = sadd.s32 %s384, 1
      %s386 = scalar_select %p383, %s384, %s385
      %p389 = pneg %p383
      %p390 = scmp.eq.s32.totalorder %s33, 1
      %p391 = por %p389, %p390
      %p392 = scmp.ne.s32.totalorder %s384, %s387
      %p393 = scmp.eq.s32.totalorder %s33, 0
      %p394 = por %p392, %p393
      %p395 = scmp.ne.s32.totalorder %s384, %s387
      %p396 = scmp.eq.s32.totalorder %s38, 1
      %p397 = por %p395, %p396
      %p398 = scmp.ne.s32.totalorder %s387, %s388
      %p399 = scmp.eq.s32.totalorder %s38, 0
      %p400 = por %p398, %p399
      %p401 = scmp.ne.s32.totalorder %s387, %s388
      %p402 = scmp.eq.s32.totalorder %s39, 1
      %p403 = por %p401, %p402
      %p405 = scmp.ne.s32.totalorder %s388, %s404
      %p406 = scmp.eq.s32.totalorder %s39, 0
      %p407 = por %p405, %p406
      %s408 = ssub.s32 %s33, %s40
      %p409 = scmp.eq.s32.totalorder %s408, 0
      %s411 = sadd.s32 %s410, 1
      %s412 = scalar_select %p409, %s410, %s411
      %p415 = pneg %p409
      %p416 = scmp.eq.s32.totalorder %s33, 1
      %p417 = por %p415, %p416
      %p418 = scmp.ne.s32.totalorder %s410, %s413
      %p419 = scmp.eq.s32.totalorder %s33, 0
      %p420 = por %p418, %p419
      %p421 = scmp.ne.s32.totalorder %s410, %s413
      %p422 = scmp.eq.s32.totalorder %s38, 1
      %p423 = por %p421, %p422
      %p424 = scmp.ne.s32.totalorder %s413, %s414
      %p425 = scmp.eq.s32.totalorder %s38, 0
      %p426 = por %p424, %p425
      %p427 = scmp.ne.s32.totalorder %s413, %s414
      %p428 = scmp.eq.s32.totalorder %s39, 1
      %p429 = por %p427, %p428
      %p431 = scmp.ne.s32.totalorder %s414, %s430
      %p432 = scmp.eq.s32.totalorder %s39, 0
      %p433 = por %p431, %p432
      %p434 = scmp.le.s32.totalorder 1, %s33
      %p435 = scmp.lt.s32.totalorder %s33, 3
      %p436 = pnand %p434, %p435
      %p437 = pneg %p436
      // Predicated region
      $region9: #{tpu_custom_call.1} parent=5 // pred_check
        _
      $region10: #{tpu_custom_call.1} parent=5 // pred_check_branch
        %439 = sbr.rel (%p436) target = $region12
      $region11: #{tpu_custom_call.1} parent=5 // pred_region
        %s440 = ssub.s32 %s33, 1
        // Predicated region
        $region13: #{tpu_custom_call.1} parent=11 // pred_check
          %p441 = pneg %p80
        $region14: #{tpu_custom_call.1} parent=11 // pred_check_branch
          %443 = sbr.rel (%p441) target = $region16
        $region15: #{tpu_custom_call.1} parent=11 // pred_region
          %s445 = ssub.s32 128, 128
          %446 = vsyncadd [#allocation3], %s445
          %s448 = sshll.u32 [#allocation2], 4
          %s449 = int_to_ptr.vmem [resolvable:$true] %s448
          %451 = dma.hbm_to_vmem [thread:$0]  %s1, 128, %s449, [#allocation3]
        $region16: #{tpu_custom_call.1} parent=11 // pred_fallthru
          _
        // Predicated region
        $region17: #{tpu_custom_call.1} parent=11 // pred_check
          %p452 = pneg %p101
        $region18: #{tpu_custom_call.1} parent=11 // pred_check_branch
          %454 = sbr.rel (%p452) target = $region20
        $region19: #{tpu_custom_call.1} parent=11 // pred_region
          _
        $region20: #{tpu_custom_call.1} parent=11 // pred_fallthru
          _
        // Predicated region
        $region21: #{tpu_custom_call.1} parent=11 // pred_check
          %p455 = pneg %p122
        $region22: #{tpu_custom_call.1} parent=11 // pred_check_branch
          %457 = sbr.rel (%p455) target = $region24
        $region23: #{tpu_custom_call.1} parent=11 // pred_region
          %s459 = ssub.s32 16, 16
          %460 = vsyncadd [#allocation6], %s459
          %s462 = sshll.u32 [#allocation5], 4
          %s463 = int_to_ptr.vmem [resolvable:$true] %s462
          %465 = dma.hbm_to_vmem [thread:$0]  %s3, 16, %s463, [#allocation6]
        $region24: #{tpu_custom_call.1} parent=11 // pred_fallthru
          _
        // Predicated region
        $region25: #{tpu_custom_call.1} parent=11 // pred_check
          %p466 = pneg %p143
        $region26: #{tpu_custom_call.1} parent=11 // pred_check_branch
          %468 = sbr.rel (%p466) target = $region28
        $region27: #{tpu_custom_call.1} parent=11 // pred_region
          _
        $region28: #{tpu_custom_call.1} parent=11 // pred_fallthru
          _
        // Predicated region
        $region29: #{tpu_custom_call.1} parent=11 // pred_check
          %p469 = pneg %p164
        $region30: #{tpu_custom_call.1} parent=11 // pred_check_branch
          %471 = sbr.rel (%p469) target = $region32
        $region31: #{tpu_custom_call.1} parent=11 // pred_region
          %s473 = ssub.s32 16, 16
          %474 = vsyncadd [#allocation6], %s473
          %s476 = sshll.u32 [#allocation7], 4
          %s477 = int_to_ptr.vmem [resolvable:$true] %s476
          %479 = dma.hbm_to_vmem [thread:$0]  %s5, 16, %s477, [#allocation6]
        $region32: #{tpu_custom_call.1} parent=11 // pred_fallthru
          _
        // Predicated region
        $region33: #{tpu_custom_call.1} parent=11 // pred_check
          %p480 = pneg %p185
        $region34: #{tpu_custom_call.1} parent=11 // pred_check_branch
          %482 = sbr.rel (%p480) target = $region36
        $region35: #{tpu_custom_call.1} parent=11 // pred_region
          _
        $region36: #{tpu_custom_call.1} parent=11 // pred_fallthru
          _
        // Predicated region
        $region37: #{tpu_custom_call.1} parent=11 // pred_check
          %p483 = pneg %p206
        $region38: #{tpu_custom_call.1} parent=11 // pred_check_branch
          %485 = sbr.rel (%p483) target = $region40
        $region39: #{tpu_custom_call.1} parent=11 // pred_region
          %s487 = ssub.s32 16, 16
          %488 = vsyncadd [#allocation9], %s487
          %s490 = sshll.u32 [#allocation8], 4
          %s491 = int_to_ptr.vmem [resolvable:$true] %s490
          %493 = dma.hbm_to_vmem [thread:$0]  %s7, 16, %s491, [#allocation9]
        $region40: #{tpu_custom_call.1} parent=11 // pred_fallthru
          _
        // Predicated region
        $region41: #{tpu_custom_call.1} parent=11 // pred_check
          %p494 = pneg %p227
        $region42: #{tpu_custom_call.1} parent=11 // pred_check_branch
          %496 = sbr.rel (%p494) target = $region44
        $region43: #{tpu_custom_call.1} parent=11 // pred_region
          _
        $region44: #{tpu_custom_call.1} parent=11 // pred_fallthru
          _
        // Predicated region
        $region45: #{tpu_custom_call.1} parent=11 // pred_check
          %p497 = pneg %p248
        $region46: #{tpu_custom_call.1} parent=11 // pred_check_branch
          %499 = sbr.rel (%p497) target = $region48
        $region47: #{tpu_custom_call.1} parent=11 // pred_region
          %s501 = ssub.s32 16, 16
          %502 = vsyncadd [#allocation9], %s501
          %s504 = sshll.u32 [#allocation10], 4
          %s505 = int_to_ptr.vmem [resolvable:$true] %s504
          %507 = dma.hbm_to_vmem [thread:$0]  %s9, 16, %s505, [#allocation9]
        $region48: #{tpu_custom_call.1} parent=11 // pred_fallthru
          _
        // Predicated region
        $region49: #{tpu_custom_call.1} parent=11 // pred_check
          %p508 = pneg %p269
        $region50: #{tpu_custom_call.1} parent=11 // pred_check_branch
          %510 = sbr.rel (%p508) target = $region52
        $region51: #{tpu_custom_call.1} parent=11 // pred_region
          _
        $region52: #{tpu_custom_call.1} parent=11 // pred_fallthru
          _
        // Predicated region
        $region53: #{tpu_custom_call.1} parent=11 // pred_check
          %p511 = pneg %p290
        $region54: #{tpu_custom_call.1} parent=11 // pred_check_branch
          %513 = sbr.rel (%p511) target = $region56
        $region55: #{tpu_custom_call.1} parent=11 // pred_region
          _
        $region56: #{tpu_custom_call.1} parent=11 // pred_fallthru
          _
        // Predicated region
        $region57: #{tpu_custom_call.1} parent=11 // pred_check
          %p514 = pneg %p311
        $region58: #{tpu_custom_call.1} parent=11 // pred_check_branch
          %516 = sbr.rel (%p514) target = $region60
        $region59: #{tpu_custom_call.1} parent=11 // pred_region
          _
        $region60: #{tpu_custom_call.1} parent=11 // pred_fallthru
          _
        // Predicated region
        $region61: #{tpu_custom_call.1} parent=11 // pred_check
          %p517 = pneg %p332
        $region62: #{tpu_custom_call.1} parent=11 // pred_check_branch
          %519 = sbr.rel (%p517) target = $region64
        $region63: #{tpu_custom_call.1} parent=11 // pred_region
          _
        $region64: #{tpu_custom_call.1} parent=11 // pred_fallthru
          _
        // Predicated region
        $region65: #{tpu_custom_call.1} parent=11 // pred_check
          %p520 = pneg %p353
        $region66: #{tpu_custom_call.1} parent=11 // pred_check_branch
          %522 = sbr.rel (%p520) target = $region68
        $region67: #{tpu_custom_call.1} parent=11 // pred_region
          _
        $region68: #{tpu_custom_call.1} parent=11 // pred_fallthru
          _
        // Predicated region
        $region69: #{tpu_custom_call.1} parent=11 // pred_check
          %p523 = pneg %p374
        $region70: #{tpu_custom_call.1} parent=11 // pred_check_branch
          %525 = sbr.rel (%p523) target = $region72
        $region71: #{tpu_custom_call.1} parent=11 // pred_region
          _
        $region72: #{tpu_custom_call.1} parent=11 // pred_fallthru
          _
      $region12: #{tpu_custom_call.1} parent=5 // pred_fallthru
        _
      %p526 = scmp.lt.s32.totalorder %s33, 2
      // Predicated region
      $region73: #{tpu_custom_call.1} parent=5 // pred_check
        %p527 = pneg %p526
      $region74: #{tpu_custom_call.1} parent=5 // pred_check_branch
        %529 = sbr.rel (%p527) target = $region76
      $region75: #{tpu_custom_call.1} parent=5 // pred_region
        // Predicated region
        $region77: #{tpu_custom_call.1} parent=75 // pred_check
          %p530 = pneg %p53
        $region78: #{tpu_custom_call.1} parent=75 // pred_check_branch
          %532 = sbr.rel (%p530) target = $region80
        $region79: #{tpu_custom_call.1} parent=75 // pred_region
          %p533 = scmp.lt.s32.totalorder %s33, 1
          %s534 = scalar_select %p533, %s33, 1
          %s535 = smul.addr %s534, 8
          %s536 = scalar_lea.vmem %s0, %s535
        $region80: #{tpu_custom_call.1} parent=75 // pred_fallthru
          _
      $region76: #{tpu_custom_call.1} parent=5 // pred_fallthru
        _
      %p537 = scmp.le.s32.totalorder 1, %s33
      %p538 = scmp.lt.s32.totalorder %s33, 3
      %p539 = pnand %p537, %p538
      %p540 = pneg %p539
      // Predicated region
      $region81: #{tpu_custom_call.1} parent=5 // pred_check
        _
      $region82: #{tpu_custom_call.1} parent=5 // pred_check_branch
        %542 = sbr.rel (%p539) target = $region84
      $region83: #{tpu_custom_call.1} parent=5 // pred_region
        %s543 = ssub.s32 %s33, 1
        // Predicated region
        $region85: #{tpu_custom_call.1} parent=83 // pred_check
          %p544 = pneg %p80
        $region86: #{tpu_custom_call.1} parent=83 // pred_check_branch
          %546 = sbr.rel (%p544) target = $region88
        $region87: #{tpu_custom_call.1} parent=83 // pred_region
          %547 = dma.done [#allocation3], 128
        $region88: #{tpu_custom_call.1} parent=83 // pred_fallthru
          _
        // Predicated region
        $region89: #{tpu_custom_call.1} parent=83 // pred_check
          %p548 = pneg %p122
        $region90: #{tpu_custom_call.1} parent=83 // pred_check_branch
          %550 = sbr.rel (%p548) target = $region92
        $region91: #{tpu_custom_call.1} parent=83 // pred_region
          %551 = dma.done [#allocation6], 16
        $region92: #{tpu_custom_call.1} parent=83 // pred_fallthru
          _
        // Predicated region
        $region93: #{tpu_custom_call.1} parent=83 // pred_check
          %p552 = pneg %p164
        $region94: #{tpu_custom_call.1} parent=83 // pred_check_branch
          %554 = sbr.rel (%p552) target = $region96
        $region95: #{tpu_custom_call.1} parent=83 // pred_region
          %555 = dma.done [#allocation6], 16
        $region96: #{tpu_custom_call.1} parent=83 // pred_fallthru
          _
        // Predicated region
        $region97: #{tpu_custom_call.1} parent=83 // pred_check
          %p556 = pneg %p206
        $region98: #{tpu_custom_call.1} parent=83 // pred_check_branch
          %558 = sbr.rel (%p556) target = $region100
        $region99: #{tpu_custom_call.1} parent=83 // pred_region
          %559 = dma.done [#allocation9], 16
        $region100: #{tpu_custom_call.1} parent=83 // pred_fallthru
          _
        // Predicated region
        $region101: #{tpu_custom_call.1} parent=83 // pred_check
          %p560 = pneg %p248
        $region102: #{tpu_custom_call.1} parent=83 // pred_check_branch
          %562 = sbr.rel (%p560) target = $region104
        $region103: #{tpu_custom_call.1} parent=83 // pred_region
          %563 = dma.done [#allocation9], 16
        $region104: #{tpu_custom_call.1} parent=83 // pred_fallthru
          _
        %p564 = scmp.lt.s32.totalorder %s38, 1
        %s565 = scalar_select %p564, %s38, 1
        %s566 = smul.addr %s565, 8
        %s567 = scalar_lea.vmem %s0, %s566
        %p568 = pneg %p59
        %p569 = pneg %p56
        %p570 = pneg %p80
        %p571 = pneg %p77
        %p572 = pneg %p101
        %p573 = pneg %p98
        %p574 = pneg %p122
        %p575 = pneg %p119
        %p576 = pneg %p143
        %p577 = pneg %p140
        %p578 = pneg %p164
        %p579 = pneg %p161
        %p580 = pneg %p185
        %p581 = pneg %p182
        %p582 = pneg %p206
        %p583 = pneg %p203
        %p584 = pneg %p227
        %p585 = pneg %p224
        %p586 = pneg %p248
        %p587 = pneg %p245
        %p588 = pneg %p269
        %p589 = pneg %p266
        %p590 = pneg %p290
        %p591 = pneg %p287
        %p592 = pneg %p311
        %p593 = pneg %p308
        %p594 = pneg %p332
        %p595 = pneg %p329
        %p596 = pneg %p353
        %p597 = pneg %p350
        %p598 = pneg %p374
        %p599 = pneg %p371
        %p600 = pneg %p400
        %p601 = pneg %p397
        %s602 = sand.u32 %s387, 1
        %s603 = scalar_lea.sflag [#allocation4], %s602
        %s604 = sand.u32 %s387, 1
        %s605 = smul.addr %s604, 8
        %s606 = scalar_lea.vmem [#allocation11], %s605
        %p607 = pneg %p426
        %p608 = pneg %p423
        %s609 = sand.u32 %s413, 1
        %s610 = scalar_lea.sflag [#allocation13], %s609
        %s611 = sand.u32 %s413, 1
        %s612 = smul.addr %s611, 16
        %s613 = scalar_lea.vmem [#allocation12], %s612
        %p614 = scmp.lt.s32.totalorder %s38, 1
        %s615 = scalar_select %p614, %s38, 1
        %s616 = smul.addr %s615, 8
        %s617 = scalar_lea.vmem %s0, %s616
        %v619 = vld [vmem:[%s617] sm:$0xff]
        %v620 = vld [vmem:[#allocation2] sm:$0xff]
        %v621 = vadd.f32 %v619, %v620
        %v622 = vld [vmem:[%s10] sm:$0x1]
        %v623 = vld [vmem:[%s11] sm:$0x1]
        %vm624 = vcmask 261120
        %v625 = vsel %vm624, %v621, 0.0
        %626 = vadd.xlane.f32.xlu0 %v625
        %v627 = vpop.xlane.xlu0 %626
        %v628 = vrcp.pop 32.0
        %v629 = vmul.f32 %v627, %v628
        %v630 = vsub.f32 %v621, %v629
        %v631 = vmul.f32 %v630, %v630
        %v632 = vsel %vm624, %v631, 0.0
        %633 = vadd.xlane.f32.xlu0 %v632
        %v634 = vpop.xlane.xlu0 %633
        %v635 = vmul.f32 %v634, %v628
        %v636 = vadd.f32 %v635, 1e-05
        %v637 = vrsqrt.pop %v636
        %v638 = vmul.f32 %v630, %v637
        %v640 = vlaneseq
        %v641 = vshrl.u32 %v640, 7
        %v642 = vsub.s32 0, %v641
        %v643 = vrot.slane %v622, %v642
        %v645 = vmul.f32 %v638, %v643
        %v647 = vlaneseq
        %v648 = vshrl.u32 %v647, 7
        %v649 = vsub.s32 0, %v648
        %v650 = vrot.slane %v623, %v649
        %v652 = vadd.f32 %v645, %v650
        %v653 = vpack.c.bf16 %v652, %v652
        %v654 = vld [vmem:[%s2] sm:$0xf]
        %v655 = vld [vmem:[%s2 + $0x4] sm:$0xf]
        %v656 = vld [vmem:[%s2 + $0x8] sm:$0xf]
        %v657 = vld [vmem:[%s2 + $0xc] sm:$0xf]
        %v658 = vld [vmem:[#allocation5] sm:$0x1]
        %v660 = vlaneseq
        %v661 = vshrl.u32 %v660, 7
        %v662 = vsub.s32 0, %v661
        %v663 = vrot.slane %v658, %v662
        %v669 = vunpack.c.l.b16 %v654
        %v670 = vunpack.c.l.b16 %v655
        %v671 = vunpack.c.l.b16 %v656
        %v672 = vunpack.c.l.b16 %v657
        %v673 = vpack.c.b16 %v670, %v669
        %v674 = vpack.c.b16 %v672, %v671
        %v678 = vsel %vm624, %v653, 0
        %680 = vmatprep.subr.bf16.mxu0 0
        %681 = vmatpush1.bf16.msra.mxu0 0
        %682 = vmatprep.subr.bf16.mxu0 0
        %683 = vmatpush1.bf16.msra.mxu0 0
        %684 = vmatprep.subr.bf16.mxu0 0
        %685 = vmatpush1.bf16.msra.mxu0 0
        %686 = vmatprep.subr.bf16.mxu0 0
        %687 = vmatpush1.bf16.msra.mxu0 0
        %688 = vmatprep.subr.bf16.mxu0 0
        %689 = vmatpush1.bf16.msra.mxu0 0
        %690 = vmatprep.subr.bf16.mxu0 0
        %691 = vmatpush1.bf16.msra.mxu0 0
        %692 = vmatprep.subr.bf16.mxu0 0
        %693 = vmatpush1.bf16.msra.mxu0 %v674
        %694 = vmatprep.subr.bf16.mxu0 0
        %695 = vmatpush1.bf16.msra.mxu0 %v673
        %696 = vmatprep.subr.bf16.mxu0 0
        %697 = vmatpush2.bf16.msra.mxu0 0
        %698 = vmatprep.subr.bf16.mxu0 0
        %699 = vmatpush2.bf16.msra.mxu0 0
        %700 = vmatprep.subr.bf16.mxu0 0
        %701 = vmatpush2.bf16.msra.mxu0 0
        %702 = vmatprep.subr.bf16.mxu0 0
        %703 = vmatpush2.bf16.msra.mxu0 0
        %704 = vmatprep.subr.bf16.mxu0 0
        %705 = vmatpush2.bf16.msra.mxu0 0
        %706 = vmatprep.subr.bf16.mxu0 0
        %707 = vmatpush2.bf16.msra.mxu0 0
        %708 = vmatprep.subr.bf16.mxu0 0
        %709 = vmatpush2.bf16.msra.mxu0 0
        %710 = vmatprep.subr.bf16.mxu0 0
        %711 = vmatpush2.bf16.msra.mxu0 0
        %712 = vmatprep.mubr.bf16.mxu0 0
        %713 = vmatmul.mubr.bf16.gmra.mxu0 %v678
        %v714 = vpop.f32.mrf.mxu0
        %v715 = vadd.f32 %v663, %v714
        %v716 = vpop.f32.mrf.mxu0
        %v717 = vpop.f32.mrf.mxu0
        %v718 = vpop.f32.mrf.mxu0
        %719 = vdwg.mxu0
        %v720 = vpack.c.bf16 %v715, %v715
        %v721 = vld [vmem:[%s4] sm:$0xf]
        %v722 = vld [vmem:[%s4 + $0x4] sm:$0xf]
        %v723 = vld [vmem:[%s4 + $0x8] sm:$0xf]
        %v724 = vld [vmem:[%s4 + $0xc] sm:$0xf]
        %v725 = vld [vmem:[#allocation7] sm:$0x1]
        %v727 = vlaneseq
        %v728 = vshrl.u32 %v727, 7
        %v729 = vsub.s32 0, %v728
        %v730 = vrot.slane %v725, %v729
        %v736 = vunpack.c.l.b16 %v721
        %v737 = vunpack.c.l.b16 %v722
        %v738 = vunpack.c.l.b16 %v723
        %v739 = vunpack.c.l.b16 %v724
        %v740 = vpack.c.b16 %v737, %v736
        %v741 = vpack.c.b16 %v739, %v738
        %744 = vmatprep.subr.bf16.mxu0 0
        %745 = vmatpush1.bf16.msra.mxu0 0
        %746 = vmatprep.subr.bf16.mxu0 0
        %747 = vmatpush1.bf16.msra.mxu0 0
        %748 = vmatprep.subr.bf16.mxu0 0
        %749 = vmatpush1.bf16.msra.mxu0 0
        %750 = vmatprep.subr.bf16.mxu0 0
        %751 = vmatpush1.bf16.msra.mxu0 0
        %752 = vmatprep.subr.bf16.mxu0 0
        %753 = vmatpush1.bf16.msra.mxu0 0
        %754 = vmatprep.subr.bf16.mxu0 0
        %755 = vmatpush1.bf16.msra.mxu0 0
        %756 = vmatprep.subr.bf16.mxu0 0
        %757 = vmatpush1.bf16.msra.mxu0 %v741
        %758 = vmatprep.subr.bf16.mxu0 0
        %759 = vmatpush1.bf16.msra.mxu0 %v740
        %760 = vmatprep.subr.bf16.mxu0 0
        %761 = vmatpush2.bf16.msra.mxu0 0
        %762 = vmatprep.subr.bf16.mxu0 0
        %763 = vmatpush2.bf16.msra.mxu0 0
        %764 = vmatprep.subr.bf16.mxu0 0
        %765 = vmatpush2.bf16.msra.mxu0 0
        %766 = vmatprep.subr.bf16.mxu0 0
        %767 = vmatpush2.bf16.msra.mxu0 0
        %768 = vmatprep.subr.bf16.mxu0 0
        %769 = vmatpush2.bf16.msra.mxu0 0
        %770 = vmatprep.subr.bf16.mxu0 0
        %771 = vmatpush2.bf16.msra.mxu0 0
        %772 = vmatprep.subr.bf16.mxu0 0
        %773 = vmatpush2.bf16.msra.mxu0 0
        %774 = vmatprep.subr.bf16.mxu0 0
        %775 = vmatpush2.bf16.msra.mxu0 0
        %776 = vmatprep.mubr.bf16.mxu0 0
        %777 = vmatmul.mubr.bf16.gmra.mxu0 %v678
        %v778 = vpop.f32.mrf.mxu0
        %v779 = vadd.f32 %v730, %v778
        %v780 = vpop.f32.mrf.mxu0
        %v781 = vpop.f32.mrf.mxu0
        %v782 = vpop.f32.mrf.mxu0
        %783 = vdwg.mxu0
        %v784 = vpack.c.bf16 %v779, %v779
        %v785 = vld [vmem:[%s6] sm:$0xf]
        %v786 = vld [vmem:[%s6 + $0x4] sm:$0xf]
        %v787 = vld [vmem:[%s6 + $0x8] sm:$0xf]
        %v788 = vld [vmem:[%s6 + $0xc] sm:$0xf]
        %v789 = vld [vmem:[#allocation8] sm:$0x1]
        %v791 = vlaneseq
        %v792 = vshrl.u32 %v791, 7
        %v793 = vsub.s32 0, %v792
        %v794 = vrot.slane %v789, %v793
        %v800 = vunpack.c.l.b16 %v785
        %v801 = vunpack.c.l.b16 %v786
        %v802 = vunpack.c.l.b16 %v787
        %v803 = vunpack.c.l.b16 %v788
        %v804 = vpack.c.b16 %v801, %v800
        %v805 = vpack.c.b16 %v803, %v802
        %808 = vmatprep.subr.bf16.mxu0 0
        %809 = vmatpush1.bf16.msra.mxu0 0
        %810 = vmatprep.subr.bf16.mxu0 0
        %811 = vmatpush1.bf16.msra.mxu0 0
        %812 = vmatprep.subr.bf16.mxu0 0
        %813 = vmatpush1.bf16.msra.mxu0 0
        %814 = vmatprep.subr.bf16.mxu0 0
        %815 = vmatpush1.bf16.msra.mxu0 0
        %816 = vmatprep.subr.bf16.mxu0 0
        %817 = vmatpush1.bf16.msra.mxu0 0
        %818 = vmatprep.subr.bf16.mxu0 0
        %819 = vmatpush1.bf16.msra.mxu0 0
        %820 = vmatprep.subr.bf16.mxu0 0
        %821 = vmatpush1.bf16.msra.mxu0 %v805
        %822 = vmatprep.subr.bf16.mxu0 0
        %823 = vmatpush1.bf16.msra.mxu0 %v804
        %824 = vmatprep.subr.bf16.mxu0 0
        %825 = vmatpush2.bf16.msra.mxu0 0
        %826 = vmatprep.subr.bf16.mxu0 0
        %827 = vmatpush2.bf16.msra.mxu0 0
        %828 = vmatprep.subr.bf16.mxu0 0
        %829 = vmatpush2.bf16.msra.mxu0 0
        %830 = vmatprep.subr.bf16.mxu0 0
        %831 = vmatpush2.bf16.msra.mxu0 0
        %832 = vmatprep.subr.bf16.mxu0 0
        %833 = vmatpush2.bf16.msra.mxu0 0
        %834 = vmatprep.subr.bf16.mxu0 0
        %835 = vmatpush2.bf16.msra.mxu0 0
        %836 = vmatprep.subr.bf16.mxu0 0
        %837 = vmatpush2.bf16.msra.mxu0 0
        %838 = vmatprep.subr.bf16.mxu0 0
        %839 = vmatpush2.bf16.msra.mxu0 0
        %840 = vmatprep.mubr.bf16.mxu0 0
        %841 = vmatmul.mubr.bf16.gmra.mxu0 %v678
        %v842 = vpop.f32.mrf.mxu0
        %v843 = vadd.f32 %v794, %v842
        %v844 = vpop.f32.mrf.mxu0
        %v845 = vpop.f32.mrf.mxu0
        %v846 = vpop.f32.mrf.mxu0
        %847 = vdwg.mxu0
        %v848 = vpack.c.bf16 %v843, %v843
        %v849 = vld [vmem:[#allocation10] sm:$0x1]
        %v851 = vlaneseq
        %v852 = vshrl.u32 %v851, 7
        %v853 = vsub.s32 0, %v852
        %v854 = vrot.slane %v849, %v853
        %v856 = vadd.f32 %v652, %v854
        %v858 = vsel %vm624, %v720, 0
        %v861 = vsel %vm624, %v784, 0
        %863 = vmatprep.subr.bf16.mxu0 0
        %864 = vmatpush1.bf16.xpose.msra.mxu0 0
        %865 = vmatprep.subr.bf16.mxu0 0
        %866 = vmatpush1.bf16.xpose.msra.mxu0 0
        %867 = vmatprep.subr.bf16.mxu0 0
        %868 = vmatpush1.bf16.xpose.msra.mxu0 0
        %869 = vmatprep.subr.bf16.mxu0 0
        %870 = vmatpush1.bf16.xpose.msra.mxu0 0
        %871 = vmatprep.subr.bf16.mxu0 0
        %872 = vmatpush1.bf16.xpose.msra.mxu0 0
        %873 = vmatprep.subr.bf16.mxu0 0
        %874 = vmatpush1.bf16.xpose.msra.mxu0 0
        %875 = vmatprep.subr.bf16.mxu0 0
        %876 = vmatpush1.bf16.xpose.msra.mxu0 0
        %877 = vmatprep.subr.bf16.mxu0 0
        %878 = vmatpush1.bf16.xpose.msra.mxu0 %v861
        %879 = vmatprep.subr.bf16.mxu0 0
        %880 = vmatpush2.bf16.xpose.msra.mxu0 0
        %881 = vmatprep.subr.bf16.mxu0 0
        %882 = vmatpush2.bf16.xpose.msra.mxu0 0
        %883 = vmatprep.subr.bf16.mxu0 0
        %884 = vmatpush2.bf16.xpose.msra.mxu0 0
        %885 = vmatprep.subr.bf16.mxu0 0
        %886 = vmatpush2.bf16.xpose.msra.mxu0 0
        %887 = vmatprep.subr.bf16.mxu0 0
        %888 = vmatpush2.bf16.xpose.msra.mxu0 0
        %889 = vmatprep.subr.bf16.mxu0 0
        %890 = vmatpush2.bf16.xpose.msra.mxu0 0
        %891 = vmatprep.subr.bf16.mxu0 0
        %892 = vmatpush2.bf16.xpose.msra.mxu0 0
        %893 = vmatprep.subr.bf16.mxu0 0
        %894 = vmatpush2.bf16.xpose.msra.mxu0 0
        %895 = vmatprep.mubr.bf16.mxu0 0
        %896 = vmatmul.mubr.bf16.gmra.mxu0 %v858
        %v897 = vpop.f32.mrf.mxu0
        %v898 = vadd.f32 0.0, %v897
        %v899 = vpop.f32.mrf.mxu0
        %v900 = vpop.f32.mrf.mxu0
        %v901 = vpop.f32.mrf.mxu0
        %902 = vdwg.mxu0
        %v903 = vmul.f32 %v898, 0.17677669
        %vm904 = vcmask 64512
        %v905 = vsel %vm904, %v903, -inf
        %906 = vmax.xlane.f32.xlu0 %v905
        %v907 = vpop.xlane.xlu0 %906
        %v908 = vsub.f32 %v903, %v907
        %v909 = vmul.f32 %v908, 1.442695
        %v910 = vpow.pop %v909
        %v911 = vsel %vm904, %v910, 0.0
        %912 = vadd.xlane.f32.xlu0 %v911
        %v913 = vpop.xlane.xlu0 %912
        %v914 = vrcp.pop %v913
        %v915 = vmul.f32 %v910, %v914
        %v916 = vpack.c.bf16 %v915, %v915
        %vm917 = vcmask 60416
        %918 = vst.msk [vmem:[%s613] sm:$0xf] %vm917, %v916
        %v920 = vsel %vm904, %v916, 0
        %vm922 = vcmask 1043456
        %v924 = vsel %vm922, %v848, 0
        %926 = vmatprep.subr.bf16.mxu0 0
        %927 = vmatpush1.bf16.msra.mxu0 0
        %928 = vmatprep.subr.bf16.mxu0 0
        %929 = vmatpush1.bf16.msra.mxu0 0
        %930 = vmatprep.subr.bf16.mxu0 0
        %931 = vmatpush1.bf16.msra.mxu0 0
        %932 = vmatprep.subr.bf16.mxu0 0
        %933 = vmatpush1.bf16.msra.mxu0 0
        %934 = vmatprep.subr.bf16.mxu0 0
        %935 = vmatpush1.bf16.msra.mxu0 0
        %936 = vmatprep.subr.bf16.mxu0 0
        %937 = vmatpush1.bf16.msra.mxu0 0
        %938 = vmatprep.subr.bf16.mxu0 0
        %939 = vmatpush1.bf16.msra.mxu0 0
        %940 = vmatprep.subr.bf16.mxu0 0
        %941 = vmatpush1.bf16.msra.mxu0 %v924
        %942 = vmatprep.subr.bf16.mxu0 0
        %943 = vmatpush2.bf16.msra.mxu0 0
        %944 = vmatprep.subr.bf16.mxu0 0
        %945 = vmatpush2.bf16.msra.mxu0 0
        %946 = vmatprep.subr.bf16.mxu0 0
        %947 = vmatpush2.bf16.msra.mxu0 0
        %948 = vmatprep.subr.bf16.mxu0 0
        %949 = vmatpush2.bf16.msra.mxu0 0
        %950 = vmatprep.subr.bf16.mxu0 0
        %951 = vmatpush2.bf16.msra.mxu0 0
        %952 = vmatprep.subr.bf16.mxu0 0
        %953 = vmatpush2.bf16.msra.mxu0 0
        %954 = vmatprep.subr.bf16.mxu0 0
        %955 = vmatpush2.bf16.msra.mxu0 0
        %956 = vmatprep.subr.bf16.mxu0 0
        %957 = vmatpush2.bf16.msra.mxu0 0
        %958 = vmatprep.mubr.bf16.mxu0 0
        %959 = vmatmul.mubr.bf16.gmra.mxu0 %v920
        %v960 = vpop.f32.mrf.mxu0
        %v961 = vadd.f32 0.0, %v960
        %v962 = vpop.f32.mrf.mxu0
        %v963 = vpop.f32.mrf.mxu0
        %v964 = vpop.f32.mrf.mxu0
        %965 = vdwg.mxu0
        %v966 = vpack.c.bf16 %v961, %v961
        %v967 = vld [vmem:[%s8] sm:$0xf]
        %v968 = vld [vmem:[%s8 + $0x4] sm:$0xf]
        %v969 = vld [vmem:[%s8 + $0x8] sm:$0xf]
        %v970 = vld [vmem:[%s8 + $0xc] sm:$0xf]
        %v975 = vunpack.c.l.b16 %v967
        %v976 = vunpack.c.l.b16 %v968
        %v977 = vunpack.c.l.b16 %v969
        %v978 = vunpack.c.l.b16 %v970
        %v979 = vpack.c.b16 %v976, %v975
        %v980 = vpack.c.b16 %v978, %v977
        %v984 = vsel %vm624, %v966, 0
        %986 = vmatprep.subr.bf16.mxu0 0
        %987 = vmatpush1.bf16.msra.mxu0 0
        %988 = vmatprep.subr.bf16.mxu0 0
        %989 = vmatpush1.bf16.msra.mxu0 0
        %990 = vmatprep.subr.bf16.mxu0 0
        %991 = vmatpush1.bf16.msra.mxu0 0
        %992 = vmatprep.subr.bf16.mxu0 0
        %993 = vmatpush1.bf16.msra.mxu0 0
        %994 = vmatprep.subr.bf16.mxu0 0
        %995 = vmatpush1.bf16.msra.mxu0 0
        %996 = vmatprep.subr.bf16.mxu0 0
        %997 = vmatpush1.bf16.msra.mxu0 0
        %998 = vmatprep.subr.bf16.mxu0 0
        %999 = vmatpush1.bf16.msra.mxu0 %v980
        %1000 = vmatprep.subr.bf16.mxu0 0
        %1001 = vmatpush1.bf16.msra.mxu0 %v979
        %1002 = vmatprep.subr.bf16.mxu0 0
        %1003 = vmatpush2.bf16.msra.mxu0 0
        %1004 = vmatprep.subr.bf16.mxu0 0
        %1005 = vmatpush2.bf16.msra.mxu0 0
        %1006 = vmatprep.subr.bf16.mxu0 0
        %1007 = vmatpush2.bf16.msra.mxu0 0
        %1008 = vmatprep.subr.bf16.mxu0 0
        %1009 = vmatpush2.bf16.msra.mxu0 0
        %1010 = vmatprep.subr.bf16.mxu0 0
        %1011 = vmatpush2.bf16.msra.mxu0 0
        %1012 = vmatprep.subr.bf16.mxu0 0
        %1013 = vmatpush2.bf16.msra.mxu0 0
        %1014 = vmatprep.subr.bf16.mxu0 0
        %1015 = vmatpush2.bf16.msra.mxu0 0
        %1016 = vmatprep.subr.bf16.mxu0 0
        %1017 = vmatpush2.bf16.msra.mxu0 0
        %1018 = vmatprep.mubr.bf16.mxu0 0
        %1019 = vmatmul.mubr.bf16.gmra.mxu0 %v984
        %v1020 = vpop.f32.mrf.mxu0
        %v1021 = vadd.f32 0.0, %v1020
        %v1022 = vpop.f32.mrf.mxu0
        %v1023 = vpop.f32.mrf.mxu0
        %v1024 = vpop.f32.mrf.mxu0
        %1025 = vdwg.mxu0
        %v1026 = vadd.f32 %v856, %v1021
        %1028 = vrot.lane.b32.xlu0 %v720, 96
        %v1029 = vpop.permute.xlu0 %1028
        %1031 = vrot.lane.b32.xlu0 %v784, 96
        %v1032 = vpop.permute.xlu0 %1031
        %v1034 = vsel %vm624, %v1029, 0
        %v1037 = vsel %vm624, %v1032, 0
        %1039 = vmatprep.subr.bf16.mxu0 0
        %1040 = vmatpush1.bf16.xpose.msra.mxu0 0
        %1041 = vmatprep.subr.bf16.mxu0 0
        %1042 = vmatpush1.bf16.xpose.msra.mxu0 0
        %1043 = vmatprep.subr.bf16.mxu0 0
        %1044 = vmatpush1.bf16.xpose.msra.mxu0 0
        %1045 = vmatprep.subr.bf16.mxu0 0
        %1046 = vmatpush1.bf16.xpose.msra.mxu0 0
        %1047 = vmatprep.subr.bf16.mxu0 0
        %1048 = vmatpush1.bf16.xpose.msra.mxu0 0
        %1049 = vmatprep.subr.bf16.mxu0 0
        %1050 = vmatpush1.bf16.xpose.msra.mxu0 0
        %1051 = vmatprep.subr.bf16.mxu0 0
        %1052 = vmatpush1.bf16.xpose.msra.mxu0 0
        %1053 = vmatprep.subr.bf16.mxu0 0
        %1054 = vmatpush1.bf16.xpose.msra.mxu0 %v1037
        %1055 = vmatprep.subr.bf16.mxu0 0
        %1056 = vmatpush2.bf16.xpose.msra.mxu0 0
        %1057 = vmatprep.subr.bf16.mxu0 0
        %1058 = vmatpush2.bf16.xpose.msra.mxu0 0
        %1059 = vmatprep.subr.bf16.mxu0 0
        %1060 = vmatpush2.bf16.xpose.msra.mxu0 0
        %1061 = vmatprep.subr.bf16.mxu0 0
        %1062 = vmatpush2.bf16.xpose.msra.mxu0 0
        %1063 = vmatprep.subr.bf16.mxu0 0
        %1064 = vmatpush2.bf16.xpose.msra.mxu0 0
        %1065 = vmatprep.subr.bf16.mxu0 0
        %1066 = vmatpush2.bf16.xpose.msra.mxu0 0
        %1067 = vmatprep.subr.bf16.mxu0 0
        %1068 = vmatpush2.bf16.xpose.msra.mxu0 0
        %1069 = vmatprep.subr.bf16.mxu0 0
        %1070 = vmatpush2.bf16.xpose.msra.mxu0 0
        %1071 = vmatprep.mubr.bf16.mxu0 0
        %1072 = vmatmul.mubr.bf16.gmra.mxu0 %v1034
        %v1073 = vpop.f32.mrf.mxu0
        %v1074 = vadd.f32 0.0, %v1073
        %v1075 = vpop.f32.mrf.mxu0
        %v1076 = vpop.f32.mrf.mxu0
        %v1077 = vpop.f32.mrf.mxu0
        %1078 = vdwg.mxu0
        %v1079 = vmul.f32 %v1074, 0.17677669
        %v1080 = vsel %vm904, %v1079, -inf
        %1081 = vmax.xlane.f32.xlu0 %v1080
        %v1082 = vpop.xlane.xlu0 %1081
        %v1083 = vsub.f32 %v1079, %v1082
        %v1084 = vmul.f32 %v1083, 1.442695
        %v1085 = vpow.pop %v1084
        %v1086 = vsel %vm904, %v1085, 0.0
        %1087 = vadd.xlane.f32.xlu0 %v1086
        %v1088 = vpop.xlane.xlu0 %1087
        %v1089 = vrcp.pop %v1088
        %v1090 = vmul.f32 %v1085, %v1089
        %v1091 = vpack.c.bf16 %v1090, %v1090
        %s1092 = scalar_lea.vmem %s613, 4 [#allocation12]
        %1093 = vst.msk [vmem:[%s1092] sm:$0xf] %vm917, %v1091
        %1095 = vrot.lane.b32.xlu0 %v848, 96
        %v1096 = vpop.permute.xlu0 %1095
        %v1098 = vsel %vm904, %v1091, 0
        %v1101 = vsel %vm922, %v1096, 0
        %1103 = vmatprep.subr.bf16.mxu0 0
        %1104 = vmatpush1.bf16.msra.mxu0 0
        %1105 = vmatprep.subr.bf16.mxu0 0
        %1106 = vmatpush1.bf16.msra.mxu0 0
        %1107 = vmatprep.subr.bf16.mxu0 0
        %1108 = vmatpush1.bf16.msra.mxu0 0
        %1109 = vmatprep.subr.bf16.mxu0 0
        %1110 = vmatpush1.bf16.msra.mxu0 0
        %1111 = vmatprep.subr.bf16.mxu0 0
        %1112 = vmatpush1.bf16.msra.mxu0 0
        %1113 = vmatprep.subr.bf16.mxu0 0
        %1114 = vmatpush1.bf16.msra.mxu0 0
        %1115 = vmatprep.subr.bf16.mxu0 0
        %1116 = vmatpush1.bf16.msra.mxu0 0
        %1117 = vmatprep.subr.bf16.mxu0 0
        %1118 = vmatpush1.bf16.msra.mxu0 %v1101
        %1119 = vmatprep.subr.bf16.mxu0 0
        %1120 = vmatpush2.bf16.msra.mxu0 0
        %1121 = vmatprep.subr.bf16.mxu0 0
        %1122 = vmatpush2.bf16.msra.mxu0 0
        %1123 = vmatprep.subr.bf16.mxu0 0
        %1124 = vmatpush2.bf16.msra.mxu0 0
        %1125 = vmatprep.subr.bf16.mxu0 0
        %1126 = vmatpush2.bf16.msra.mxu0 0
        %1127 = vmatprep.subr.bf16.mxu0 0
        %1128 = vmatpush2.bf16.msra.mxu0 0
        %1129 = vmatprep.subr.bf16.mxu0 0
        %1130 = vmatpush2.bf16.msra.mxu0 0
        %1131 = vmatprep.subr.bf16.mxu0 0
        %1132 = vmatpush2.bf16.msra.mxu0 0
        %1133 = vmatprep.subr.bf16.mxu0 0
        %1134 = vmatpush2.bf16.msra.mxu0 0
        %1135 = vmatprep.mubr.bf16.mxu0 0
        %1136 = vmatmul.mubr.bf16.gmra.mxu0 %v1098
        %v1137 = vpop.f32.mrf.mxu0
        %v1138 = vadd.f32 0.0, %v1137
        %v1139 = vpop.f32.mrf.mxu0
        %v1140 = vpop.f32.mrf.mxu0
        %v1141 = vpop.f32.mrf.mxu0
        %1142 = vdwg.mxu0
        %v1143 = vpack.c.bf16 %v1138, %v1138
        %v1144 = vld [vmem:[%s8 + $0x10] sm:$0xf]
        %v1145 = vld [vmem:[%s8 + $0x14] sm:$0xf]
        %v1146 = vld [vmem:[%s8 + $0x18] sm:$0xf]
        %v1147 = vld [vmem:[%s8 + $0x1c] sm:$0xf]
        %v1152 = vunpack.c.l.b16 %v1144
        %v1153 = vunpack.c.l.b16 %v1145
        %v1154 = vunpack.c.l.b16 %v1146
        %v1155 = vunpack.c.l.b16 %v1147
        %v1156 = vpack.c.b16 %v1153, %v1152
        %v1157 = vpack.c.b16 %v1155, %v1154
        %v1161 = vsel %vm624, %v1143, 0
        %1163 = vmatprep.subr.bf16.mxu0 0
        %1164 = vmatpush1.bf16.msra.mxu0 0
        %1165 = vmatprep.subr.bf16.mxu0 0
        %1166 = vmatpush1.bf16.msra.mxu0 0
        %1167 = vmatprep.subr.bf16.mxu0 0
        %1168 = vmatpush1.bf16.msra.mxu0 0
        %1169 = vmatprep.subr.bf16.mxu0 0
        %1170 = vmatpush1.bf16.msra.mxu0 0
        %1171 = vmatprep.subr.bf16.mxu0 0
        %1172 = vmatpush1.bf16.msra.mxu0 0
        %1173 = vmatprep.subr.bf16.mxu0 0
        %1174 = vmatpush1.bf16.msra.mxu0 0
        %1175 = vmatprep.subr.bf16.mxu0 0
        %1176 = vmatpush1.bf16.msra.mxu0 %v1157
        %1177 = vmatprep.subr.bf16.mxu0 0
        %1178 = vmatpush1.bf16.msra.mxu0 %v1156
        %1179 = vmatprep.subr.bf16.mxu0 0
        %1180 = vmatpush2.bf16.msra.mxu0 0
        %1181 = vmatprep.subr.bf16.mxu0 0
        %1182 = vmatpush2.bf16.msra.mxu0 0
        %1183 = vmatprep.subr.bf16.mxu0 0
        %1184 = vmatpush2.bf16.msra.mxu0 0
        %1185 = vmatprep.subr.bf16.mxu0 0
        %1186 = vmatpush2.bf16.msra.mxu0 0
        %1187 = vmatprep.subr.bf16.mxu0 0
        %1188 = vmatpush2.bf16.msra.mxu0 0
        %1189 = vmatprep.subr.bf16.mxu0 0
        %1190 = vmatpush2.bf16.msra.mxu0 0
        %1191 = vmatprep.subr.bf16.mxu0 0
        %1192 = vmatpush2.bf16.msra.mxu0 0
        %1193 = vmatprep.subr.bf16.mxu0 0
        %1194 = vmatpush2.bf16.msra.mxu0 0
        %1195 = vmatprep.mubr.bf16.mxu0 0
        %1196 = vmatmul.mubr.bf16.gmra.mxu0 %v1161
        %v1197 = vpop.f32.mrf.mxu0
        %v1198 = vadd.f32 0.0, %v1197
        %v1199 = vpop.f32.mrf.mxu0
        %v1200 = vpop.f32.mrf.mxu0
        %v1201 = vpop.f32.mrf.mxu0
        %1202 = vdwg.mxu0
        %v1203 = vadd.f32 %v1026, %v1198
        %1204 = vrot.lane.b32.xlu0 %v720, 64
        %v1205 = vpop.permute.xlu0 %1204
        %1206 = vrot.lane.b32.xlu0 %v784, 64
        %v1207 = vpop.permute.xlu0 %1206
        %v1209 = vsel %vm624, %v1205, 0
        %v1212 = vsel %vm624, %v1207, 0
        %1214 = vmatprep.subr.bf16.mxu0 0
        %1215 = vmatpush1.bf16.xpose.msra.mxu0 0
        %1216 = vmatprep.subr.bf16.mxu0 0
        %1217 = vmatpush1.bf16.xpose.msra.mxu0 0
        %1218 = vmatprep.subr.bf16.mxu0 0
        %1219 = vmatpush1.bf16.xpose.msra.mxu0 0
        %1220 = vmatprep.subr.bf16.mxu0 0
        %1221 = vmatpush1.bf16.xpose.msra.mxu0 0
        %1222 = vmatprep.subr.bf16.mxu0 0
        %1223 = vmatpush1.bf16.xpose.msra.mxu0 0
        %1224 = vmatprep.subr.bf16.mxu0 0
        %1225 = vmatpush1.bf16.xpose.msra.mxu0 0
        %1226 = vmatprep.subr.bf16.mxu0 0
        %1227 = vmatpush1.bf16.xpose.msra.mxu0 0
        %1228 = vmatprep.subr.bf16.mxu0 0
        %1229 = vmatpush1.bf16.xpose.msra.mxu0 %v1212
        %1230 = vmatprep.subr.bf16.mxu0 0
        %1231 = vmatpush2.bf16.xpose.msra.mxu0 0
        %1232 = vmatprep.subr.bf16.mxu0 0
        %1233 = vmatpush2.bf16.xpose.msra.mxu0 0
        %1234 = vmatprep.subr.bf16.mxu0 0
        %1235 = vmatpush2.bf16.xpose.msra.mxu0 0
        %1236 = vmatprep.subr.bf16.mxu0 0
        %1237 = vmatpush2.bf16.xpose.msra.mxu0 0
        %1238 = vmatprep.subr.bf16.mxu0 0
        %1239 = vmatpush2.bf16.xpose.msra.mxu0 0
        %1240 = vmatprep.subr.bf16.mxu0 0
        %1241 = vmatpush2.bf16.xpose.msra.mxu0 0
        %1242 = vmatprep.subr.bf16.mxu0 0
        %1243 = vmatpush2.bf16.xpose.msra.mxu0 0
        %1244 = vmatprep.subr.bf16.mxu0 0
        %1245 = vmatpush2.bf16.xpose.msra.mxu0 0
        %1246 = vmatprep.mubr.bf16.mxu0 0
        %1247 = vmatmul.mubr.bf16.gmra.mxu0 %v1209
        %v1248 = vpop.f32.mrf.mxu0
        %v1249 = vadd.f32 0.0, %v1248
        %v1250 = vpop.f32.mrf.mxu0
        %v1251 = vpop.f32.mrf.mxu0
        %v1252 = vpop.f32.mrf.mxu0
        %1253 = vdwg.mxu0
        %v1254 = vmul.f32 %v1249, 0.17677669
        %v1255 = vsel %vm904, %v1254, -inf
        %1256 = vmax.xlane.f32.xlu0 %v1255
        %v1257 = vpop.xlane.xlu0 %1256
        %v1258 = vsub.f32 %v1254, %v1257
        %v1259 = vmul.f32 %v1258, 1.442695
        %v1260 = vpow.pop %v1259
        %v1261 = vsel %vm904, %v1260, 0.0
        %1262 = vadd.xlane.f32.xlu0 %v1261
        %v1263 = vpop.xlane.xlu0 %1262
        %v1264 = vrcp.pop %v1263
        %v1265 = vmul.f32 %v1260, %v1264
        %v1266 = vpack.c.bf16 %v1265, %v1265
        %s1267 = scalar_lea.vmem %s613, 8 [#allocation12]
        %1268 = vst.msk [vmem:[%s1267] sm:$0xf] %vm917, %v1266
        %1269 = vrot.lane.b32.xlu0 %v848, 64
        %v1270 = vpop.permute.xlu0 %1269
        %v1272 = vsel %vm904, %v1266, 0
        %v1275 = vsel %vm922, %v1270, 0
        %1277 = vmatprep.subr.bf16.mxu0 0
        %1278 = vmatpush1.bf16.msra.mxu0 0
        %1279 = vmatprep.subr.bf16.mxu0 0
        %1280 = vmatpush1.bf16.msra.mxu0 0
        %1281 = vmatprep.subr.bf16.mxu0 0
        %1282 = vmatpush1.bf16.msra.mxu0 0
        %1283 = vmatprep.subr.bf16.mxu0 0
        %1284 = vmatpush1.bf16.msra.mxu0 0
        %1285 = vmatprep.subr.bf16.mxu0 0
        %1286 = vmatpush1.bf16.msra.mxu0 0
        %1287 = vmatprep.subr.bf16.mxu0 0
        %1288 = vmatpush1.bf16.msra.mxu0 0
        %1289 = vmatprep.subr.bf16.mxu0 0
        %1290 = vmatpush1.bf16.msra.mxu0 0
        %1291 = vmatprep.subr.bf16.mxu0 0
        %1292 = vmatpush1.bf16.msra.mxu0 %v1275
        %1293 = vmatprep.subr.bf16.mxu0 0
        %1294 = vmatpush2.bf16.msra.mxu0 0
        %1295 = vmatprep.subr.bf16.mxu0 0
        %1296 = vmatpush2.bf16.msra.mxu0 0
        %1297 = vmatprep.subr.bf16.mxu0 0
        %1298 = vmatpush2.bf16.msra.mxu0 0
        %1299 = vmatprep.subr.bf16.mxu0 0
        %1300 = vmatpush2.bf16.msra.mxu0 0
        %1301 = vmatprep.subr.bf16.mxu0 0
        %1302 = vmatpush2.bf16.msra.mxu0 0
        %1303 = vmatprep.subr.bf16.mxu0 0
        %1304 = vmatpush2.bf16.msra.mxu0 0
        %1305 = vmatprep.subr.bf16.mxu0 0
        %1306 = vmatpush2.bf16.msra.mxu0 0
        %1307 = vmatprep.subr.bf16.mxu0 0
        %1308 = vmatpush2.bf16.msra.mxu0 0
        %1309 = vmatprep.mubr.bf16.mxu0 0
        %1310 = vmatmul.mubr.bf16.gmra.mxu0 %v1272
        %v1311 = vpop.f32.mrf.mxu0
        %v1312 = vadd.f32 0.0, %v1311
        %v1313 = vpop.f32.mrf.mxu0
        %v1314 = vpop.f32.mrf.mxu0
        %v1315 = vpop.f32.mrf.mxu0
        %1316 = vdwg.mxu0
        %v1317 = vpack.c.bf16 %v1312, %v1312
        %v1318 = vld [vmem:[%s8 + $0x20] sm:$0xf]
        %v1319 = vld [vmem:[%s8 + $0x24] sm:$0xf]
        %v1320 = vld [vmem:[%s8 + $0x28] sm:$0xf]
        %v1321 = vld [vmem:[%s8 + $0x2c] sm:$0xf]
        %v1326 = vunpack.c.l.b16 %v1318
        %v1327 = vunpack.c.l.b16 %v1319
        %v1328 = vunpack.c.l.b16 %v1320
        %v1329 = vunpack.c.l.b16 %v1321
        %v1330 = vpack.c.b16 %v1327, %v1326
        %v1331 = vpack.c.b16 %v1329, %v1328
        %v1335 = vsel %vm624, %v1317, 0
        %1337 = vmatprep.subr.bf16.mxu0 0
        %1338 = vmatpush1.bf16.msra.mxu0 0
        %1339 = vmatprep.subr.bf16.mxu0 0
        %1340 = vmatpush1.bf16.msra.mxu0 0
        %1341 = vmatprep.subr.bf16.mxu0 0
        %1342 = vmatpush1.bf16.msra.mxu0 0
        %1343 = vmatprep.subr.bf16.mxu0 0
        %1344 = vmatpush1.bf16.msra.mxu0 0
        %1345 = vmatprep.subr.bf16.mxu0 0
        %1346 = vmatpush1.bf16.msra.mxu0 0
        %1347 = vmatprep.subr.bf16.mxu0 0
        %1348 = vmatpush1.bf16.msra.mxu0 0
        %1349 = vmatprep.subr.bf16.mxu0 0
        %1350 = vmatpush1.bf16.msra.mxu0 %v1331
        %1351 = vmatprep.subr.bf16.mxu0 0
        %1352 = vmatpush1.bf16.msra.mxu0 %v1330
        %1353 = vmatprep.subr.bf16.mxu0 0
        %1354 = vmatpush2.bf16.msra.mxu0 0
        %1355 = vmatprep.subr.bf16.mxu0 0
        %1356 = vmatpush2.bf16.msra.mxu0 0
        %1357 = vmatprep.subr.bf16.mxu0 0
        %1358 = vmatpush2.bf16.msra.mxu0 0
        %1359 = vmatprep.subr.bf16.mxu0 0
        %1360 = vmatpush2.bf16.msra.mxu0 0
        %1361 = vmatprep.subr.bf16.mxu0 0
        %1362 = vmatpush2.bf16.msra.mxu0 0
        %1363 = vmatprep.subr.bf16.mxu0 0
        %1364 = vmatpush2.bf16.msra.mxu0 0
        %1365 = vmatprep.subr.bf16.mxu0 0
        %1366 = vmatpush2.bf16.msra.mxu0 0
        %1367 = vmatprep.subr.bf16.mxu0 0
        %1368 = vmatpush2.bf16.msra.mxu0 0
        %1369 = vmatprep.mubr.bf16.mxu0 0
        %1370 = vmatmul.mubr.bf16.gmra.mxu0 %v1335
        %v1371 = vpop.f32.mrf.mxu0
        %v1372 = vadd.f32 0.0, %v1371
        %v1373 = vpop.f32.mrf.mxu0
        %v1374 = vpop.f32.mrf.mxu0
        %v1375 = vpop.f32.mrf.mxu0
        %1376 = vdwg.mxu0
        %v1377 = vadd.f32 %v1203, %v1372
        %1378 = vrot.lane.b32.xlu0 %v720, 32
        %v1379 = vpop.permute.xlu0 %1378
        %1380 = vrot.lane.b32.xlu0 %v784, 32
        %v1381 = vpop.permute.xlu0 %1380
        %v1383 = vsel %vm624, %v1379, 0
        %v1386 = vsel %vm624, %v1381, 0
        %1388 = vmatprep.subr.bf16.mxu0 0
        %1389 = vmatpush1.bf16.xpose.msra.mxu0 0
        %1390 = vmatprep.subr.bf16.mxu0 0
        %1391 = vmatpush1.bf16.xpose.msra.mxu0 0
        %1392 = vmatprep.subr.bf16.mxu0 0
        %1393 = vmatpush1.bf16.xpose.msra.mxu0 0
        %1394 = vmatprep.subr.bf16.mxu0 0
        %1395 = vmatpush1.bf16.xpose.msra.mxu0 0
        %1396 = vmatprep.subr.bf16.mxu0 0
        %1397 = vmatpush1.bf16.xpose.msra.mxu0 0
        %1398 = vmatprep.subr.bf16.mxu0 0
        %1399 = vmatpush1.bf16.xpose.msra.mxu0 0
        %1400 = vmatprep.subr.bf16.mxu0 0
        %1401 = vmatpush1.bf16.xpose.msra.mxu0 0
        %1402 = vmatprep.subr.bf16.mxu0 0
        %1403 = vmatpush1.bf16.xpose.msra.mxu0 %v1386
        %1404 = vmatprep.subr.bf16.mxu0 0
        %1405 = vmatpush2.bf16.xpose.msra.mxu0 0
        %1406 = vmatprep.subr.bf16.mxu0 0
        %1407 = vmatpush2.bf16.xpose.msra.mxu0 0
        %1408 = vmatprep.subr.bf16.mxu0 0
        %1409 = vmatpush2.bf16.xpose.msra.mxu0 0
        %1410 = vmatprep.subr.bf16.mxu0 0
        %1411 = vmatpush2.bf16.xpose.msra.mxu0 0
        %1412 = vmatprep.subr.bf16.mxu0 0
        %1413 = vmatpush2.bf16.xpose.msra.mxu0 0
        %1414 = vmatprep.subr.bf16.mxu0 0
        %1415 = vmatpush2.bf16.xpose.msra.mxu0 0
        %1416 = vmatprep.subr.bf16.mxu0 0
        %1417 = vmatpush2.bf16.xpose.msra.mxu0 0
        %1418 = vmatprep.subr.bf16.mxu0 0
        %1419 = vmatpush2.bf16.xpose.msra.mxu0 0
        %1420 = vmatprep.mubr.bf16.mxu0 0
        %1421 = vmatmul.mubr.bf16.gmra.mxu0 %v1383
        %v1422 = vpop.f32.mrf.mxu0
        %v1423 = vadd.f32 0.0, %v1422
        %v1424 = vpop.f32.mrf.mxu0
        %v1425 = vpop.f32.mrf.mxu0
        %v1426 = vpop.f32.mrf.mxu0
        %1427 = vdwg.mxu0
        %v1428 = vmul.f32 %v1423, 0.17677669
        %v1429 = vsel %vm904, %v1428, -inf
        %1430 = vmax.xlane.f32.xlu0 %v1429
        %v1431 = vpop.xlane.xlu0 %1430
        %v1432 = vsub.f32 %v1428, %v1431
        %v1433 = vmul.f32 %v1432, 1.442695
        %v1434 = vpow.pop %v1433
        %v1435 = vsel %vm904, %v1434, 0.0
        %1436 = vadd.xlane.f32.xlu0 %v1435
        %v1437 = vpop.xlane.xlu0 %1436
        %v1438 = vrcp.pop %v1437
        %v1439 = vmul.f32 %v1434, %v1438
        %v1440 = vpack.c.bf16 %v1439, %v1439
        %s1441 = scalar_lea.vmem %s613, 12 [#allocation12]
        %1442 = vst.msk [vmem:[%s1441] sm:$0xf] %vm917, %v1440
        %1443 = vrot.lane.b32.xlu0 %v848, 32
        %v1444 = vpop.permute.xlu0 %1443
        %v1446 = vsel %vm904, %v1440, 0
        %v1449 = vsel %vm922, %v1444, 0
        %1451 = vmatprep.subr.bf16.mxu0 0
        %1452 = vmatpush1.bf16.msra.mxu0 0
        %1453 = vmatprep.subr.bf16.mxu0 0
        %1454 = vmatpush1.bf16.msra.mxu0 0
        %1455 = vmatprep.subr.bf16.mxu0 0
        %1456 = vmatpush1.bf16.msra.mxu0 0
        %1457 = vmatprep.subr.bf16.mxu0 0
        %1458 = vmatpush1.bf16.msra.mxu0 0
        %1459 = vmatprep.subr.bf16.mxu0 0
        %1460 = vmatpush1.bf16.msra.mxu0 0
        %1461 = vmatprep.subr.bf16.mxu0 0
        %1462 = vmatpush1.bf16.msra.mxu0 0
        %1463 = vmatprep.subr.bf16.mxu0 0
        %1464 = vmatpush1.bf16.msra.mxu0 0
        %1465 = vmatprep.subr.bf16.mxu0 0
        %1466 = vmatpush1.bf16.msra.mxu0 %v1449
        %1467 = vmatprep.subr.bf16.mxu0 0
        %1468 = vmatpush2.bf16.msra.mxu0 0
        %1469 = vmatprep.subr.bf16.mxu0 0
        %1470 = vmatpush2.bf16.msra.mxu0 0
        %1471 = vmatprep.subr.bf16.mxu0 0
        %1472 = vmatpush2.bf16.msra.mxu0 0
        %1473 = vmatprep.subr.bf16.mxu0 0
        %1474 = vmatpush2.bf16.msra.mxu0 0
        %1475 = vmatprep.subr.bf16.mxu0 0
        %1476 = vmatpush2.bf16.msra.mxu0 0
        %1477 = vmatprep.subr.bf16.mxu0 0
        %1478 = vmatpush2.bf16.msra.mxu0 0
        %1479 = vmatprep.subr.bf16.mxu0 0
        %1480 = vmatpush2.bf16.msra.mxu0 0
        %1481 = vmatprep.subr.bf16.mxu0 0
        %1482 = vmatpush2.bf16.msra.mxu0 0
        %1483 = vmatprep.mubr.bf16.mxu0 0
        %1484 = vmatmul.mubr.bf16.gmra.mxu0 %v1446
        %v1485 = vpop.f32.mrf.mxu0
        %v1486 = vadd.f32 0.0, %v1485
        %v1487 = vpop.f32.mrf.mxu0
        %v1488 = vpop.f32.mrf.mxu0
        %v1489 = vpop.f32.mrf.mxu0
        %1490 = vdwg.mxu0
        %v1491 = vpack.c.bf16 %v1486, %v1486
        %v1492 = vld [vmem:[%s8 + $0x30] sm:$0xf]
        %v1493 = vld [vmem:[%s8 + $0x34] sm:$0xf]
        %v1494 = vld [vmem:[%s8 + $0x38] sm:$0xf]
        %v1495 = vld [vmem:[%s8 + $0x3c] sm:$0xf]
        %v1500 = vunpack.c.l.b16 %v1492
        %v1501 = vunpack.c.l.b16 %v1493
        %v1502 = vunpack.c.l.b16 %v1494
        %v1503 = vunpack.c.l.b16 %v1495
        %v1504 = vpack.c.b16 %v1501, %v1500
        %v1505 = vpack.c.b16 %v1503, %v1502
        %v1509 = vsel %vm624, %v1491, 0
        %1511 = vmatprep.subr.bf16.mxu0 0
        %1512 = vmatpush1.bf16.msra.mxu0 0
        %1513 = vmatprep.subr.bf16.mxu0 0
        %1514 = vmatpush1.bf16.msra.mxu0 0
        %1515 = vmatprep.subr.bf16.mxu0 0
        %1516 = vmatpush1.bf16.msra.mxu0 0
        %1517 = vmatprep.subr.bf16.mxu0 0
        %1518 = vmatpush1.bf16.msra.mxu0 0
        %1519 = vmatprep.subr.bf16.mxu0 0
        %1520 = vmatpush1.bf16.msra.mxu0 0
        %1521 = vmatprep.subr.bf16.mxu0 0
        %1522 = vmatpush1.bf16.msra.mxu0 0
        %1523 = vmatprep.subr.bf16.mxu0 0
        %1524 = vmatpush1.bf16.msra.mxu0 %v1505
        %1525 = vmatprep.subr.bf16.mxu0 0
        %1526 = vmatpush1.bf16.msra.mxu0 %v1504
        %1527 = vmatprep.subr.bf16.mxu0 0
        %1528 = vmatpush2.bf16.msra.mxu0 0
        %1529 = vmatprep.subr.bf16.mxu0 0
        %1530 = vmatpush2.bf16.msra.mxu0 0
        %1531 = vmatprep.subr.bf16.mxu0 0
        %1532 = vmatpush2.bf16.msra.mxu0 0
        %1533 = vmatprep.subr.bf16.mxu0 0
        %1534 = vmatpush2.bf16.msra.mxu0 0
        %1535 = vmatprep.subr.bf16.mxu0 0
        %1536 = vmatpush2.bf16.msra.mxu0 0
        %1537 = vmatprep.subr.bf16.mxu0 0
        %1538 = vmatpush2.bf16.msra.mxu0 0
        %1539 = vmatprep.subr.bf16.mxu0 0
        %1540 = vmatpush2.bf16.msra.mxu0 0
        %1541 = vmatprep.subr.bf16.mxu0 0
        %1542 = vmatpush2.bf16.msra.mxu0 0
        %1543 = vmatprep.mubr.bf16.mxu0 0
        %1544 = vmatmul.mubr.bf16.gmra.mxu0 %v1509
        %v1545 = vpop.f32.mrf.mxu0
        %v1546 = vadd.f32 0.0, %v1545
        %v1547 = vpop.f32.mrf.mxu0
        %v1548 = vpop.f32.mrf.mxu0
        %v1549 = vpop.f32.mrf.mxu0
        %1550 = vdwg.mxu0
        %v1551 = vadd.f32 %v1377, %v1546
        %v1552 = vld [vmem:[%s12] sm:$0x1]
        %v1553 = vld [vmem:[%s13] sm:$0x1]
        %v1554 = vsel %vm624, %v1551, 0.0
        %1555 = vadd.xlane.f32.xlu0 %v1554
        %v1556 = vpop.xlane.xlu0 %1555
        %v1557 = vmul.f32 %v1556, %v628
        %v1558 = vsub.f32 %v1551, %v1557
        %v1559 = vmul.f32 %v1558, %v1558
        %v1560 = vsel %vm624, %v1559, 0.0
        %1561 = vadd.xlane.f32.xlu0 %v1560
        %v1562 = vpop.xlane.xlu0 %1561
        %v1563 = vmul.f32 %v1562, %v628
        %v1564 = vadd.f32 %v1563, 1e-05
        %v1565 = vrsqrt.pop %v1564
        %v1566 = vmul.f32 %v1558, %v1565
        %v1568 = vlaneseq
        %v1569 = vshrl.u32 %v1568, 7
        %v1570 = vsub.s32 0, %v1569
        %v1571 = vrot.slane %v1552, %v1570
        %v1573 = vmul.f32 %v1566, %v1571
        %v1575 = vlaneseq
        %v1576 = vshrl.u32 %v1575, 7
        %v1577 = vsub.s32 0, %v1576
        %v1578 = vrot.slane %v1553, %v1577
        %v1580 = vadd.f32 %v1573, %v1578
        %v1581 = vpack.c.bf16 %v1580, %v1580
        %v1582 = vld [vmem:[%s14] sm:$0xf]
        %v1583 = vld [vmem:[%s14 + $0x4] sm:$0xf]
        %v1584 = vld [vmem:[%s14 + $0x8] sm:$0xf]
        %v1585 = vld [vmem:[%s14 + $0xc] sm:$0xf]
        %v1590 = vunpack.c.l.b16 %v1582
        %v1591 = vunpack.c.l.b16 %v1583
        %v1592 = vunpack.c.l.b16 %v1584
        %v1593 = vunpack.c.l.b16 %v1585
        %v1594 = vpack.c.b16 %v1591, %v1590
        %v1595 = vpack.c.b16 %v1593, %v1592
        %v1599 = vsel %vm624, %v1581, 0
        %1601 = vmatprep.subr.bf16.mxu0 0
        %1602 = vmatpush1.bf16.msra.mxu0 0
        %1603 = vmatprep.subr.bf16.mxu0 0
        %1604 = vmatpush1.bf16.msra.mxu0 0
        %1605 = vmatprep.subr.bf16.mxu0 0
        %1606 = vmatpush1.bf16.msra.mxu0 0
        %1607 = vmatprep.subr.bf16.mxu0 0
        %1608 = vmatpush1.bf16.msra.mxu0 0
        %1609 = vmatprep.subr.bf16.mxu0 0
        %1610 = vmatpush1.bf16.msra.mxu0 0
        %1611 = vmatprep.subr.bf16.mxu0 0
        %1612 = vmatpush1.bf16.msra.mxu0 0
        %1613 = vmatprep.subr.bf16.mxu0 0
        %1614 = vmatpush1.bf16.msra.mxu0 %v1595
        %1615 = vmatprep.subr.bf16.mxu0 0
        %1616 = vmatpush1.bf16.msra.mxu0 %v1594
        %1617 = vmatprep.subr.bf16.mxu0 0
        %1618 = vmatpush2.bf16.msra.mxu0 0
        %1619 = vmatprep.subr.bf16.mxu0 0
        %1620 = vmatpush2.bf16.msra.mxu0 0
        %1621 = vmatprep.subr.bf16.mxu0 0
        %1622 = vmatpush2.bf16.msra.mxu0 0
        %1623 = vmatprep.subr.bf16.mxu0 0
        %1624 = vmatpush2.bf16.msra.mxu0 0
        %1625 = vmatprep.subr.bf16.mxu0 0
        %1626 = vmatpush2.bf16.msra.mxu0 0
        %1627 = vmatprep.subr.bf16.mxu0 0
        %1628 = vmatpush2.bf16.msra.mxu0 0
        %1629 = vmatprep.subr.bf16.mxu0 0
        %1630 = vmatpush2.bf16.msra.mxu0 0
        %1631 = vmatprep.subr.bf16.mxu0 0
        %1632 = vmatpush2.bf16.msra.mxu0 0
        %1633 = vmatprep.mubr.bf16.mxu0 0
        %1634 = vmatmul.mubr.bf16.gmra.mxu0 %v1599
        %v1635 = vpop.f32.mrf.mxu0
        %v1636 = vadd.f32 0.0, %v1635
        %v1637 = vpop.f32.mrf.mxu0
        %v1638 = vpop.f32.mrf.mxu0
        %v1639 = vpop.f32.mrf.mxu0
        %1640 = vdwg.mxu0
        %v1641 = vmul.f32 %v1636, %v1636
        %v1642 = vmul.f32 %v1636, %v1641
        %v1643 = vmul.f32 %v1642, 0.044715
        %v1644 = vadd.f32 %v1636, %v1643
        %v1645 = vmul.f32 %v1644, 0.7978846
        %v1646 = vtanh.pop %v1645
        %v1647 = vadd.f32 %v1646, 1.0
        %v1648 = vmul.f32 %v1647, 0.5
        %v1649 = vmul.f32 %v1636, %v1648
        %v1650 = vpack.c.bf16 %v1649, %v1649
        %v1651 = vld [vmem:[%s15] sm:$0xf]
        %v1652 = vld [vmem:[%s15 + $0x4] sm:$0xf]
        %v1653 = vld [vmem:[%s15 + $0x8] sm:$0xf]
        %v1654 = vld [vmem:[%s15 + $0xc] sm:$0xf]
        %v1659 = vunpack.c.l.b16 %v1651
        %v1660 = vunpack.c.l.b16 %v1652
        %v1661 = vunpack.c.l.b16 %v1653
        %v1662 = vunpack.c.l.b16 %v1654
        %v1663 = vpack.c.b16 %v1660, %v1659
        %v1664 = vpack.c.b16 %v1662, %v1661
        %v1668 = vsel %vm624, %v1650, 0
        %1670 = vmatprep.subr.bf16.mxu0 0
        %1671 = vmatpush1.bf16.msra.mxu0 0
        %1672 = vmatprep.subr.bf16.mxu0 0
        %1673 = vmatpush1.bf16.msra.mxu0 0
        %1674 = vmatprep.subr.bf16.mxu0 0
        %1675 = vmatpush1.bf16.msra.mxu0 0
        %1676 = vmatprep.subr.bf16.mxu0 0
        %1677 = vmatpush1.bf16.msra.mxu0 0
        %1678 = vmatprep.subr.bf16.mxu0 0
        %1679 = vmatpush1.bf16.msra.mxu0 0
        %1680 = vmatprep.subr.bf16.mxu0 0
        %1681 = vmatpush1.bf16.msra.mxu0 0
        %1682 = vmatprep.subr.bf16.mxu0 0
        %1683 = vmatpush1.bf16.msra.mxu0 %v1664
        %1684 = vmatprep.subr.bf16.mxu0 0
        %1685 = vmatpush1.bf16.msra.mxu0 %v1663
        %1686 = vmatprep.subr.bf16.mxu0 0
        %1687 = vmatpush2.bf16.msra.mxu0 0
        %1688 = vmatprep.subr.bf16.mxu0 0
        %1689 = vmatpush2.bf16.msra.mxu0 0
        %1690 = vmatprep.subr.bf16.mxu0 0
        %1691 = vmatpush2.bf16.msra.mxu0 0
        %1692 = vmatprep.subr.bf16.mxu0 0
        %1693 = vmatpush2.bf16.msra.mxu0 0
        %1694 = vmatprep.subr.bf16.mxu0 0
        %1695 = vmatpush2.bf16.msra.mxu0 0
        %1696 = vmatprep.subr.bf16.mxu0 0
        %1697 = vmatpush2.bf16.msra.mxu0 0
        %1698 = vmatprep.subr.bf16.mxu0 0
        %1699 = vmatpush2.bf16.msra.mxu0 0
        %1700 = vmatprep.subr.bf16.mxu0 0
        %1701 = vmatpush2.bf16.msra.mxu0 0
        %1702 = vmatprep.mubr.bf16.mxu0 0
        %1703 = vmatmul.mubr.bf16.gmra.mxu0 %v1668
        %v1704 = vpop.f32.mrf.mxu0
        %v1705 = vadd.f32 0.0, %v1704
        %v1706 = vpop.f32.mrf.mxu0
        %v1707 = vpop.f32.mrf.mxu0
        %v1708 = vpop.f32.mrf.mxu0
        %1709 = vdwg.mxu0
        %v1710 = vadd.f32 %v1580, %v1705
        %1711 = vst.msk [vmem:[%s606] sm:$0xff] %vm624, %v1710
        %s1712 = sand.u32 %s387, 1
        %s1713 = scalar_lea.sflag [#allocation4], %s1712
        %s1714 = sand.u32 %s387, 1
        %s1715 = smul.addr %s1714, 8
        %s1716 = scalar_lea.vmem [#allocation11], %s1715
        %s1717 = sand.u32 %s413, 1
        %s1718 = scalar_lea.sflag [#allocation13], %s1717
        %s1719 = sand.u32 %s413, 1
        %s1720 = smul.addr %s1719, 16
        %s1721 = scalar_lea.vmem [#allocation12], %s1720
        // Predicated region
        $region105: #{tpu_custom_call.1} parent=83 // pred_check
          %p1722 = pneg %p397
        $region106: #{tpu_custom_call.1} parent=83 // pred_check_branch
          %1724 = sbr.rel (%p1722) target = $region108
        $region107: #{tpu_custom_call.1} parent=83 // pred_region
          %s1726 = ssub.s32 128, 128
          %1727 = vsyncadd %s1713, %s1726
          %s1728 = smul.addr %s38, 128
          %s1729 = scalar_lea.hbm %s16, %s1728
          %s1731 = sshll.u32 %s1716, 4
          %s1732 = int_to_ptr.vmem [resolvable:$true] %s1731
          %1734 = dma.vmem_to_hbm [thread:$0]  %s1732, 128, %s1729, %s1713
        $region108: #{tpu_custom_call.1} parent=83 // pred_fallthru
          _
        // Predicated region
        $region109: #{tpu_custom_call.1} parent=83 // pred_check
          %p1735 = pneg %p423
        $region110: #{tpu_custom_call.1} parent=83 // pred_check_branch
          %1737 = sbr.rel (%p1735) target = $region112
        $region111: #{tpu_custom_call.1} parent=83 // pred_region
          %s1739 = ssub.s32 256, 256
          %1740 = vsyncadd %s1718, %s1739
          %s1741 = smul.addr %s38, 4
          %s1742 = smul.addr %s1741, 64
          %s1743 = scalar_lea.hbm %s17, %s1742
          %s1744 = sshll.u32 %s1721, 4
          %s1745 = int_to_ptr.vmem [resolvable:$true] %s1744
          %1750 = dma.vmem_to_hbm [thread:$0]  %s1745, 256, %s1743, %s1718, 64, 64, 4
        $region112: #{tpu_custom_call.1} parent=83 // pred_fallthru
          _
      $region84: #{tpu_custom_call.1} parent=5 // pred_fallthru
        _
      %p1751 = scmp.le.s32.totalorder 2, %s33
      // Predicated region
      $region113: #{tpu_custom_call.1} parent=5 // pred_check
        %p1752 = pneg %p1751
      $region114: #{tpu_custom_call.1} parent=5 // pred_check_branch
        %1754 = sbr.rel (%p1752) target = $region116
      $region115: #{tpu_custom_call.1} parent=5 // pred_region
        %s1755 = ssub.s32 %s33, 2
        // Predicated region
        $region117: #{tpu_custom_call.1} parent=115 // pred_check
          %p1756 = pneg %p403
        $region118: #{tpu_custom_call.1} parent=115 // pred_check_branch
          %1758 = sbr.rel (%p1756) target = $region120
        $region119: #{tpu_custom_call.1} parent=115 // pred_region
          %s1759 = sand.u32 %s388, 1
          %s1760 = scalar_lea.sflag [#allocation4], %s1759
          %s1761 = sand.u32 %s388, 1
          %s1762 = smul.addr %s1761, 8
          %s1763 = scalar_lea.vmem [#allocation11], %s1762
          %1764 = dma.done %s1760, 128
        $region120: #{tpu_custom_call.1} parent=115 // pred_fallthru
          _
        // Predicated region
        $region121: #{tpu_custom_call.1} parent=115 // pred_check
          %p1765 = pneg %p429
        $region122: #{tpu_custom_call.1} parent=115 // pred_check_branch
          %1767 = sbr.rel (%p1765) target = $region124
        $region123: #{tpu_custom_call.1} parent=115 // pred_region
          %s1768 = sand.u32 %s414, 1
          %s1769 = scalar_lea.sflag [#allocation13], %s1768
          %s1770 = sand.u32 %s414, 1
          %s1771 = smul.addr %s1770, 16
          %s1772 = scalar_lea.vmem [#allocation12], %s1771
          %1773 = dma.done %s1769, 256
        $region124: #{tpu_custom_call.1} parent=115 // pred_fallthru
          _
      $region116: #{tpu_custom_call.1} parent=5 // pred_fallthru
        _
    $region6: #{tpu_custom_call.1} parent=1 // loop_footer
      %s37 = sadd.s32 1, %s33
    $region7: #{tpu_custom_call.1} parent=1 // loop_footer_branch
      %32 = sbr.rel target = $region3
    $region8: #{tpu_custom_call.1} parent=1 // loop_exit
      _
    %1774 = vsyncpa [#allocation3], 1
    %s1775 = scalar_lea.sflag [#allocation3], 1
    %1776 = vsyncpa %s1775, 1
    %1777 = vsyncpa [#allocation6], 1
    %1778 = vsyncpa [#allocation9], 1
    %1779 = vsyncpa [#allocation4], 1
    %s1780 = scalar_lea.sflag [#allocation4], 1
    %1781 = vsyncpa %s1780, 1
    %1782 = vsyncpa [#allocation13], 1
    %s1783 = scalar_lea.sflag [#allocation13], 1
    %1784 = vsyncpa %s1783, 1

// kernel: tpu_custom_call.1
$region0: #{tpu_custom_call.1}
  #allocation0 [shape = 'u32[]', space=smem, size = 0x4, offset = 0x4, fixed_abs, tag = 'smem constant byte address 0x4 - core index']
  #allocation1 [shape = 'u32[144,128]{1,0:T(1,128)}', space=vmem, size = 0x12000, scoped, tag = 'internal scratch']
  %s0 = inlined_call_operand.vmem [shape: f32[16,32], index: 0, kind: input, shape index: {}]
  %s1 = inlined_call_operand.hbm [shape: f32[8,32], index: 1, kind: input, shape index: {}]
  %s2 = inlined_call_operand.vmem [shape: bf16[32,128], index: 2, kind: input, shape index: {}]
  %s3 = inlined_call_operand.hbm [shape: f32[1,128], index: 3, kind: input, shape index: {}]
  %s4 = inlined_call_operand.vmem [shape: bf16[32,128], index: 4, kind: input, shape index: {}]
  %s5 = inlined_call_operand.hbm [shape: f32[1,128], index: 5, kind: input, shape index: {}]
  %s6 = inlined_call_operand.vmem [shape: bf16[32,128], index: 6, kind: input, shape index: {}]
  %s7 = inlined_call_operand.hbm [shape: f32[1,128], index: 7, kind: input, shape index: {}]
  %s8 = inlined_call_operand.vmem [shape: bf16[128,32], index: 8, kind: input, shape index: {}]
  %s9 = inlined_call_operand.hbm [shape: f32[1,32], index: 9, kind: input, shape index: {}]
  %s10 = inlined_call_operand.vmem [shape: f32[1,32], index: 10, kind: input, shape index: {}]
  %s11 = inlined_call_operand.vmem [shape: f32[1,32], index: 11, kind: input, shape index: {}]
  %s12 = inlined_call_operand.vmem [shape: f32[1,32], index: 12, kind: input, shape index: {}]
  %s13 = inlined_call_operand.vmem [shape: f32[1,32], index: 13, kind: input, shape index: {}]
  %s14 = inlined_call_operand.vmem [shape: bf16[32,32], index: 14, kind: input, shape index: {}]
  %s15 = inlined_call_operand.vmem [shape: bf16[32,32], index: 15, kind: input, shape index: {}]
  %s16 = inlined_call_operand.hbm [shape: f32[16,32], index: 16, kind: output, shape index: {0}]
  %s17 = inlined_call_operand.hbm [shape: bf16[2,4,8,8], index: 17, kind: output, shape index: {1}]
  %18 = xla_tuple %s16, %s17
  %s19 = sld [smem:[#allocation0]]
  $region125: #{tpu_custom_call.1} parent=0
    _
  %s21 = ssub.s32 1, %s19
  %s22 = scalar_select 0, %s21, %s19
  $region1: #{tpu_custom_call.1} parent=0
    #allocation2 [shape = 'u8[4096]{0}', space=vmem, size = 0x1000, scoped, tag = 'input window, operand 1, single buffered']
    #allocation3 [shape = 's32[2]{0}', space=sflag, size = 0x8, scoped, tag = 'scoped memory for tpu_custom_call.1']
    #allocation4 [shape = 's32[2]{0}', space=sflag, size = 0x8, scoped, tag = 'scoped memory for tpu_custom_call.1']
    #allocation5 [shape = 'u8[512]{0}', space=vmem, size = 0x400, scoped, tag = 'input window, operand 3, single buffered']
    #allocation6 [shape = 's32[1]{0}', space=sflag, size = 0x4, scoped, tag = 'scoped memory for tpu_custom_call.1']
    #allocation7 [shape = 'u8[512]{0}', space=vmem, size = 0x400, scoped, tag = 'input window, operand 5, single buffered']
    #allocation8 [shape = 'u8[512]{0}', space=vmem, size = 0x400, scoped, tag = 'input window, operand 7, single buffered']
    #allocation9 [shape = 's32[1]{0}', space=sflag, size = 0x4, scoped, tag = 'scoped memory for tpu_custom_call.1']
    #allocation10 [shape = 'u8[512]{0}', space=vmem, size = 0x400, scoped, tag = 'input window, operand 9, single buffered']
    #allocation11 [shape = 'u8[8192]{0}', space=vmem, size = 0x2000, scoped, tag = 'output window, operand 0']
    #allocation12 [shape = 'u8[16384]{0}', space=vmem, size = 0x4000, scoped, tag = 'output window, operand 1']
    #allocation13 [shape = 's32[2]{0}', space=sflag, size = 0x8, scoped, tag = 'scoped memory for tpu_custom_call.1']
    %23 = vsyncpa [#allocation3], 0
    %24 = vsyncpa [#allocation6], 0
    %25 = vsyncpa [#allocation9], 0
    %26 = vsyncpa [#allocation4], 0
    %s27 = scalar_lea.sflag [#allocation4], 1
    %28 = vsyncpa %s27, 0
    %29 = vsyncpa [#allocation13], 0
    %s30 = scalar_lea.sflag [#allocation13], 1
    %31 = vsyncpa %s30, 0
    loop: start=0, step=1, limit=4
    $region2: #{tpu_custom_call.1} parent=1 // loop_pre_header
      _
    $region3: #{tpu_custom_call.1} parent=1 // loop_header
      %s33 = sphi 0, %s37
      %p34 = scmp.ge.s32.totalorder %s33, 4
      %s43 = sphi 0, %s45
      %s46 = sphi 0, %s43
      %s47 = sphi 0, %s46
      %s63 = sphi 0, %s47
      %s67 = sphi 0, %s67
      %s69 = sphi 0, %s67
      %s70 = sphi 0, %s69
      %s84 = sphi 0, %s70
      %s88 = sphi 0, %s88
      %s90 = sphi 0, %s88
      %s91 = sphi 0, %s90
      %s105 = sphi 0, %s91
      %s109 = sphi 0, %s109
      %s111 = sphi 0, %s109
      %s112 = sphi 0, %s111
      %s126 = sphi 0, %s112
      %s130 = sphi 0, %s130
      %s132 = sphi 0, %s130
      %s133 = sphi 0, %s132
      %s147 = sphi 0, %s133
      %s151 = sphi 0, %s151
      %s153 = sphi 0, %s151
      %s154 = sphi 0, %s153
      %s168 = sphi 0, %s154
      %s172 = sphi 0, %s172
      %s174 = sphi 0, %s172
      %s175 = sphi 0, %s174
      %s189 = sphi 0, %s175
      %s193 = sphi 0, %s193
      %s195 = sphi 0, %s193
      %s196 = sphi 0, %s195
      %s210 = sphi 0, %s196
      %s214 = sphi 0, %s214
      %s216 = sphi 0, %s214
      %s217 = sphi 0, %s216
      %s231 = sphi 0, %s217
      %s235 = sphi 0, %s235
      %s237 = sphi 0, %s235
      %s238 = sphi 0, %s237
      %s252 = sphi 0, %s238
      %s256 = sphi 0, %s256
      %s258 = sphi 0, %s256
      %s259 = sphi 0, %s258
      %s273 = sphi 0, %s259
      %s277 = sphi 0, %s277
      %s279 = sphi 0, %s277
      %s280 = sphi 0, %s279
      %s294 = sphi 0, %s280
      %s298 = sphi 0, %s298
      %s300 = sphi 0, %s298
      %s301 = sphi 0, %s300
      %s315 = sphi 0, %s301
      %s319 = sphi 0, %s319
      %s321 = sphi 0, %s319
      %s322 = sphi 0, %s321
      %s336 = sphi 0, %s322
      %s340 = sphi 0, %s340
      %s342 = sphi 0, %s340
      %s343 = sphi 0, %s342
      %s357 = sphi 0, %s343
      %s361 = sphi 0, %s361
      %s363 = sphi 0, %s361
      %s364 = sphi 0, %s363
      %s378 = sphi 0, %s364
      %s384 = sphi 0, %s386
      %s387 = sphi 0, %s384
      %s388 = sphi 0, %s387
      %s404 = sphi 0, %s388
      %s410 = sphi 0, %s412
      %s413 = sphi 0, %s410
      %s414 = sphi 0, %s413
      %s430 = sphi 0, %s414
    $region4: #{tpu_custom_call.1} parent=1 // loop_header_branch
      %36 = sbr.rel (%p34) target = $region8
    $region5: #{tpu_custom_call.1} parent=1 // loop_body
      %s38 = ssub.s32 %s33, 1
      %s39 = ssub.s32 %s33, 2
      %s40 = sadd.s32 %s33, 1
      %s41 = ssub.s32 %s33, %s40
      %p42 = scmp.eq.s32.totalorder %s41, 0
      %s44 = sadd.s32 %s43, 1
      %s45 = scalar_select %p42, %s43, %s44
      %p48 = pneg %p42
      %p49 = scmp.eq.s32.totalorder %s33, 1
      %p50 = por %p48, %p49
      %p51 = scmp.ne.s32.totalorder %s43, %s46
      %p52 = scmp.eq.s32.totalorder %s33, 0
      %p53 = por %p51, %p52
      %p54 = scmp.ne.s32.totalorder %s43, %s46
      %p55 = scmp.eq.s32.totalorder %s38, 1
      %p56 = por %p54, %p55
      %p57 = scmp.ne.s32.totalorder %s46, %s47
      %p58 = scmp.eq.s32.totalorder %s38, 0
      %p59 = por %p57, %p58
      %p60 = scmp.ne.s32.totalorder %s46, %s47
      %p61 = scmp.eq.s32.totalorder %s39, 1
      %p62 = por %p60, %p61
      %p64 = scmp.ne.s32.totalorder %s47, %s63
      %p65 = scmp.eq.s32.totalorder %s39, 0
      %p66 = por %p64, %p65
      %s68 = sadd.s32 %s67, 1
      %p71 = scmp.eq.s32.totalorder %s33, 1
      %p72 = scmp.ne.s32.totalorder %s67, %s69
      %p73 = scmp.eq.s32.totalorder %s33, 0
      %p74 = por %p72, %p73
      %p75 = scmp.ne.s32.totalorder %s67, %s69
      %p76 = scmp.eq.s32.totalorder %s38, 1
      %p77 = por %p75, %p76
      %p78 = scmp.ne.s32.totalorder %s69, %s70
      %p79 = scmp.eq.s32.totalorder %s38, 0
      %p80 = por %p78, %p79
      %p81 = scmp.ne.s32.totalorder %s69, %s70
      %p82 = scmp.eq.s32.totalorder %s39, 1
      %p83 = por %p81, %p82
      %p85 = scmp.ne.s32.totalorder %s70, %s84
      %p86 = scmp.eq.s32.totalorder %s39, 0
      %p87 = por %p85, %p86
      %s89 = sadd.s32 %s88, 1
      %p92 = scmp.eq.s32.totalorder %s33, 1
      %p93 = scmp.ne.s32.totalorder %s88, %s90
      %p94 = scmp.eq.s32.totalorder %s33, 0
      %p95 = por %p93, %p94
      %p96 = scmp.ne.s32.totalorder %s88, %s90
      %p97 = scmp.eq.s32.totalorder %s38, 1
      %p98 = por %p96, %p97
      %p99 = scmp.ne.s32.totalorder %s90, %s91
      %p100 = scmp.eq.s32.totalorder %s38, 0
      %p101 = por %p99, %p100
      %p102 = scmp.ne.s32.totalorder %s90, %s91
      %p103 = scmp.eq.s32.totalorder %s39, 1
      %p104 = por %p102, %p103
      %p106 = scmp.ne.s32.totalorder %s91, %s105
      %p107 = scmp.eq.s32.totalorder %s39, 0
      %p108 = por %p106, %p107
      %s110 = sadd.s32 %s109, 1
      %p113 = scmp.eq.s32.totalorder %s33, 1
      %p114 = scmp.ne.s32.totalorder %s109, %s111
      %p115 = scmp.eq.s32.totalorder %s33, 0
      %p116 = por %p114, %p115
      %p117 = scmp.ne.s32.totalorder %s109, %s111
      %p118 = scmp.eq.s32.totalorder %s38, 1
      %p119 = por %p117, %p118
      %p120 = scmp.ne.s32.totalorder %s111, %s112
      %p121 = scmp.eq.s32.totalorder %s38, 0
      %p122 = por %p120, %p121
      %p123 = scmp.ne.s32.totalorder %s111, %s112
      %p124 = scmp.eq.s32.totalorder %s39, 1
      %p125 = por %p123, %p124
      %p127 = scmp.ne.s32.totalorder %s112, %s126
      %p128 = scmp.eq.s32.totalorder %s39, 0
      %p129 = por %p127, %p128
      %s131 = sadd.s32 %s130, 1
      %p134 = scmp.eq.s32.totalorder %s33, 1
      %p135 = scmp.ne.s32.totalorder %s130, %s132
      %p136 = scmp.eq.s32.totalorder %s33, 0
      %p137 = por %p135, %p136
      %p138 = scmp.ne.s32.totalorder %s130, %s132
      %p139 = scmp.eq.s32.totalorder %s38, 1
      %p140 = por %p138, %p139
      %p141 = scmp.ne.s32.totalorder %s132, %s133
      %p142 = scmp.eq.s32.totalorder %s38, 0
      %p143 = por %p141, %p142
      %p144 = scmp.ne.s32.totalorder %s132, %s133
      %p145 = scmp.eq.s32.totalorder %s39, 1
      %p146 = por %p144, %p145
      %p148 = scmp.ne.s32.totalorder %s133, %s147
      %p149 = scmp.eq.s32.totalorder %s39, 0
      %p150 = por %p148, %p149
      %s152 = sadd.s32 %s151, 1
      %p155 = scmp.eq.s32.totalorder %s33, 1
      %p156 = scmp.ne.s32.totalorder %s151, %s153
      %p157 = scmp.eq.s32.totalorder %s33, 0
      %p158 = por %p156, %p157
      %p159 = scmp.ne.s32.totalorder %s151, %s153
      %p160 = scmp.eq.s32.totalorder %s38, 1
      %p161 = por %p159, %p160
      %p162 = scmp.ne.s32.totalorder %s153, %s154
      %p163 = scmp.eq.s32.totalorder %s38, 0
      %p164 = por %p162, %p163
      %p165 = scmp.ne.s32.totalorder %s153, %s154
      %p166 = scmp.eq.s32.totalorder %s39, 1
      %p167 = por %p165, %p166
      %p169 = scmp.ne.s32.totalorder %s154, %s168
      %p170 = scmp.eq.s32.totalorder %s39, 0
      %p171 = por %p169, %p170
      %s173 = sadd.s32 %s172, 1
      %p176 = scmp.eq.s32.totalorder %s33, 1
      %p177 = scmp.ne.s32.totalorder %s172, %s174
      %p178 = scmp.eq.s32.totalorder %s33, 0
      %p179 = por %p177, %p178
      %p180 = scmp.ne.s32.totalorder %s172, %s174
      %p181 = scmp.eq.s32.totalorder %s38, 1
      %p182 = por %p180, %p181
      %p183 = scmp.ne.s32.totalorder %s174, %s175
      %p184 = scmp.eq.s32.totalorder %s38, 0
      %p185 = por %p183, %p184
      %p186 = scmp.ne.s32.totalorder %s174, %s175
      %p187 = scmp.eq.s32.totalorder %s39, 1
      %p188 = por %p186, %p187
      %p190 = scmp.ne.s32.totalorder %s175, %s189
      %p191 = scmp.eq.s32.totalorder %s39, 0
      %p192 = por %p190, %p191
      %s194 = sadd.s32 %s193, 1
      %p197 = scmp.eq.s32.totalorder %s33, 1
      %p198 = scmp.ne.s32.totalorder %s193, %s195
      %p199 = scmp.eq.s32.totalorder %s33, 0
      %p200 = por %p198, %p199
      %p201 = scmp.ne.s32.totalorder %s193, %s195
      %p202 = scmp.eq.s32.totalorder %s38, 1
      %p203 = por %p201, %p202
      %p204 = scmp.ne.s32.totalorder %s195, %s196
      %p205 = scmp.eq.s32.totalorder %s38, 0
      %p206 = por %p204, %p205
      %p207 = scmp.ne.s32.totalorder %s195, %s196
      %p208 = scmp.eq.s32.totalorder %s39, 1
      %p209 = por %p207, %p208
      %p211 = scmp.ne.s32.totalorder %s196, %s210
      %p212 = scmp.eq.s32.totalorder %s39, 0
      %p213 = por %p211, %p212
      %s215 = sadd.s32 %s214, 1
      %p218 = scmp.eq.s32.totalorder %s33, 1
      %p219 = scmp.ne.s32.totalorder %s214, %s216
      %p220 = scmp.eq.s32.totalorder %s33, 0
      %p221 = por %p219, %p220
      %p222 = scmp.ne.s32.totalorder %s214, %s216
      %p223 = scmp.eq.s32.totalorder %s38, 1
      %p224 = por %p222, %p223
      %p225 = scmp.ne.s32.totalorder %s216, %s217
      %p226 = scmp.eq.s32.totalorder %s38, 0
      %p227 = por %p225, %p226
      %p228 = scmp.ne.s32.totalorder %s216, %s217
      %p229 = scmp.eq.s32.totalorder %s39, 1
      %p230 = por %p228, %p229
      %p232 = scmp.ne.s32.totalorder %s217, %s231
      %p233 = scmp.eq.s32.totalorder %s39, 0
      %p234 = por %p232, %p233
      %s236 = sadd.s32 %s235, 1
      %p239 = scmp.eq.s32.totalorder %s33, 1
      %p240 = scmp.ne.s32.totalorder %s235, %s237
      %p241 = scmp.eq.s32.totalorder %s33, 0
      %p242 = por %p240, %p241
      %p243 = scmp.ne.s32.totalorder %s235, %s237
      %p244 = scmp.eq.s32.totalorder %s38, 1
      %p245 = por %p243, %p244
      %p246 = scmp.ne.s32.totalorder %s237, %s238
      %p247 = scmp.eq.s32.totalorder %s38, 0
      %p248 = por %p246, %p247
      %p249 = scmp.ne.s32.totalorder %s237, %s238
      %p250 = scmp.eq.s32.totalorder %s39, 1
      %p251 = por %p249, %p250
      %p253 = scmp.ne.s32.totalorder %s238, %s252
      %p254 = scmp.eq.s32.totalorder %s39, 0
      %p255 = por %p253, %p254
      %s257 = sadd.s32 %s256, 1
      %p260 = scmp.eq.s32.totalorder %s33, 1
      %p261 = scmp.ne.s32.totalorder %s256, %s258
      %p262 = scmp.eq.s32.totalorder %s33, 0
      %p263 = por %p261, %p262
      %p264 = scmp.ne.s32.totalorder %s256, %s258
      %p265 = scmp.eq.s32.totalorder %s38, 1
      %p266 = por %p264, %p265
      %p267 = scmp.ne.s32.totalorder %s258, %s259
      %p268 = scmp.eq.s32.totalorder %s38, 0
      %p269 = por %p267, %p268
      %p270 = scmp.ne.s32.totalorder %s258, %s259
      %p271 = scmp.eq.s32.totalorder %s39, 1
      %p272 = por %p270, %p271
      %p274 = scmp.ne.s32.totalorder %s259, %s273
      %p275 = scmp.eq.s32.totalorder %s39, 0
      %p276 = por %p274, %p275
      %s278 = sadd.s32 %s277, 1
      %p281 = scmp.eq.s32.totalorder %s33, 1
      %p282 = scmp.ne.s32.totalorder %s277, %s279
      %p283 = scmp.eq.s32.totalorder %s33, 0
      %p284 = por %p282, %p283
      %p285 = scmp.ne.s32.totalorder %s277, %s279
      %p286 = scmp.eq.s32.totalorder %s38, 1
      %p287 = por %p285, %p286
      %p288 = scmp.ne.s32.totalorder %s279, %s280
      %p289 = scmp.eq.s32.totalorder %s38, 0
      %p290 = por %p288, %p289
      %p291 = scmp.ne.s32.totalorder %s279, %s280
      %p292 = scmp.eq.s32.totalorder %s39, 1
      %p293 = por %p291, %p292
      %p295 = scmp.ne.s32.totalorder %s280, %s294
      %p296 = scmp.eq.s32.totalorder %s39, 0
      %p297 = por %p295, %p296
      %s299 = sadd.s32 %s298, 1
      %p302 = scmp.eq.s32.totalorder %s33, 1
      %p303 = scmp.ne.s32.totalorder %s298, %s300
      %p304 = scmp.eq.s32.totalorder %s33, 0
      %p305 = por %p303, %p304
      %p306 = scmp.ne.s32.totalorder %s298, %s300
      %p307 = scmp.eq.s32.totalorder %s38, 1
      %p308 = por %p306, %p307
      %p309 = scmp.ne.s32.totalorder %s300, %s301
      %p310 = scmp.eq.s32.totalorder %s38, 0
      %p311 = por %p309, %p310
      %p312 = scmp.ne.s32.totalorder %s300, %s301
      %p313 = scmp.eq.s32.totalorder %s39, 1
      %p314 = por %p312, %p313
      %p316 = scmp.ne.s32.totalorder %s301, %s315
      %p317 = scmp.eq.s32.totalorder %s39, 0
      %p318 = por %p316, %p317
      %s320 = sadd.s32 %s319, 1
      %p323 = scmp.eq.s32.totalorder %s33, 1
      %p324 = scmp.ne.s32.totalorder %s319, %s321
      %p325 = scmp.eq.s32.totalorder %s33, 0
      %p326 = por %p324, %p325
      %p327 = scmp.ne.s32.totalorder %s319, %s321
      %p328 = scmp.eq.s32.totalorder %s38, 1
      %p329 = por %p327, %p328
      %p330 = scmp.ne.s32.totalorder %s321, %s322
      %p331 = scmp.eq.s32.totalorder %s38, 0
      %p332 = por %p330, %p331
      %p333 = scmp.ne.s32.totalorder %s321, %s322
      %p334 = scmp.eq.s32.totalorder %s39, 1
      %p335 = por %p333, %p334
      %p337 = scmp.ne.s32.totalorder %s322, %s336
      %p338 = scmp.eq.s32.totalorder %s39, 0
      %p339 = por %p337, %p338
      %s341 = sadd.s32 %s340, 1
      %p344 = scmp.eq.s32.totalorder %s33, 1
      %p345 = scmp.ne.s32.totalorder %s340, %s342
      %p346 = scmp.eq.s32.totalorder %s33, 0
      %p347 = por %p345, %p346
      %p348 = scmp.ne.s32.totalorder %s340, %s342
      %p349 = scmp.eq.s32.totalorder %s38, 1
      %p350 = por %p348, %p349
      %p351 = scmp.ne.s32.totalorder %s342, %s343
      %p352 = scmp.eq.s32.totalorder %s38, 0
      %p353 = por %p351, %p352
      %p354 = scmp.ne.s32.totalorder %s342, %s343
      %p355 = scmp.eq.s32.totalorder %s39, 1
      %p356 = por %p354, %p355
      %p358 = scmp.ne.s32.totalorder %s343, %s357
      %p359 = scmp.eq.s32.totalorder %s39, 0
      %p360 = por %p358, %p359
      %s362 = sadd.s32 %s361, 1
      %p365 = scmp.eq.s32.totalorder %s33, 1
      %p366 = scmp.ne.s32.totalorder %s361, %s363
      %p367 = scmp.eq.s32.totalorder %s33, 0
      %p368 = por %p366, %p367
      %p369 = scmp.ne.s32.totalorder %s361, %s363
      %p370 = scmp.eq.s32.totalorder %s38, 1
      %p371 = por %p369, %p370
      %p372 = scmp.ne.s32.totalorder %s363, %s364
      %p373 = scmp.eq.s32.totalorder %s38, 0
      %p374 = por %p372, %p373
      %p375 = scmp.ne.s32.totalorder %s363, %s364
      %p376 = scmp.eq.s32.totalorder %s39, 1
      %p377 = por %p375, %p376
      %p379 = scmp.ne.s32.totalorder %s364, %s378
      %p380 = scmp.eq.s32.totalorder %s39, 0
      %p381 = por %p379, %p380
      %s382 = ssub.s32 %s33, %s40
      %p383 = scmp.eq.s32.totalorder %s382, 0
      %s385 = sadd.s32 %s384, 1
      %s386 = scalar_select %p383, %s384, %s385
      %p389 = pneg %p383
      %p390 = scmp.eq.s32.totalorder %s33, 1
      %p391 = por %p389, %p390
      %p392 = scmp.ne.s32.totalorder %s384, %s387
      %p393 = scmp.eq.s32.totalorder %s33, 0
      %p394 = por %p392, %p393
      %p395 = scmp.ne.s32.totalorder %s384, %s387
      %p396 = scmp.eq.s32.totalorder %s38, 1
      %p397 = por %p395, %p396
      %p398 = scmp.ne.s32.totalorder %s387, %s388
      %p399 = scmp.eq.s32.totalorder %s38, 0
      %p400 = por %p398, %p399
      %p401 = scmp.ne.s32.totalorder %s387, %s388
      %p402 = scmp.eq.s32.totalorder %s39, 1
      %p403 = por %p401, %p402
      %p405 = scmp.ne.s32.totalorder %s388, %s404
      %p406 = scmp.eq.s32.totalorder %s39, 0
      %p407 = por %p405, %p406
      %s408 = ssub.s32 %s33, %s40
      %p409 = scmp.eq.s32.totalorder %s408, 0
      %s411 = sadd.s32 %s410, 1
      %s412 = scalar_select %p409, %s410, %s411
      %p415 = pneg %p409
      %p416 = scmp.eq.s32.totalorder %s33, 1
      %p417 = por %p415, %p416
      %p418 = scmp.ne.s32.totalorder %s410, %s413
      %p419 = scmp.eq.s32.totalorder %s33, 0
      %p420 = por %p418, %p419
      %p421 = scmp.ne.s32.totalorder %s410, %s413
      %p422 = scmp.eq.s32.totalorder %s38, 1
      %p423 = por %p421, %p422
      %p424 = scmp.ne.s32.totalorder %s413, %s414
      %p425 = scmp.eq.s32.totalorder %s38, 0
      %p426 = por %p424, %p425
      %p427 = scmp.ne.s32.totalorder %s413, %s414
      %p428 = scmp.eq.s32.totalorder %s39, 1
      %p429 = por %p427, %p428
      %p431 = scmp.ne.s32.totalorder %s414, %s430
      %p432 = scmp.eq.s32.totalorder %s39, 0
      %p433 = por %p431, %p432
      %p434 = scmp.le.s32.totalorder 1, %s33
      %p435 = scmp.lt.s32.totalorder %s33, 3
      %p436 = pnand %p434, %p435
      %p437 = pneg %p436
      // Predicated region
      $region9: #{tpu_custom_call.1} parent=5 // pred_check
        _
      $region10: #{tpu_custom_call.1} parent=5 // pred_check_branch
        %439 = sbr.rel (%p436) target = $region12
      $region11: #{tpu_custom_call.1} parent=5 // pred_region
        %s440 = ssub.s32 %s33, 1
        // Predicated region
        $region13: #{tpu_custom_call.1} parent=11 // pred_check
          %p441 = pneg %p80
        $region14: #{tpu_custom_call.1} parent=11 // pred_check_branch
          %443 = sbr.rel (%p441) target = $region16
        $region15: #{tpu_custom_call.1} parent=11 // pred_region
          %s445 = ssub.s32 128, 128
          %446 = vsyncadd [#allocation3], %s445
          %s448 = sshll.u32 [#allocation2], 4
          %s449 = int_to_ptr.vmem [resolvable:$true] %s448
          %451 = dma.hbm_to_vmem [thread:$0]  %s1, 128, %s449, [#allocation3]
        $region16: #{tpu_custom_call.1} parent=11 // pred_fallthru
          _
        // Predicated region
        $region17: #{tpu_custom_call.1} parent=11 // pred_check
          %p452 = pneg %p101
        $region18: #{tpu_custom_call.1} parent=11 // pred_check_branch
          %454 = sbr.rel (%p452) target = $region20
        $region19: #{tpu_custom_call.1} parent=11 // pred_region
          _
        $region20: #{tpu_custom_call.1} parent=11 // pred_fallthru
          _
        // Predicated region
        $region21: #{tpu_custom_call.1} parent=11 // pred_check
          %p455 = pneg %p122
        $region22: #{tpu_custom_call.1} parent=11 // pred_check_branch
          %457 = sbr.rel (%p455) target = $region24
        $region23: #{tpu_custom_call.1} parent=11 // pred_region
          %s459 = ssub.s32 16, 16
          %460 = vsyncadd [#allocation6], %s459
          %s462 = sshll.u32 [#allocation5], 4
          %s463 = int_to_ptr.vmem [resolvable:$true] %s462
          %465 = dma.hbm_to_vmem [thread:$0]  %s3, 16, %s463, [#allocation6]
        $region24: #{tpu_custom_call.1} parent=11 // pred_fallthru
          _
        // Predicated region
        $region25: #{tpu_custom_call.1} parent=11 // pred_check
          %p466 = pneg %p143
        $region26: #{tpu_custom_call.1} parent=11 // pred_check_branch
          %468 = sbr.rel (%p466) target = $region28
        $region27: #{tpu_custom_call.1} parent=11 // pred_region
          _
        $region28: #{tpu_custom_call.1} parent=11 // pred_fallthru
          _
        // Predicated region
        $region29: #{tpu_custom_call.1} parent=11 // pred_check
          %p469 = pneg %p164
        $region30: #{tpu_custom_call.1} parent=11 // pred_check_branch
          %471 = sbr.rel (%p469) target = $region32
        $region31: #{tpu_custom_call.1} parent=11 // pred_region
          %s473 = ssub.s32 16, 16
          %474 = vsyncadd [#allocation6], %s473
          %s476 = sshll.u32 [#allocation7], 4
          %s477 = int_to_ptr.vmem [resolvable:$true] %s476
          %479 = dma.hbm_to_vmem [thread:$0]  %s5, 16, %s477, [#allocation6]
        $region32: #{tpu_custom_call.1} parent=11 // pred_fallthru
          _
        // Predicated region
        $region33: #{tpu_custom_call.1} parent=11 // pred_check
          %p480 = pneg %p185
        $region34: #{tpu_custom_call.1} parent=11 // pred_check_branch
          %482 = sbr.rel (%p480) target = $region36
        $region35: #{tpu_custom_call.1} parent=11 // pred_region
          _
        $region36: #{tpu_custom_call.1} parent=11 // pred_fallthru
          _
        // Predicated region
        $region37: #{tpu_custom_call.1} parent=11 // pred_check
          %p483 = pneg %p206
        $region38: #{tpu_custom_call.1} parent=11 // pred_check_branch
          %485 = sbr.rel (%p483) target = $region40
        $region39: #{tpu_custom_call.1} parent=11 // pred_region
          %s487 = ssub.s32 16, 16
          %488 = vsyncadd [#allocation9], %s487
          %s490 = sshll.u32 [#allocation8], 4
          %s491 = int_to_ptr.vmem [resolvable:$true] %s490
          %493 = dma.hbm_to_vmem [thread:$0]  %s7, 16, %s491, [#allocation9]
        $region40: #{tpu_custom_call.1} parent=11 // pred_fallthru
          _
        // Predicated region
        $region41: #{tpu_custom_call.1} parent=11 // pred_check
          %p494 = pneg %p227
        $region42: #{tpu_custom_call.1} parent=11 // pred_check_branch
          %496 = sbr.rel (%p494) target = $region44
        $region43: #{tpu_custom_call.1} parent=11 // pred_region
          _
        $region44: #{tpu_custom_call.1} parent=11 // pred_fallthru
          _
        // Predicated region
        $region45: #{tpu_custom_call.1} parent=11 // pred_check
          %p497 = pneg %p248
        $region46: #{tpu_custom_call.1} parent=11 // pred_check_branch
          %499 = sbr.rel (%p497) target = $region48
        $region47: #{tpu_custom_call.1} parent=11 // pred_region
          %s501 = ssub.s32 16, 16
          %502 = vsyncadd [#allocation9], %s501
          %s504 = sshll.u32 [#allocation10], 4
          %s505 = int_to_ptr.vmem [resolvable:$true] %s504
          %507 = dma.hbm_to_vmem [thread:$0]  %s9, 16, %s505, [#allocation9]
        $region48: #{tpu_custom_call.1} parent=11 // pred_fallthru
          _
        // Predicated region
        $region49: #{tpu_custom_call.1} parent=11 // pred_check
          %p508 = pneg %p269
        $region50: #{tpu_custom_call.1} parent=11 // pred_check_branch
          %510 = sbr.rel (%p508) target = $region52
        $region51: #{tpu_custom_call.1} parent=11 // pred_region
          _
        $region52: #{tpu_custom_call.1} parent=11 // pred_fallthru
          _
        // Predicated region
        $region53: #{tpu_custom_call.1} parent=11 // pred_check
          %p511 = pneg %p290
        $region54: #{tpu_custom_call.1} parent=11 // pred_check_branch
          %513 = sbr.rel (%p511) target = $region56
        $region55: #{tpu_custom_call.1} parent=11 // pred_region
          _
        $region56: #{tpu_custom_call.1} parent=11 // pred_fallthru
          _
        // Predicated region
        $region57: #{tpu_custom_call.1} parent=11 // pred_check
          %p514 = pneg %p311
        $region58: #{tpu_custom_call.1} parent=11 // pred_check_branch
          %516 = sbr.rel (%p514) target = $region60
        $region59: #{tpu_custom_call.1} parent=11 // pred_region
          _
        $region60: #{tpu_custom_call.1} parent=11 // pred_fallthru
          _
        // Predicated region
        $region61: #{tpu_custom_call.1} parent=11 // pred_check
          %p517 = pneg %p332
        $region62: #{tpu_custom_call.1} parent=11 // pred_check_branch
          %519 = sbr.rel (%p517) target = $region64
        $region63: #{tpu_custom_call.1} parent=11 // pred_region
          _
        $region64: #{tpu_custom_call.1} parent=11 // pred_fallthru
          _
        // Predicated region
        $region65: #{tpu_custom_call.1} parent=11 // pred_check
          %p520 = pneg %p353
        $region66: #{tpu_custom_call.1} parent=11 // pred_check_branch
          %522 = sbr.rel (%p520) target = $region68
        $region67: #{tpu_custom_call.1} parent=11 // pred_region
          _
        $region68: #{tpu_custom_call.1} parent=11 // pred_fallthru
          _
        // Predicated region
        $region69: #{tpu_custom_call.1} parent=11 // pred_check
          %p523 = pneg %p374
        $region70: #{tpu_custom_call.1} parent=11 // pred_check_branch
          %525 = sbr.rel (%p523) target = $region72
        $region71: #{tpu_custom_call.1} parent=11 // pred_region
          _
        $region72: #{tpu_custom_call.1} parent=11 // pred_fallthru
          _
      $region12: #{tpu_custom_call.1} parent=5 // pred_fallthru
        _
      %p526 = scmp.lt.s32.totalorder %s33, 2
      // Predicated region
      $region73: #{tpu_custom_call.1} parent=5 // pred_check
        %p527 = pneg %p526
      $region74: #{tpu_custom_call.1} parent=5 // pred_check_branch
        %529 = sbr.rel (%p527) target = $region76
      $region75: #{tpu_custom_call.1} parent=5 // pred_region
        // Predicated region
        $region77: #{tpu_custom_call.1} parent=75 // pred_check
          %p530 = pneg %p53
        $region78: #{tpu_custom_call.1} parent=75 // pred_check_branch
          %532 = sbr.rel (%p530) target = $region80
        $region79: #{tpu_custom_call.1} parent=75 // pred_region
          %p533 = scmp.lt.s32.totalorder %s33, 1
          %s534 = scalar_select %p533, %s33, 1
          %s535 = smul.addr %s534, 8
          %s536 = scalar_lea.vmem %s0, %s535
        $region80: #{tpu_custom_call.1} parent=75 // pred_fallthru
          _
      $region76: #{tpu_custom_call.1} parent=5 // pred_fallthru
        _
      %p537 = scmp.le.s32.totalorder 1, %s33
      %p538 = scmp.lt.s32.totalorder %s33, 3
      %p539 = pnand %p537, %p538
      %p540 = pneg %p539
      // Predicated region
      $region81: #{tpu_custom_call.1} parent=5 // pred_check
        _
      $region82: #{tpu_custom_call.1} parent=5 // pred_check_branch
        %542 = sbr.rel (%p539) target = $region84
      $region83: #{tpu_custom_call.1} parent=5 // pred_region
        %s543 = ssub.s32 %s33, 1
        // Predicated region
        $region85: #{tpu_custom_call.1} parent=83 // pred_check
          %p544 = pneg %p80
        $region86: #{tpu_custom_call.1} parent=83 // pred_check_branch
          %546 = sbr.rel (%p544) target = $region88
        $region87: #{tpu_custom_call.1} parent=83 // pred_region
          %547 = dma.done [#allocation3], 128
        $region88: #{tpu_custom_call.1} parent=83 // pred_fallthru
          _
        // Predicated region
        $region89: #{tpu_custom_call.1} parent=83 // pred_check
          %p548 = pneg %p122
        $region90: #{tpu_custom_call.1} parent=83 // pred_check_branch
          %550 = sbr.rel (%p548) target = $region92
        $region91: #{tpu_custom_call.1} parent=83 // pred_region
          %551 = dma.done [#allocation6], 16
        $region92: #{tpu_custom_call.1} parent=83 // pred_fallthru
          _
        // Predicated region
        $region93: #{tpu_custom_call.1} parent=83 // pred_check
          %p552 = pneg %p164
        $region94: #{tpu_custom_call.1} parent=83 // pred_check_branch
          %554 = sbr.rel (%p552) target = $region96
        $region95: #{tpu_custom_call.1} parent=83 // pred_region
          %555 = dma.done [#allocation6], 16
        $region96: #{tpu_custom_call.1} parent=83 // pred_fallthru
          _
        // Predicated region
        $region97: #{tpu_custom_call.1} parent=83 // pred_check
          %p556 = pneg %p206
        $region98: #{tpu_custom_call.1} parent=83 // pred_check_branch
          %558 = sbr.rel (%p556) target = $region100
        $region99: #{tpu_custom_call.1} parent=83 // pred_region
          %559 = dma.done [#allocation9], 16
        $region100: #{tpu_custom_call.1} parent=83 // pred_fallthru
          _
        // Predicated region
        $region101: #{tpu_custom_call.1} parent=83 // pred_check
          %p560 = pneg %p248
        $region102: #{tpu_custom_call.1} parent=83 // pred_check_branch
          %562 = sbr.rel (%p560) target = $region104
        $region103: #{tpu_custom_call.1} parent=83 // pred_region
          %563 = dma.done [#allocation9], 16
        $region104: #{tpu_custom_call.1} parent=83 // pred_fallthru
          _
        %p564 = scmp.lt.s32.totalorder %s38, 1
        %s565 = scalar_select %p564, %s38, 1
        %s566 = smul.addr %s565, 8
        %s567 = scalar_lea.vmem %s0, %s566
        %p568 = pneg %p59
        %p569 = pneg %p56
        %p570 = pneg %p80
        %p571 = pneg %p77
        %p572 = pneg %p101
        %p573 = pneg %p98
        %p574 = pneg %p122
        %p575 = pneg %p119
        %p576 = pneg %p143
        %p577 = pneg %p140
        %p578 = pneg %p164
        %p579 = pneg %p161
        %p580 = pneg %p185
        %p581 = pneg %p182
        %p582 = pneg %p206
        %p583 = pneg %p203
        %p584 = pneg %p227
        %p585 = pneg %p224
        %p586 = pneg %p248
        %p587 = pneg %p245
        %p588 = pneg %p269
        %p589 = pneg %p266
        %p590 = pneg %p290
        %p591 = pneg %p287
        %p592 = pneg %p311
        %p593 = pneg %p308
        %p594 = pneg %p332
        %p595 = pneg %p329
        %p596 = pneg %p353
        %p597 = pneg %p350
        %p598 = pneg %p374
        %p599 = pneg %p371
        %p600 = pneg %p400
        %p601 = pneg %p397
        %s602 = sand.u32 %s387, 1
        %s603 = scalar_lea.sflag [#allocation4], %s602
        %s604 = sand.u32 %s387, 1
        %s605 = smul.addr %s604, 8
        %s606 = scalar_lea.vmem [#allocation11], %s605
        %p607 = pneg %p426
        %p608 = pneg %p423
        %s609 = sand.u32 %s413, 1
        %s610 = scalar_lea.sflag [#allocation13], %s609
        %s611 = sand.u32 %s413, 1
        %s612 = smul.addr %s611, 16
        %s613 = scalar_lea.vmem [#allocation12], %s612
        %p614 = scmp.lt.s32.totalorder %s38, 1
        %s615 = scalar_select %p614, %s38, 1
        %s616 = smul.addr %s615, 8
        %s617 = scalar_lea.vmem %s0, %s616
        %v619 = vld [vmem:[%s617] sm:$0xff]
        %v620 = vld [vmem:[#allocation2] sm:$0xff]
        %v621 = vadd.f32 %v619, %v620
        %v622 = vld [vmem:[%s10] sm:$0x1]
        %v623 = vld [vmem:[%s11] sm:$0x1]
        %vm624 = vcmask 261120
        %v625 = vsel %vm624, %v621, 0.0
        %626 = vadd.xlane.f32.xlu0 %v625
        %v627 = vpop.xlane.xlu0 %626
        %v628 = vrcp.pop 32.0
        %v629 = vmul.f32 %v627, %v628
        %v630 = vsub.f32 %v621, %v629
        %v631 = vmul.f32 %v630, %v630
        %v632 = vsel %vm624, %v631, 0.0
        %633 = vadd.xlane.f32.xlu0 %v632
        %v634 = vpop.xlane.xlu0 %633
        %v635 = vmul.f32 %v634, %v628
        %v636 = vadd.f32 %v635, 1e-05
        %v637 = vrsqrt.pop %v636
        %v638 = vmul.f32 %v630, %v637
        %v640 = vlaneseq
        %v641 = vshrl.u32 %v640, 7
        %v642 = vsub.s32 0, %v641
        %v643 = vrot.slane %v622, %v642
        %v645 = vmul.f32 %v638, %v643
        %v647 = vlaneseq
        %v648 = vshrl.u32 %v647, 7
        %v649 = vsub.s32 0, %v648
        %v650 = vrot.slane %v623, %v649
        %v652 = vadd.f32 %v645, %v650
        %v653 = vpack.c.bf16 %v652, %v652
        %v654 = vld [vmem:[%s2] sm:$0xf]
        %v655 = vld [vmem:[%s2 + $0x4] sm:$0xf]
        %v656 = vld [vmem:[%s2 + $0x8] sm:$0xf]
        %v657 = vld [vmem:[%s2 + $0xc] sm:$0xf]
        %v658 = vld [vmem:[#allocation5] sm:$0x1]
        %v660 = vlaneseq
        %v661 = vshrl.u32 %v660, 7
        %v662 = vsub.s32 0, %v661
        %v663 = vrot.slane %v658, %v662
        %v669 = vunpack.c.l.b16 %v654
        %v670 = vunpack.c.l.b16 %v655
        %v671 = vunpack.c.l.b16 %v656
        %v672 = vunpack.c.l.b16 %v657
        %v673 = vpack.c.b16 %v670, %v669
        %v674 = vpack.c.b16 %v672, %v671
        %v678 = vsel %vm624, %v653, 0
        %680 = vmatprep.subr.bf16.mxu0 0
        %681 = vmatpush1.bf16.msra.mxu0 0
        %682 = vmatprep.subr.bf16.mxu0 0
        %683 = vmatpush1.bf16.msra.mxu0 0
        %684 = vmatprep.subr.bf16.mxu0 0
        %685 = vmatpush1.bf16.msra.mxu0 0
        %686 = vmatprep.subr.bf16.mxu0 0
        %687 = vmatpush1.bf16.msra.mxu0 0
        %688 = vmatprep.subr.bf16.mxu0 0
        %689 = vmatpush1.bf16.msra.mxu0 0
        %690 = vmatprep.subr.bf16.mxu0 0
        %691 = vmatpush1.bf16.msra.mxu0 0
        %692 = vmatprep.subr.bf16.mxu0 0
        %693 = vmatpush1.bf16.msra.mxu0 %v674
        %694 = vmatprep.subr.bf16.mxu0 0
        %695 = vmatpush1.bf16.msra.mxu0 %v673
        %696 = vmatprep.subr.bf16.mxu0 0
        %697 = vmatpush2.bf16.msra.mxu0 0
        %698 = vmatprep.subr.bf16.mxu0 0
        %699 = vmatpush2.bf16.msra.mxu0 0
        %700 = vmatprep.subr.bf16.mxu0 0
        %701 = vmatpush2.bf16.msra.mxu0 0
        %702 = vmatprep.subr.bf16.mxu0 0
        %703 = vmatpush2.bf16.msra.mxu0 0
        %704 = vmatprep.subr.bf16.mxu0 0
        %705 = vmatpush2.bf16.msra.mxu0 0
        %706 = vmatprep.subr.bf16.mxu0 0
        %707 = vmatpush2.bf16.msra.mxu0 0
        %708 = vmatprep.subr.bf16.mxu0 0
        %709 = vmatpush2.bf16.msra.mxu0 0
        %710 = vmatprep.subr.bf16.mxu0 0
        %711 = vmatpush2.bf16.msra.mxu0 0
        %712 = vmatprep.mubr.bf16.mxu0 0
        %713 = vmatmul.mubr.bf16.gmra.mxu0 %v678
        %v714 = vpop.f32.mrf.mxu0
        %v715 = vadd.f32 %v663, %v714
        %v716 = vpop.f32.mrf.mxu0
        %v717 = vpop.f32.mrf.mxu0
        %v718 = vpop.f32.mrf.mxu0
        %719 = vdwg.mxu0
        %v720 = vpack.c.bf16 %v715, %v715
        %v721 = vld [vmem:[%s4] sm:$0xf]
        %v722 = vld [vmem:[%s4 + $0x4] sm:$0xf]
        %v723 = vld [vmem:[%s4 + $0x8] sm:$0xf]
        %v724 = vld [vmem:[%s4 + $0xc] sm:$0xf]
        %v725 = vld [vmem:[#allocation7] sm:$0x1]
        %v727 = vlaneseq
        %v728 = vshrl.u32 %v727, 7
        %v729 = vsub.s32 0, %v728
        %v730 = vrot.slane %v725, %v729
        %v736 = vunpack.c.l.b16 %v721
        %v737 = vunpack.c.l.b16 %v722
        %v738 = vunpack.c.l.b16 %v723
        %v739 = vunpack.c.l.b16 %v724
        %v740 = vpack.c.b16 %v737, %v736
        %v741 = vpack.c.b16 %v739, %v738
        %744 = vmatprep.subr.bf16.mxu0 0
        %745 = vmatpush1.bf16.msra.mxu0 0
        %746 = vmatprep.subr.bf16.mxu0 0
        %747 = vmatpush1.bf16.msra.mxu0 0
        %748 = vmatprep.subr.bf16.mxu0 0
        %749 = vmatpush1.bf16.msra.mxu0 0
        %750 = vmatprep.subr.bf16.mxu0 0
        %751 = vmatpush1.bf16.msra.mxu0 0
        %752 = vmatprep.subr.bf16.mxu0 0
        %753 = vmatpush1.bf16.msra.mxu0 0
        %754 = vmatprep.subr.bf16.mxu0 0
        %755 = vmatpush1.bf16.msra.mxu0 0
        %756 = vmatprep.subr.bf16.mxu0 0
        %757 = vmatpush1.bf16.msra.mxu0 %v741
        %758 = vmatprep.subr.bf16.mxu0 0
        %759 = vmatpush1.bf16.msra.mxu0 %v740
        %760 = vmatprep.subr.bf16.mxu0 0
        %761 = vmatpush2.bf16.msra.mxu0 0
        %762 = vmatprep.subr.bf16.mxu0 0
        %763 = vmatpush2.bf16.msra.mxu0 0
        %764 = vmatprep.subr.bf16.mxu0 0
        %765 = vmatpush2.bf16.msra.mxu0 0
        %766 = vmatprep.subr.bf16.mxu0 0
        %767 = vmatpush2.bf16.msra.mxu0 0
        %768 = vmatprep.subr.bf16.mxu0 0
        %769 = vmatpush2.bf16.msra.mxu0 0
        %770 = vmatprep.subr.bf16.mxu0 0
        %771 = vmatpush2.bf16.msra.mxu0 0
        %772 = vmatprep.subr.bf16.mxu0 0
        %773 = vmatpush2.bf16.msra.mxu0 0
        %774 = vmatprep.subr.bf16.mxu0 0
        %775 = vmatpush2.bf16.msra.mxu0 0
        %776 = vmatprep.mubr.bf16.mxu0 0
        %777 = vmatmul.mubr.bf16.gmra.mxu0 %v678
        %v778 = vpop.f32.mrf.mxu0
        %v779 = vadd.f32 %v730, %v778
        %v780 = vpop.f32.mrf.mxu0
        %v781 = vpop.f32.mrf.mxu0
        %v782 = vpop.f32.mrf.mxu0
        %783 = vdwg.mxu0
        %v784 = vpack.c.bf16 %v779, %v779
        %v785 = vld [vmem:[%s6] sm:$0xf]
        %v786 = vld [vmem:[%s6 + $0x4] sm:$0xf]
        %v787 = vld [vmem:[%s6 + $0x8] sm:$0xf]
        %v788 = vld [vmem:[%s6 + $0xc] sm:$0xf]
        %v789 = vld [vmem:[#allocation8] sm:$0x1]
        %v791 = vlaneseq
        %v792 = vshrl.u32 %v791, 7
        %v793 = vsub.s32 0, %v792
        %v794 = vrot.slane %v789, %v793
        %v800 = vunpack.c.l.b16 %v785
        %v801 = vunpack.c.l.b16 %v786
        %v802 = vunpack.c.l.b16 %v787
        %v803 = vunpack.c.l.b16 %v788
        %v804 = vpack.c.b16 %v801, %v800
        %v805 = vpack.c.b16 %v803, %v802
        %808 = vmatprep.subr.bf16.mxu0 0
        %809 = vmatpush1.bf16.msra.mxu0 0
        %810 = vmatprep.subr.bf16.mxu0 0
        %811 = vmatpush1.bf16.msra.mxu0 0
        %812 = vmatprep.subr.bf16.mxu0 0
        %813 = vmatpush1.bf16.msra.mxu0 0
        %814 = vmatprep.subr.bf16.mxu0 0
        %815 = vmatpush1.bf16.msra.mxu0 0
        %816 = vmatprep.subr.bf16.mxu0 0
        %817 = vmatpush1.bf16.msra.mxu0 0
        %818 = vmatprep.subr.bf16.mxu0 0
        %819 = vmatpush1.bf16.msra.mxu0 0
        %820 = vmatprep.subr.bf16.mxu0 0
        %821 = vmatpush1.bf16.msra.mxu0 %v805
        %822 = vmatprep.subr.bf16.mxu0 0
        %823 = vmatpush1.bf16.msra.mxu0 %v804
        %824 = vmatprep.subr.bf16.mxu0 0
        %825 = vmatpush2.bf16.msra.mxu0 0
        %826 = vmatprep.subr.bf16.mxu0 0
        %827 = vmatpush2.bf16.msra.mxu0 0
        %828 = vmatprep.subr.bf16.mxu0 0
        %829 = vmatpush2.bf16.msra.mxu0 0
        %830 = vmatprep.subr.bf16.mxu0 0
        %831 = vmatpush2.bf16.msra.mxu0 0
        %832 = vmatprep.subr.bf16.mxu0 0
        %833 = vmatpush2.bf16.msra.mxu0 0
        %834 = vmatprep.subr.bf16.mxu0 0
        %835 = vmatpush2.bf16.msra.mxu0 0
        %836 = vmatprep.subr.bf16.mxu0 0
        %837 = vmatpush2.bf16.msra.mxu0 0
        %838 = vmatprep.subr.bf16.mxu0 0
        %839 = vmatpush2.bf16.msra.mxu0 0
        %840 = vmatprep.mubr.bf16.mxu0 0
        %841 = vmatmul.mubr.bf16.gmra.mxu0 %v678
        %v842 = vpop.f32.mrf.mxu0
        %v843 = vadd.f32 %v794, %v842
        %v844 = vpop.f32.mrf.mxu0
        %v845 = vpop.f32.mrf.mxu0
        %v846 = vpop.f32.mrf.mxu0
        %847 = vdwg.mxu0
        %v848 = vpack.c.bf16 %v843, %v843
        %v849 = vld [vmem:[#allocation10] sm:$0x1]
        %v851 = vlaneseq
        %v852 = vshrl.u32 %v851, 7
        %v853 = vsub.s32 0, %v852
        %v854 = vrot.slane %v849, %v853
        %v856 = vadd.f32 %v652, %v854
        %v858 = vsel %vm624, %v720, 0
        %v861 = vsel %vm624, %v784, 0
        %863 = vmatprep.subr.bf16.mxu0 0
        %864 = vmatpush1.bf16.xpose.msra.mxu0 0
        %865 = vmatprep.subr.bf16.mxu0 0
        %866 = vmatpush1.bf16.xpose.msra.mxu0 0
        %867 = vmatprep.subr.bf16.mxu0 0
        %868 = vmatpush1.bf16.xpose.msra.mxu0 0
        %869 = vmatprep.subr.bf16.mxu0 0
        %870 = vmatpush1.bf16.xpose.msra.mxu0 0
        %871 = vmatprep.subr.bf16.mxu0 0
        %872 = vmatpush1.bf16.xpose.msra.mxu0 0
        %873 = vmatprep.subr.bf16.mxu0 0
        %874 = vmatpush1.bf16.xpose.msra.mxu0 0
        %875 = vmatprep.subr.bf16.mxu0 0
        %876 = vmatpush1.bf16.xpose.msra.mxu0 0
        %877 = vmatprep.subr.bf16.mxu0 0
        %878 = vmatpush1.bf16.xpose.msra.mxu0 %v861
        %879 = vmatprep.subr.bf16.mxu0 0
        %880 = vmatpush2.bf16.xpose.msra.mxu0 0
        %881 = vmatprep.subr.bf16.mxu0 0
        %882 = vmatpush2.bf16.xpose.msra.mxu0 0
        %883 = vmatprep.subr.bf16.mxu0 0
        %884 = vmatpush2.bf16.xpose.msra.mxu0 0
        %885 = vmatprep.subr.bf16.mxu0 0
        %886 = vmatpush2.bf16.xpose.msra.mxu0 0
        %887 = vmatprep.subr.bf16.mxu0 0
        %888 = vmatpush2.bf16.xpose.msra.mxu0 0
        %889 = vmatprep.subr.bf16.mxu0 0
        %890 = vmatpush2.bf16.xpose.msra.mxu0 0
        %891 = vmatprep.subr.bf16.mxu0 0
        %892 = vmatpush2.bf16.xpose.msra.mxu0 0
        %893 = vmatprep.subr.bf16.mxu0 0
        %894 = vmatpush2.bf16.xpose.msra.mxu0 0
        %895 = vmatprep.mubr.bf16.mxu0 0
        %896 = vmatmul.mubr.bf16.gmra.mxu0 %v858
        %v897 = vpop.f32.mrf.mxu0
        %v898 = vadd.f32 0.0, %v897
        %v899 = vpop.f32.mrf.mxu0
        %v900 = vpop.f32.mrf.mxu0
        %v901 = vpop.f32.mrf.mxu0
        %902 = vdwg.mxu0
        %v903 = vmul.f32 %v898, 0.17677669
        %vm904 = vcmask 64512
        %v905 = vsel %vm904, %v903, -inf
        %906 = vmax.xlane.f32.xlu0 %v905
        %v907 = vpop.xlane.xlu0 %906
        %v908 = vsub.f32 %v903, %v907
        %v909 = vmul.f32 %v908, 1.442695
        %v910 = vpow.pop %v909
        %v911 = vsel %vm904, %v910, 0.0
        %912 = vadd.xlane.f32.xlu0 %v911
        %v913 = vpop.xlane.xlu0 %912
        %v914 = vrcp.pop %v913
        %v915 = vmul.f32 %v910, %v914
        %v916 = vpack.c.bf16 %v915, %v915
        %vm917 = vcmask 60416
        %918 = vst.msk [vmem:[%s613] sm:$0xf] %vm917, %v916
        %v920 = vsel %vm904, %v916, 0
        %vm922 = vcmask 1043456
        %v924 = vsel %vm922, %v848, 0
        %926 = vmatprep.subr.bf16.mxu0 0
        %927 = vmatpush1.bf16.msra.mxu0 0
        %928 = vmatprep.subr.bf16.mxu0 0
        %929 = vmatpush1.bf16.msra.mxu0 0
        %930 = vmatprep.subr.bf16.mxu0 0
        %931 = vmatpush1.bf16.msra.mxu0 0
        %932 = vmatprep.subr.bf16.mxu0 0
        %933 = vmatpush1.bf16.msra.mxu0 0
        %934 = vmatprep.subr.bf16.mxu0 0
        %935 = vmatpush1.bf16.msra.mxu0 0
        %936 = vmatprep.subr.bf16.mxu0 0
        %937 = vmatpush1.bf16.msra.mxu0 0
        %938 = vmatprep.subr.bf16.mxu0 0
        %939 = vmatpush1.bf16.msra.mxu0 0
        %940 = vmatprep.subr.bf16.mxu0 0
        %941 = vmatpush1.bf16.msra.mxu0 %v924
        %942 = vmatprep.subr.bf16.mxu0 0
        %943 = vmatpush2.bf16.msra.mxu0 0
        %944 = vmatprep.subr.bf16.mxu0 0
        %945 = vmatpush2.bf16.msra.mxu0 0
        %946 = vmatprep.subr.bf16.mxu0 0
        %947 = vmatpush2.bf16.msra.mxu0 0
        %948 = vmatprep.subr.bf16.mxu0 0
        %949 = vmatpush2.bf16.msra.mxu0 0
        %950 = vmatprep.subr.bf16.mxu0 0
        %951 = vmatpush2.bf16.msra.mxu0 0
        %952 = vmatprep.subr.bf16.mxu0 0
        %953 = vmatpush2.bf16.msra.mxu0 0
        %954 = vmatprep.subr.bf16.mxu0 0
        %955 = vmatpush2.bf16.msra.mxu0 0
        %956 = vmatprep.subr.bf16.mxu0 0
        %957 = vmatpush2.bf16.msra.mxu0 0
        %958 = vmatprep.mubr.bf16.mxu0 0
        %959 = vmatmul.mubr.bf16.gmra.mxu0 %v920
        %v960 = vpop.f32.mrf.mxu0
        %v961 = vadd.f32 0.0, %v960
        %v962 = vpop.f32.mrf.mxu0
        %v963 = vpop.f32.mrf.mxu0
        %v964 = vpop.f32.mrf.mxu0
        %965 = vdwg.mxu0
        %v966 = vpack.c.bf16 %v961, %v961
        %v967 = vld [vmem:[%s8] sm:$0xf]
        %v968 = vld [vmem:[%s8 + $0x4] sm:$0xf]
        %v969 = vld [vmem:[%s8 + $0x8] sm:$0xf]
        %v970 = vld [vmem:[%s8 + $0xc] sm:$0xf]
        %v975 = vunpack.c.l.b16 %v967
        %v976 = vunpack.c.l.b16 %v968
        %v977 = vunpack.c.l.b16 %v969
        %v978 = vunpack.c.l.b16 %v970
        %v979 = vpack.c.b16 %v976, %v975
        %v980 = vpack.c.b16 %v978, %v977
        %v984 = vsel %vm624, %v966, 0
        %986 = vmatprep.subr.bf16.mxu0 0
        %987 = vmatpush1.bf16.msra.mxu0 0
        %988 = vmatprep.subr.bf16.mxu0 0
        %989 = vmatpush1.bf16.msra.mxu0 0
        %990 = vmatprep.subr.bf16.mxu0 0
        %991 = vmatpush1.bf16.msra.mxu0 0
        %992 = vmatprep.subr.bf16.mxu0 0
        %993 = vmatpush1.bf16.msra.mxu0 0
        %994 = vmatprep.subr.bf16.mxu0 0
        %995 = vmatpush1.bf16.msra.mxu0 0
        %996 = vmatprep.subr.bf16.mxu0 0
        %997 = vmatpush1.bf16.msra.mxu0 0
        %998 = vmatprep.subr.bf16.mxu0 0
        %999 = vmatpush1.bf16.msra.mxu0 %v980
        %1000 = vmatprep.subr.bf16.mxu0 0
        %1001 = vmatpush1.bf16.msra.mxu0 %v979
        %1002 = vmatprep.subr.bf16.mxu0 0
        %1003 = vmatpush2.bf16.msra.mxu0 0
        %1004 = vmatprep.subr.bf16.mxu0 0
        %1005 = vmatpush2.bf16.msra.mxu0 0
        %1006 = vmatprep.subr.bf16.mxu0 0
        %1007 = vmatpush2.bf16.msra.mxu0 0
        %1008 = vmatprep.subr.bf16.mxu0 0
        %1009 = vmatpush2.bf16.msra.mxu0 0
        %1010 = vmatprep.subr.bf16.mxu0 0
        %1011 = vmatpush2.bf16.msra.mxu0 0
        %1012 = vmatprep.subr.bf16.mxu0 0
        %1013 = vmatpush2.bf16.msra.mxu0 0
        %1014 = vmatprep.subr.bf16.mxu0 0
        %1015 = vmatpush2.bf16.msra.mxu0 0
        %1016 = vmatprep.subr.bf16.mxu0 0
        %1017 = vmatpush2.bf16.msra.mxu0 0
        %1018 = vmatprep.mubr.bf16.mxu0 0
        %1019 = vmatmul.mubr.bf16.gmra.mxu0 %v984
        %v1020 = vpop.f32.mrf.mxu0
        %v1021 = vadd.f32 0.0, %v1020
        %v1022 = vpop.f32.mrf.mxu0
        %v1023 = vpop.f32.mrf.mxu0
        %v1024 = vpop.f32.mrf.mxu0
        %1025 = vdwg.mxu0
        %v1026 = vadd.f32 %v856, %v1021
        %1028 = vrot.lane.b32.xlu0 %v720, 96
        %v1029 = vpop.permute.xlu0 %1028
        %1031 = vrot.lane.b32.xlu0 %v784, 96
        %v1032 = vpop.permute.xlu0 %1031
        %v1034 = vsel %vm624, %v1029, 0
        %v1037 = vsel %vm624, %v1032, 0
        %1039 = vmatprep.subr.bf16.mxu0 0
        %1040 = vmatpush1.bf16.xpose.msra.mxu0 0
        %1041 = vmatprep.subr.bf16.mxu0 0
        %1042 = vmatpush1.bf16.xpose.msra.mxu0 0
        %1043 = vmatprep.subr.bf16.mxu0 0
        %1044 = vmatpush1.bf16.xpose.msra.mxu0 0
        %1045 = vmatprep.subr.bf16.mxu0 0
        %1046 = vmatpush1.bf16.xpose.msra.mxu0 0
        %1047 = vmatprep.subr.bf16.mxu0 0
        %1048 = vmatpush1.bf16.xpose.msra.mxu0 0
        %1049 = vmatprep.subr.bf16.mxu0 0
        %1050 = vmatpush1.bf16.xpose.msra.mxu0 0
        %1051 = vmatprep.subr.bf16.mxu0 0
        %1052 = vmatpush1.bf16.xpose.msra.mxu0 0
        %1053 = vmatprep.subr.bf16.mxu0 0
        %1054 = vmatpush1.bf16.xpose.msra.mxu0 %v1037
        %1055 = vmatprep.subr.bf16.mxu0 0
        %1056 = vmatpush2.bf16.xpose.msra.mxu0 0
        %1057 = vmatprep.subr.bf16.mxu0 0
        %1058 = vmatpush2.bf16.xpose.msra.mxu0 0
        %1059 = vmatprep.subr.bf16.mxu0 0
        %1060 = vmatpush2.bf16.xpose.msra.mxu0 0
        %1061 = vmatprep.subr.bf16.mxu0 0
        %1062 = vmatpush2.bf16.xpose.msra.mxu0 0
        %1063 = vmatprep.subr.bf16.mxu0 0
        %1064 = vmatpush2.bf16.xpose.msra.mxu0 0
        %1065 = vmatprep.subr.bf16.mxu0 0
        %1066 = vmatpush2.bf16.xpose.msra.mxu0 0
        %1067 = vmatprep.subr.bf16.mxu0 0
        %1068 = vmatpush2.bf16.xpose.msra.mxu0 0
        %1069 = vmatprep.subr.bf16.mxu0 0
        %1070 = vmatpush2.bf16.xpose.msra.mxu0 0
        %1071 = vmatprep.mubr.bf16.mxu0 0
        %1072 = vmatmul.mubr.bf16.gmra.mxu0 %v1034
        %v1073 = vpop.f32.mrf.mxu0
        %v1074 = vadd.f32 0.0, %v1073
        %v1075 = vpop.f32.mrf.mxu0
        %v1076 = vpop.f32.mrf.mxu0
        %v1077 = vpop.f32.mrf.mxu0
        %1078 = vdwg.mxu0
        %v1079 = vmul.f32 %v1074, 0.17677669
        %v1080 = vsel %vm904, %v1079, -inf
        %1081 = vmax.xlane.f32.xlu0 %v1080
        %v1082 = vpop.xlane.xlu0 %1081
        %v1083 = vsub.f32 %v1079, %v1082
        %v1084 = vmul.f32 %v1083, 1.442695
        %v1085 = vpow.pop %v1084
        %v1086 = vsel %vm904, %v1085, 0.0
        %1087 = vadd.xlane.f32.xlu0 %v1086
        %v1088 = vpop.xlane.xlu0 %1087
        %v1089 = vrcp.pop %v1088
        %v1090 = vmul.f32 %v1085, %v1089
        %v1091 = vpack.c.bf16 %v1090, %v1090
        %s1092 = scalar_lea.vmem %s613, 4 [#allocation12]
        %1093 = vst.msk [vmem:[%s1092] sm:$0xf] %vm917, %v1091
        %1095 = vrot.lane.b32.xlu0 %v848, 96
        %v1096 = vpop.permute.xlu0 %1095
        %v1098 = vsel %vm904, %v1091, 0
        %v1101 = vsel %vm922, %v1096, 0
        %1103 = vmatprep.subr.bf16.mxu0 0
        %1104 = vmatpush1.bf16.msra.mxu0 0
        %1105 = vmatprep.subr.bf16.mxu0 0
        %1106 = vmatpush1.bf16.msra.mxu0 0
        %1107 = vmatprep.subr.bf16.mxu0 0
        %1108 = vmatpush1.bf16.msra.mxu0 0
        %1109 = vmatprep.subr.bf16.mxu0 0
        %1110 = vmatpush1.bf16.msra.mxu0 0
        %1111 = vmatprep.subr.bf16.mxu0 0
        %1112 = vmatpush1.bf16.msra.mxu0 0
        %1113 = vmatprep.subr.bf16.mxu0 0
        %1114 = vmatpush1.bf16.msra.mxu0 0
        %1115 = vmatprep.subr.bf16.mxu0 0
        %1116 = vmatpush1.bf16.msra.mxu0 0
        %1117 = vmatprep.subr.bf16.mxu0 0
        %1118 = vmatpush1.bf16.msra.mxu0 %v1101
        %1119 = vmatprep.subr.bf16.mxu0 0
        %1120 = vmatpush2.bf16.msra.mxu0 0
        %1121 = vmatprep.subr.bf16.mxu0 0
        %1122 = vmatpush2.bf16.msra.mxu0 0
        %1123 = vmatprep.subr.bf16.mxu0 0
        %1124 = vmatpush2.bf16.msra.mxu0 0
        %1125 = vmatprep.subr.bf16.mxu0 0
        %1126 = vmatpush2.bf16.msra.mxu0 0
        %1127 = vmatprep.subr.bf16.mxu0 0
        %1128 = vmatpush2.bf16.msra.mxu0 0
        %1129 = vmatprep.subr.bf16.mxu0 0
        %1130 = vmatpush2.bf16.msra.mxu0 0
        %1131 = vmatprep.subr.bf16.mxu0 0
        %1132 = vmatpush2.bf16.msra.mxu0 0
        %1133 = vmatprep.subr.bf16.mxu0 0
        %1134 = vmatpush2.bf16.msra.mxu0 0
        %1135 = vmatprep.mubr.bf16.mxu0 0
        %1136 = vmatmul.mubr.bf16.gmra.mxu0 %v1098
        %v1137 = vpop.f32.mrf.mxu0
        %v1138 = vadd.f32 0.0, %v1137
        %v1139 = vpop.f32.mrf.mxu0
        %v1140 = vpop.f32.mrf.mxu0
        %v1141 = vpop.f32.mrf.mxu0
        %1142 = vdwg.mxu0
        %v1143 = vpack.c.bf16 %v1138, %v1138
        %v1144 = vld [vmem:[%s8 + $0x10] sm:$0xf]
        %v1145 = vld [vmem:[%s8 + $0x14] sm:$0xf]
        %v1146 = vld [vmem:[%s8 + $0x18] sm:$0xf]
        %v1147 = vld [vmem:[%s8 + $0x1c] sm:$0xf]
        %v1152 = vunpack.c.l.b16 %v1144
        %v1153 = vunpack.c.l.b16 %v1145
        %v1154 = vunpack.c.l.b16 %v1146
        %v1155 = vunpack.c.l.b16 %v1147
        %v1156 = vpack.c.b16 %v1153, %v1152
        %v1157 = vpack.c.b16 %v1155, %v1154
        %v1161 = vsel %vm624, %v1143, 0
        %1163 = vmatprep.subr.bf16.mxu0 0
        %1164 = vmatpush1.bf16.msra.mxu0 0
        %1165 = vmatprep.subr.bf16.mxu0 0
        %1166 = vmatpush1.bf16.msra.mxu0 0
        %1167 = vmatprep.subr.bf16.mxu0 0
        %1168 = vmatpush1.bf16.msra.mxu0 0
        %1169 = vmatprep.subr.bf16.mxu0 0
        %1170 = vmatpush1.bf16.msra.mxu0 0
        %1171 = vmatprep.subr.bf16.mxu0 0
        %1172 = vmatpush1.bf16.msra.mxu0 0
        %1173 = vmatprep.subr.bf16.mxu0 0
        %1174 = vmatpush1.bf16.msra.mxu0 0
        %1175 = vmatprep.subr.bf16.mxu0 0
        %1176 = vmatpush1.bf16.msra.mxu0 %v1157
        %1177 = vmatprep.subr.bf16.mxu0 0
        %1178 = vmatpush1.bf16.msra.mxu0 %v1156
        %1179 = vmatprep.subr.bf16.mxu0 0
        %1180 = vmatpush2.bf16.msra.mxu0 0
        %1181 = vmatprep.subr.bf16.mxu0 0
        %1182 = vmatpush2.bf16.msra.mxu0 0
        %1183 = vmatprep.subr.bf16.mxu0 0
        %1184 = vmatpush2.bf16.msra.mxu0 0
        %1185 = vmatprep.subr.bf16.mxu0 0
        %1186 = vmatpush2.bf16.msra.mxu0 0
        %1187 = vmatprep.subr.bf16.mxu0 0
        %1188 = vmatpush2.bf16.msra.mxu0 0
        %1189 = vmatprep.subr.bf16.mxu0 0
        %1190 = vmatpush2.bf16.msra.mxu0 0
        %1191 = vmatprep.subr.bf16.mxu0 0
        %1192 = vmatpush2.bf16.msra.mxu0 0
        %1193 = vmatprep.subr.bf16.mxu0 0
        %1194 = vmatpush2.bf16.msra.mxu0 0
        %1195 = vmatprep.mubr.bf16.mxu0 0
        %1196 = vmatmul.mubr.bf16.gmra.mxu0 %v1161
        %v1197 = vpop.f32.mrf.mxu0
        %v1198 = vadd.f32 0.0, %v1197
        %v1199 = vpop.f32.mrf.mxu0
        %v1200 = vpop.f32.mrf.mxu0
        %v1201 = vpop.f32.mrf.mxu0
        %1202 = vdwg.mxu0
        %v1203 = vadd.f32 %v1026, %v1198
        %1204 = vrot.lane.b32.xlu0 %v720, 64
        %v1205 = vpop.permute.xlu0 %1204
        %1206 = vrot.lane.b32.xlu0 %v784, 64
        %v1207 = vpop.permute.xlu0 %1206
        %v1209 = vsel %vm624, %v1205, 0
        %v1212 = vsel %vm624, %v1207, 0
        %1214 = vmatprep.subr.bf16.mxu0 0
        %1215 = vmatpush1.bf16.xpose.msra.mxu0 0
        %1216 = vmatprep.subr.bf16.mxu0 0
        %1217 = vmatpush1.bf16.xpose.msra.mxu0 0
        %1218 = vmatprep.subr.bf16.mxu0 0
        %1219 = vmatpush1.bf16.xpose.msra.mxu0 0
        %1220 = vmatprep.subr.bf16.mxu0 0
        %1221 = vmatpush1.bf16.xpose.msra.mxu0 0
        %1222 = vmatprep.subr.bf16.mxu0 0
        %1223 = vmatpush1.bf16.xpose.msra.mxu0 0
        %1224 = vmatprep.subr.bf16.mxu0 0
        %1225 = vmatpush1.bf16.xpose.msra.mxu0 0
        %1226 = vmatprep.subr.bf16.mxu0 0
        %1227 = vmatpush1.bf16.xpose.msra.mxu0 0
        %1228 = vmatprep.subr.bf16.mxu0 0
        %1229 = vmatpush1.bf16.xpose.msra.mxu0 %v1212
        %1230 = vmatprep.subr.bf16.mxu0 0
        %1231 = vmatpush2.bf16.xpose.msra.mxu0 0
        %1232 = vmatprep.subr.bf16.mxu0 0
        %1233 = vmatpush2.bf16.xpose.msra.mxu0 0
        %1234 = vmatprep.subr.bf16.mxu0 0
        %1235 = vmatpush2.bf16.xpose.msra.mxu0 0
        %1236 = vmatprep.subr.bf16.mxu0 0
        %1237 = vmatpush2.bf16.xpose.msra.mxu0 0
        %1238 = vmatprep.subr.bf16.mxu0 0
        %1239 = vmatpush2.bf16.xpose.msra.mxu0 0
        %1240 = vmatprep.subr.bf16.mxu0 0
        %1241 = vmatpush2.bf16.xpose.msra.mxu0 0
        %1242 = vmatprep.subr.bf16.mxu0 0
        %1243 = vmatpush2.bf16.xpose.msra.mxu0 0
        %1244 = vmatprep.subr.bf16.mxu0 0
        %1245 = vmatpush2.bf16.xpose.msra.mxu0 0
        %1246 = vmatprep.mubr.bf16.mxu0 0
        %1247 = vmatmul.mubr.bf16.gmra.mxu0 %v1209
        %v1248 = vpop.f32.mrf.mxu0
        %v1249 = vadd.f32 0.0, %v1248
        %v1250 = vpop.f32.mrf.mxu0
        %v1251 = vpop.f32.mrf.mxu0
        %v1252 = vpop.f32.mrf.mxu0
        %1253 = vdwg.mxu0
        %v1254 = vmul.f32 %v1249, 0.17677669
        %v1255 = vsel %vm904, %v1254, -inf
        %1256 = vmax.xlane.f32.xlu0 %v1255
        %v1257 = vpop.xlane.xlu0 %1256
        %v1258 = vsub.f32 %v1254, %v1257
        %v1259 = vmul.f32 %v1258, 1.442695
        %v1260 = vpow.pop %v1259
        %v1261 = vsel %vm904, %v1260, 0.0
        %1262 = vadd.xlane.f32.xlu0 %v1261
        %v1263 = vpop.xlane.xlu0 %1262
        %v1264 = vrcp.pop %v1263
        %v1265 = vmul.f32 %v1260, %v1264
        %v1266 = vpack.c.bf16 %v1265, %v1265
        %s1267 = scalar_lea.vmem %s613, 8 [#allocation12]
        %1268 = vst.msk [vmem:[%s1267] sm:$0xf] %vm917, %v1266
        %1269 = vrot.lane.b32.xlu0 %v848, 64
        %v1270 = vpop.permute.xlu0 %1269
        %v1272 = vsel %vm904, %v1266, 0
        %v1275 = vsel %vm922, %v1270, 0
        %1277 = vmatprep.subr.bf16.mxu0 0
        %1278 = vmatpush1.bf16.msra.mxu0 0
        %1279 = vmatprep.subr.bf16.mxu0 0
        %1280 = vmatpush1.bf16.msra.mxu0 0
        %1281 = vmatprep.subr.bf16.mxu0 0
        %1282 = vmatpush1.bf16.msra.mxu0 0
        %1283 = vmatprep.subr.bf16.mxu0 0
        %1284 = vmatpush1.bf16.msra.mxu0 0
        %1285 = vmatprep.subr.bf16.mxu0 0
        %1286 = vmatpush1.bf16.msra.mxu0 0
        %1287 = vmatprep.subr.bf16.mxu0 0
        %1288 = vmatpush1.bf16.msra.mxu0 0
        %1289 = vmatprep.subr.bf16.mxu0 0
        %1290 = vmatpush1.bf16.msra.mxu0 0
        %1291 = vmatprep.subr.bf16.mxu0 0
        %1292 = vmatpush1.bf16.msra.mxu0 %v1275
        %1293 = vmatprep.subr.bf16.mxu0 0
        %1294 = vmatpush2.bf16.msra.mxu0 0
        %1295 = vmatprep.subr.bf16.mxu0 0
        %1296 = vmatpush2.bf16.msra.mxu0 0
        %1297 = vmatprep.subr.bf16.mxu0 0
        %1298 = vmatpush2.bf16.msra.mxu0 0
        %1299 = vmatprep.subr.bf16.mxu0 0
        %1300 = vmatpush2.bf16.msra.mxu0 0
        %1301 = vmatprep.subr.bf16.mxu0 0
        %1302 = vmatpush2.bf16.msra.mxu0 0
        %1303 = vmatprep.subr.bf16.mxu0 0
        %1304 = vmatpush2.bf16.msra.mxu0 0
        %1305 = vmatprep.subr.bf16.mxu0 0
        %1306 = vmatpush2.bf16.msra.mxu0 0
        %1307 = vmatprep.subr.bf16.mxu0 0
        %1308 = vmatpush2.bf16.msra.mxu0 0
        %1309 = vmatprep.mubr.bf16.mxu0 0
        %1310 = vmatmul.mubr.bf16.gmra.mxu0 %v1272
        %v1311 = vpop.f32.mrf.mxu0
        %v1312 = vadd.f32 0.0, %v1311
        %v1313 = vpop.f32.mrf.mxu0
        %v1314 = vpop.f32.mrf.mxu0
        %v1315 = vpop.f32.mrf.mxu0
        %1316 = vdwg.mxu0
        %v1317 = vpack.c.bf16 %v1312, %v1312
        %v1318 = vld [vmem:[%s8 + $0x20] sm:$0xf]
        %v1319 = vld [vmem:[%s8 + $0x24] sm:$0xf]
        %v1320 = vld [vmem:[%s8 + $0x28] sm:$0xf]
        %v1321 = vld [vmem:[%s8 + $0x2c] sm:$0xf]
        %v1326 = vunpack.c.l.b16 %v1318
        %v1327 = vunpack.c.l.b16 %v1319
        %v1328 = vunpack.c.l.b16 %v1320
        %v1329 = vunpack.c.l.b16 %v1321
        %v1330 = vpack.c.b16 %v1327, %v1326
        %v1331 = vpack.c.b16 %v1329, %v1328
        %v1335 = vsel %vm624, %v1317, 0
        %1337 = vmatprep.subr.bf16.mxu0 0
        %1338 = vmatpush1.bf16.msra.mxu0 0
        %1339 = vmatprep.subr.bf16.mxu0 0
        %1340 = vmatpush1.bf16.msra.mxu0 0
        %1341 = vmatprep.subr.bf16.mxu0 0
        %1342 = vmatpush1.bf16.msra.mxu0 0
        %1343 = vmatprep.subr.bf16.mxu0 0
        %1344 = vmatpush1.bf16.msra.mxu0 0
        %1345 = vmatprep.subr.bf16.mxu0 0
        %1346 = vmatpush1.bf16.msra.mxu0 0
        %1347 = vmatprep.subr.bf16.mxu0 0
        %1348 = vmatpush1.bf16.msra.mxu0 0
        %1349 = vmatprep.subr.bf16.mxu0 0
        %1350 = vmatpush1.bf16.msra.mxu0 %v1331
        %1351 = vmatprep.subr.bf16.mxu0 0
        %1352 = vmatpush1.bf16.msra.mxu0 %v1330
        %1353 = vmatprep.subr.bf16.mxu0 0
        %1354 = vmatpush2.bf16.msra.mxu0 0
        %1355 = vmatprep.subr.bf16.mxu0 0
        %1356 = vmatpush2.bf16.msra.mxu0 0
        %1357 = vmatprep.subr.bf16.mxu0 0
        %1358 = vmatpush2.bf16.msra.mxu0 0
        %1359 = vmatprep.subr.bf16.mxu0 0
        %1360 = vmatpush2.bf16.msra.mxu0 0
        %1361 = vmatprep.subr.bf16.mxu0 0
        %1362 = vmatpush2.bf16.msra.mxu0 0
        %1363 = vmatprep.subr.bf16.mxu0 0
        %1364 = vmatpush2.bf16.msra.mxu0 0
        %1365 = vmatprep.subr.bf16.mxu0 0
        %1366 = vmatpush2.bf16.msra.mxu0 0
        %1367 = vmatprep.subr.bf16.mxu0 0
        %1368 = vmatpush2.bf16.msra.mxu0 0
        %1369 = vmatprep.mubr.bf16.mxu0 0
        %1370 = vmatmul.mubr.bf16.gmra.mxu0 %v1335
        %v1371 = vpop.f32.mrf.mxu0
        %v1372 = vadd.f32 0.0, %v1371
        %v1373 = vpop.f32.mrf.mxu0
        %v1374 = vpop.f32.mrf.mxu0
        %v1375 = vpop.f32.mrf.mxu0
        %1376 = vdwg.mxu0
        %v1377 = vadd.f32 %v1203, %v1372
        %1378 = vrot.lane.b32.xlu0 %v720, 32
        %v1379 = vpop.permute.xlu0 %1378
        %1380 = vrot.lane.b32.xlu0 %v784, 32
        %v1381 = vpop.permute.xlu0 %1380
        %v1383 = vsel %vm624, %v1379, 0
        %v1386 = vsel %vm624, %v1381, 0
        %1388 = vmatprep.subr.bf16.mxu0 0
        %1389 = vmatpush1.bf16.xpose.msra.mxu0 0
        %1390 = vmatprep.subr.bf16.mxu0 0
        %1391 = vmatpush1.bf16.xpose.msra.mxu0 0
        %1392 = vmatprep.subr.bf16.mxu0 0
        %1393 = vmatpush1.bf16.xpose.msra.mxu0 0
        %1394 = vmatprep.subr.bf16.mxu0 0
        %1395 = vmatpush1.bf16.xpose.msra.mxu0 0
        %1396 = vmatprep.subr.bf16.mxu0 0
        %1397 = vmatpush1.bf16.xpose.msra.mxu0 0
        %1398 = vmatprep.subr.bf16.mxu0 0
        %1399 = vmatpush1.bf16.xpose.msra.mxu0 0
        %1400 = vmatprep.subr.bf16.mxu0 0
        %1401 = vmatpush1.bf16.xpose.msra.mxu0 0
        %1402 = vmatprep.subr.bf16.mxu0 0
        %1403 = vmatpush1.bf16.xpose.msra.mxu0 %v1386
        %1404 = vmatprep.subr.bf16.mxu0 0
        %1405 = vmatpush2.bf16.xpose.msra.mxu0 0
        %1406 = vmatprep.subr.bf16.mxu0 0
        %1407 = vmatpush2.bf16.xpose.msra.mxu0 0
        %1408 = vmatprep.subr.bf16.mxu0 0
        %1409 = vmatpush2.bf16.xpose.msra.mxu0 0
        %1410 = vmatprep.subr.bf16.mxu0 0
        %1411 = vmatpush2.bf16.xpose.msra.mxu0 0
        %1412 = vmatprep.subr.bf16.mxu0 0
        %1413 = vmatpush2.bf16.xpose.msra.mxu0 0
        %1414 = vmatprep.subr.bf16.mxu0 0
        %1415 = vmatpush2.bf16.xpose.msra.mxu0 0
        %1416 = vmatprep.subr.bf16.mxu0 0
        %1417 = vmatpush2.bf16.xpose.msra.mxu0 0
        %1418 = vmatprep.subr.bf16.mxu0 0
        %1419 = vmatpush2.bf16.xpose.msra.mxu0 0
        %1420 = vmatprep.mubr.bf16.mxu0 0
        %1421 = vmatmul.mubr.bf16.gmra.mxu0 %v1383
        %v1422 = vpop.f32.mrf.mxu0
        %v1423 = vadd.f32 0.0, %v1422
        %v1424 = vpop.f32.mrf.mxu0
        %v1425 = vpop.f32.mrf.mxu0
        %v1426 = vpop.f32.mrf.mxu0
        %1427 = vdwg.mxu0
        %v1428 = vmul.f32 %v1423, 0.17677669
        %v1429 = vsel %vm904, %v1428, -inf
        %1430 = vmax.xlane.f32.xlu0 %v1429
        %v1431 = vpop.xlane.xlu0 %1430
        %v1432 = vsub.f32 %v1428, %v1431
        %v1433 = vmul.f32 %v1432, 1.442695
        %v1434 = vpow.pop %v1433
        %v1435 = vsel %vm904, %v1434, 0.0
        %1436 = vadd.xlane.f32.xlu0 %v1435
        %v1437 = vpop.xlane.xlu0 %1436
        %v1438 = vrcp.pop %v1437
        %v1439 = vmul.f32 %v1434, %v1438
        %v1440 = vpack.c.bf16 %v1439, %v1439
        %s1441 = scalar_lea.vmem %s613, 12 [#allocation12]
        %1442 = vst.msk [vmem:[%s1441] sm:$0xf] %vm917, %v1440
        %1443 = vrot.lane.b32.xlu0 %v848, 32
        %v1444 = vpop.permute.xlu0 %1443
        %v1446 = vsel %vm904, %v1440, 0
        %v1449 = vsel %vm922, %v1444, 0
        %1451 = vmatprep.subr.bf16.mxu0 0
        %1452 = vmatpush1.bf16.msra.mxu0 0
        %1453 = vmatprep.subr.bf16.mxu0 0
        %1454 = vmatpush1.bf16.msra.mxu0 0
        %1455 = vmatprep.subr.bf16.mxu0 0
        %1456 = vmatpush1.bf16.msra.mxu0 0
        %1457 = vmatprep.subr.bf16.mxu0 0
        %1458 = vmatpush1.bf16.msra.mxu0 0
        %1459 = vmatprep.subr.bf16.mxu0 0
        %1460 = vmatpush1.bf16.msra.mxu0 0
        %1461 = vmatprep.subr.bf16.mxu0 0
        %1462 = vmatpush1.bf16.msra.mxu0 0
        %1463 = vmatprep.subr.bf16.mxu0 0
        %1464 = vmatpush1.bf16.msra.mxu0 0
        %1465 = vmatprep.subr.bf16.mxu0 0
        %1466 = vmatpush1.bf16.msra.mxu0 %v1449
        %1467 = vmatprep.subr.bf16.mxu0 0
        %1468 = vmatpush2.bf16.msra.mxu0 0
        %1469 = vmatprep.subr.bf16.mxu0 0
        %1470 = vmatpush2.bf16.msra.mxu0 0
        %1471 = vmatprep.subr.bf16.mxu0 0
        %1472 = vmatpush2.bf16.msra.mxu0 0
        %1473 = vmatprep.subr.bf16.mxu0 0
        %1474 = vmatpush2.bf16.msra.mxu0 0
        %1475 = vmatprep.subr.bf16.mxu0 0
        %1476 = vmatpush2.bf16.msra.mxu0 0
        %1477 = vmatprep.subr.bf16.mxu0 0
        %1478 = vmatpush2.bf16.msra.mxu0 0
        %1479 = vmatprep.subr.bf16.mxu0 0
        %1480 = vmatpush2.bf16.msra.mxu0 0
        %1481 = vmatprep.subr.bf16.mxu0 0
        %1482 = vmatpush2.bf16.msra.mxu0 0
        %1483 = vmatprep.mubr.bf16.mxu0 0
        %1484 = vmatmul.mubr.bf16.gmra.mxu0 %v1446
        %v1485 = vpop.f32.mrf.mxu0
        %v1486 = vadd.f32 0.0, %v1485
        %v1487 = vpop.f32.mrf.mxu0
        %v1488 = vpop.f32.mrf.mxu0
        %v1489 = vpop.f32.mrf.mxu0
        %1490 = vdwg.mxu0
        %v1491 = vpack.c.bf16 %v1486, %v1486
        %v1492 = vld [vmem:[%s8 + $0x30] sm:$0xf]
        %v1493 = vld [vmem:[%s8 + $0x34] sm:$0xf]
        %v1494 = vld [vmem:[%s8 + $0x38] sm:$0xf]
        %v1495 = vld [vmem:[%s8 + $0x3c] sm:$0xf]
        %v1500 = vunpack.c.l.b16 %v1492
        %v1501 = vunpack.c.l.b16 %v1493
        %v1502 = vunpack.c.l.b16 %v1494
        %v1503 = vunpack.c.l.b16 %v1495
        %v1504 = vpack.c.b16 %v1501, %v1500
        %v1505 = vpack.c.b16 %v1503, %v1502
        %v1509 = vsel %vm624, %v1491, 0
        %1511 = vmatprep.subr.bf16.mxu0 0
        %1512 = vmatpush1.bf16.msra.mxu0 0
        %1513 = vmatprep.subr.bf16.mxu0 0
        %1514 = vmatpush1.bf16.msra.mxu0 0
        %1515 = vmatprep.subr.bf16.mxu0 0
        %1516 = vmatpush1.bf16.msra.mxu0 0
        %1517 = vmatprep.subr.bf16.mxu0 0
        %1518 = vmatpush1.bf16.msra.mxu0 0
        %1519 = vmatprep.subr.bf16.mxu0 0
        %1520 = vmatpush1.bf16.msra.mxu0 0
        %1521 = vmatprep.subr.bf16.mxu0 0
        %1522 = vmatpush1.bf16.msra.mxu0 0
        %1523 = vmatprep.subr.bf16.mxu0 0
        %1524 = vmatpush1.bf16.msra.mxu0 %v1505
        %1525 = vmatprep.subr.bf16.mxu0 0
        %1526 = vmatpush1.bf16.msra.mxu0 %v1504
        %1527 = vmatprep.subr.bf16.mxu0 0
        %1528 = vmatpush2.bf16.msra.mxu0 0
        %1529 = vmatprep.subr.bf16.mxu0 0
        %1530 = vmatpush2.bf16.msra.mxu0 0
        %1531 = vmatprep.subr.bf16.mxu0 0
        %1532 = vmatpush2.bf16.msra.mxu0 0
        %1533 = vmatprep.subr.bf16.mxu0 0
        %1534 = vmatpush2.bf16.msra.mxu0 0
        %1535 = vmatprep.subr.bf16.mxu0 0
        %1536 = vmatpush2.bf16.msra.mxu0 0
        %1537 = vmatprep.subr.bf16.mxu0 0
        %1538 = vmatpush2.bf16.msra.mxu0 0
        %1539 = vmatprep.subr.bf16.mxu0 0
        %1540 = vmatpush2.bf16.msra.mxu0 0
        %1541 = vmatprep.subr.bf16.mxu0 0
        %1542 = vmatpush2.bf16.msra.mxu0 0
        %1543 = vmatprep.mubr.bf16.mxu0 0
        %1544 = vmatmul.mubr.bf16.gmra.mxu0 %v1509
        %v1545 = vpop.f32.mrf.mxu0
        %v1546 = vadd.f32 0.0, %v1545
        %v1547 = vpop.f32.mrf.mxu0
        %v1548 = vpop.f32.mrf.mxu0
        %v1549 = vpop.f32.mrf.mxu0
        %1550 = vdwg.mxu0
        %v1551 = vadd.f32 %v1377, %v1546
        %v1552 = vld [vmem:[%s12] sm:$0x1]
        %v1553 = vld [vmem:[%s13] sm:$0x1]
        %v1554 = vsel %vm624, %v1551, 0.0
        %1555 = vadd.xlane.f32.xlu0 %v1554
        %v1556 = vpop.xlane.xlu0 %1555
        %v1557 = vmul.f32 %v1556, %v628
        %v1558 = vsub.f32 %v1551, %v1557
        %v1559 = vmul.f32 %v1558, %v1558
        %v1560 = vsel %vm624, %v1559, 0.0
        %1561 = vadd.xlane.f32.xlu0 %v1560
        %v1562 = vpop.xlane.xlu0 %1561
        %v1563 = vmul.f32 %v1562, %v628
        %v1564 = vadd.f32 %v1563, 1e-05
        %v1565 = vrsqrt.pop %v1564
        %v1566 = vmul.f32 %v1558, %v1565
        %v1568 = vlaneseq
        %v1569 = vshrl.u32 %v1568, 7
        %v1570 = vsub.s32 0, %v1569
        %v1571 = vrot.slane %v1552, %v1570
        %v1573 = vmul.f32 %v1566, %v1571
        %v1575 = vlaneseq
        %v1576 = vshrl.u32 %v1575, 7
        %v1577 = vsub.s32 0, %v1576
        %v1578 = vrot.slane %v1553, %v1577
        %v1580 = vadd.f32 %v1573, %v1578
        %v1581 = vpack.c.bf16 %v1580, %v1580
        %v1582 = vld [vmem:[%s14] sm:$0xf]
        %v1583 = vld [vmem:[%s14 + $0x4] sm:$0xf]
        %v1584 = vld [vmem:[%s14 + $0x8] sm:$0xf]
        %v1585 = vld [vmem:[%s14 + $0xc] sm:$0xf]
        %v1590 = vunpack.c.l.b16 %v1582
        %v1591 = vunpack.c.l.b16 %v1583
        %v1592 = vunpack.c.l.b16 %v1584
        %v1593 = vunpack.c.l.b16 %v1585
        %v1594 = vpack.c.b16 %v1591, %v1590
        %v1595 = vpack.c.b16 %v1593, %v1592
        %v1599 = vsel %vm624, %v1581, 0
        %1601 = vmatprep.subr.bf16.mxu0 0
        %1602 = vmatpush1.bf16.msra.mxu0 0
        %1603 = vmatprep.subr.bf16.mxu0 0
        %1604 = vmatpush1.bf16.msra.mxu0 0
        %1605 = vmatprep.subr.bf16.mxu0 0
        %1606 = vmatpush1.bf16.msra.mxu0 0
        %1607 = vmatprep.subr.bf16.mxu0 0
        %1608 = vmatpush1.bf16.msra.mxu0 0
        %1609 = vmatprep.subr.bf16.mxu0 0
        %1610 = vmatpush1.bf16.msra.mxu0 0
        %1611 = vmatprep.subr.bf16.mxu0 0
        %1612 = vmatpush1.bf16.msra.mxu0 0
        %1613 = vmatprep.subr.bf16.mxu0 0
        %1614 = vmatpush1.bf16.msra.mxu0 %v1595
        %1615 = vmatprep.subr.bf16.mxu0 0
        %1616 = vmatpush1.bf16.msra.mxu0 %v1594
        %1617 = vmatprep.subr.bf16.mxu0 0
        %1618 = vmatpush2.bf16.msra.mxu0 0
        %1619 = vmatprep.subr.bf16.mxu0 0
        %1620 = vmatpush2.bf16.msra.mxu0 0
        %1621 = vmatprep.subr.bf16.mxu0 0
        %1622 = vmatpush2.bf16.msra.mxu0 0
        %1623 = vmatprep.subr.bf16.mxu0 0
        %1624 = vmatpush2.bf16.msra.mxu0 0
        %1625 = vmatprep.subr.bf16.mxu0 0
        %1626 = vmatpush2.bf16.msra.mxu0 0
        %1627 = vmatprep.subr.bf16.mxu0 0
        %1628 = vmatpush2.bf16.msra.mxu0 0
        %1629 = vmatprep.subr.bf16.mxu0 0
        %1630 = vmatpush2.bf16.msra.mxu0 0
        %1631 = vmatprep.subr.bf16.mxu0 0
        %1632 = vmatpush2.bf16.msra.mxu0 0
        %1633 = vmatprep.mubr.bf16.mxu0 0
        %1634 = vmatmul.mubr.bf16.gmra.mxu0 %v1599
        %v1635 = vpop.f32.mrf.mxu0
        %v1636 = vadd.f32 0.0, %v1635
        %v1637 = vpop.f32.mrf.mxu0
        %v1638 = vpop.f32.mrf.mxu0
        %v1639 = vpop.f32.mrf.mxu0
        %1640 = vdwg.mxu0
        %v1641 = vmul.f32 %v1636, %v1636
        %v1642 = vmul.f32 %v1636, %v1641
        %v1643 = vmul.f32 %v1642, 0.044715
        %v1644 = vadd.f32 %v1636, %v1643
        %v1645 = vmul.f32 %v1644, 0.7978846
        %v1646 = vtanh.pop %v1645
        %v1647 = vadd.f32 %v1646, 1.0
        %v1648 = vmul.f32 %v1647, 0.5
        %v1649 = vmul.f32 %v1636, %v1648
        %v1650 = vpack.c.bf16 %v1649, %v1649
        %v1651 = vld [vmem:[%s15] sm:$0xf]
        %v1652 = vld [vmem:[%s15 + $0x4] sm:$0xf]
        %v1653 = vld [vmem:[%s15 + $0x8] sm:$0xf]
        %v1654 = vld [vmem:[%s15 + $0xc] sm:$0xf]
        %v1659 = vunpack.c.l.b16 %v1651
        %v1660 = vunpack.c.l.b16 %v1652
        %v1661 = vunpack.c.l.b16 %v1653
        %v1662 = vunpack.c.l.b16 %v1654
        %v1663 = vpack.c.b16 %v1660, %v1659
        %v1664 = vpack.c.b16 %v1662, %v1661
        %v1668 = vsel %vm624, %v1650, 0
        %1670 = vmatprep.subr.bf16.mxu0 0
        %1671 = vmatpush1.bf16.msra.mxu0 0
        %1672 = vmatprep.subr.bf16.mxu0 0
        %1673 = vmatpush1.bf16.msra.mxu0 0
        %1674 = vmatprep.subr.bf16.mxu0 0
        %1675 = vmatpush1.bf16.msra.mxu0 0
        %1676 = vmatprep.subr.bf16.mxu0 0
        %1677 = vmatpush1.bf16.msra.mxu0 0
        %1678 = vmatprep.subr.bf16.mxu0 0
        %1679 = vmatpush1.bf16.msra.mxu0 0
        %1680 = vmatprep.subr.bf16.mxu0 0
        %1681 = vmatpush1.bf16.msra.mxu0 0
        %1682 = vmatprep.subr.bf16.mxu0 0
        %1683 = vmatpush1.bf16.msra.mxu0 %v1664
        %1684 = vmatprep.subr.bf16.mxu0 0
        %1685 = vmatpush1.bf16.msra.mxu0 %v1663
        %1686 = vmatprep.subr.bf16.mxu0 0
        %1687 = vmatpush2.bf16.msra.mxu0 0
        %1688 = vmatprep.subr.bf16.mxu0 0
        %1689 = vmatpush2.bf16.msra.mxu0 0
        %1690 = vmatprep.subr.bf16.mxu0 0
        %1691 = vmatpush2.bf16.msra.mxu0 0
        %1692 = vmatprep.subr.bf16.mxu0 0
        %1693 = vmatpush2.bf16.msra.mxu0 0
        %1694 = vmatprep.subr.bf16.mxu0 0
        %1695 = vmatpush2.bf16.msra.mxu0 0
        %1696 = vmatprep.subr.bf16.mxu0 0
        %1697 = vmatpush2.bf16.msra.mxu0 0
        %1698 = vmatprep.subr.bf16.mxu0 0
        %1699 = vmatpush2.bf16.msra.mxu0 0
        %1700 = vmatprep.subr.bf16.mxu0 0
        %1701 = vmatpush2.bf16.msra.mxu0 0
        %1702 = vmatprep.mubr.bf16.mxu0 0
        %1703 = vmatmul.mubr.bf16.gmra.mxu0 %v1668
        %v1704 = vpop.f32.mrf.mxu0
        %v1705 = vadd.f32 0.0, %v1704
        %v1706 = vpop.f32.mrf.mxu0
        %v1707 = vpop.f32.mrf.mxu0
        %v1708 = vpop.f32.mrf.mxu0
        %1709 = vdwg.mxu0
        %v1710 = vadd.f32 %v1580, %v1705
        %1711 = vst.msk [vmem:[%s606] sm:$0xff] %vm624, %v1710
        %s1712 = sand.u32 %s387, 1
        %s1713 = scalar_lea.sflag [#allocation4], %s1712
        %s1714 = sand.u32 %s387, 1
        %s1715 = smul.addr %s1714, 8
        %s1716 = scalar_lea.vmem [#allocation11], %s1715
        %s1717 = sand.u32 %s413, 1
        %s1718 = scalar_lea.sflag [#allocation13], %s1717
        %s1719 = sand.u32 %s413, 1
        %s1720 = smul.addr %s1719, 16
        %s1721 = scalar_lea.vmem [#allocation12], %s1720
        // Predicated region
        $region105: #{tpu_custom_call.1} parent=83 // pred_check
          %p1722 = pneg %p397
        $region106: #{tpu_custom_call.1} parent=83 // pred_check_branch
          %1724 = sbr.rel (%p1722) target = $region108
        $region107: #{tpu_custom_call.1} parent=83 // pred_region
          %s1726 = ssub.s32 128, 128
          %1727 = vsyncadd %s1713, %s1726
          %s1728 = smul.addr %s38, 128
          %s1729 = scalar_lea.hbm %s16, %s1728
          %s1731 = sshll.u32 %s1716, 4
          %s1732 = int_to_ptr.vmem [resolvable:$true] %s1731
          %1734 = dma.vmem_to_hbm [thread:$0]  %s1732, 128, %s1729, %s1713
        $region108: #{tpu_custom_call.1} parent=83 // pred_fallthru
          _
        // Predicated region
        $region109: #{tpu_custom_call.1} parent=83 // pred_check
          %p1735 = pneg %p423
        $region110: #{tpu_custom_call.1} parent=83 // pred_check_branch
          %1737 = sbr.rel (%p1735) target = $region112
        $region111: #{tpu_custom_call.1} parent=83 // pred_region
          %s1739 = ssub.s32 256, 256
          %1740 = vsyncadd %s1718, %s1739
          %s1741 = smul.addr %s38, 4
          %s1742 = smul.addr %s1741, 64
          %s1743 = scalar_lea.hbm %s17, %s1742
          %s1744 = sshll.u32 %s1721, 4
          %s1745 = int_to_ptr.vmem [resolvable:$true] %s1744
          %1750 = dma.vmem_to_hbm [thread:$0]  %s1745, 256, %s1743, %s1718, 64, 64, 4
        $region112: #{tpu_custom_call.1} parent=83 // pred_fallthru
          _
      $region84: #{tpu_custom_call.1} parent=5 // pred_fallthru
        _
      %p1751 = scmp.le.s32.totalorder 2, %s33
      // Predicated region
      $region113: #{tpu_custom_call.1} parent=5 // pred_check
        %p1752 = pneg %p1751
      $region114: #{tpu_custom_call.1} parent=5 // pred_check_branch
        %1754 = sbr.rel (%p1752) target = $region116
      $region115: #{tpu_custom_call.1} parent=5 // pred_region
        %s1755 = ssub.s32 %s33, 2
        // Predicated region
        $region117: #{tpu_custom_call.1} parent=115 // pred_check
          %p1756 = pneg %p403
        $region118: #{tpu_custom_call.1} parent=115 // pred_check_branch
          %1758 = sbr.rel (%p1756) target = $region120
        $region119: #{tpu_custom_call.1} parent=115 // pred_region
          %s1759 = sand.u32 %s388, 1
          %s1760 = scalar_lea.sflag [#allocation4], %s1759
          %s1761 = sand.u32 %s388, 1
          %s1762 = smul.addr %s1761, 8
          %s1763 = scalar_lea.vmem [#allocation11], %s1762
          %1764 = dma.done %s1760, 128
        $region120: #{tpu_custom_call.1} parent=115 // pred_fallthru
          _
        // Predicated region
        $region121: #{tpu_custom_call.1} parent=115 // pred_check
          %p1765 = pneg %p429
        $region122: #{tpu_custom_call.1} parent=115 // pred_check_branch
          %1767 = sbr.rel (%p1765) target = $region124
        $region123: #{tpu_custom_call.1} parent=115 // pred_region
          %s1768 = sand.u32 %s414, 1
          %s1769 = scalar_lea.sflag [#allocation13], %s1768
          %s1770 = sand.u32 %s414, 1
          %s1771 = smul.addr %s1770, 16
          %s1772 = scalar_lea.vmem [#allocation12], %s1771
          %1773 = dma.done %s1769, 256
        $region124: #{tpu_custom_call.1} parent=115 // pred_fallthru
          _
      $region116: #{tpu_custom_call.1} parent=5 // pred_fallthru
        _
    $region6: #{tpu_custom_call.1} parent=1 // loop_footer
      %s37 = sadd.s32 1, %s33
    $region7: #{tpu_custom_call.1} parent=1 // loop_footer_branch
      %32 = sbr.rel target = $region3
    $region8: #{tpu_custom_call.1} parent=1 // loop_exit
      _
    %1774 = vsyncpa [#allocation3], 1
    %s1775 = scalar_lea.sflag [#allocation3], 1
    %1776 = vsyncpa %s1775, 1
    %1777 = vsyncpa [#allocation6], 1
    %1778 = vsyncpa [#allocation9], 1
    %1779 = vsyncpa [#allocation4], 1
    %s1780 = scalar_lea.sflag [#allocation4], 1
    %1781 = vsyncpa %s1780, 1
    %1782 = vsyncpa [#allocation13], 1
    %s1783 = scalar_lea.sflag [#allocation13], 1
    %1784 = vsyncpa %s1783, 1

</llo_original>
